<compile_context>
chip_gen: v7x
topology: tpu7x:2x2x1
jax: 0.10.0
libtpu: 0.0.40
codegen_flags: <defaults>
</compile_context>

<pallas_src>
import jax
import jax.numpy as jnp
from jax import lax
from jax.experimental import pallas as pl
from jax.experimental.pallas import tpu as pltpu


def _round_up(n, m):
    return ((n + m - 1) // m) * m


# --------------------------------------------------------------------------- #
# Kernel
# --------------------------------------------------------------------------- #
def spam_mlp_kernel(x_ref, w1_ref, b1_ref, w2_ref, b2_ref,
                    w3_ref, b3_ref, wx_ref, bx_ref, o_ref):
    # x tile: (tb, 768) f32 (cast to bf16 here, hidden under MXU work);
    # weights (in, out) bf16; biases (1, N) f32; wx_ref (1, 128) f32;
    # bx_ref (1, 1) f32; o_ref (1, tb) f32 (lane-dense output row).
    x = x_ref[...].astype(jnp.bfloat16)

    # Layer 1: (tb,768) @ (768,1024), f32 accumulate, bias + ReLU in f32 (VPU).
    h = jnp.dot(x, w1_ref[...], preferred_element_type=jnp.float32)
    h = jnp.maximum(h + b1_ref[...], 0.0)
    # Layer 2: (tb,1024) @ (1024,512)
    h = jnp.dot(h.astype(jnp.bfloat16), w2_ref[...],
                preferred_element_type=jnp.float32)
    h = jnp.maximum(h + b2_ref[...], 0.0)
    # Layer 3: (tb,512) @ (512,128)
    h = jnp.dot(h.astype(jnp.bfloat16), w3_ref[...],
                preferred_element_type=jnp.float32)
    h = jnp.maximum(h + b3_ref[...], 0.0)                      # (tb, 128) f32

    # Output layer 128 -> 1 as wx_row (1,128) . h^T -> (1, tb): lane-dense
    # result, no 1-lane MRF pop, no masked (tb,1) store.
    z = lax.dot_general(wx_ref[...], h, (((1,), (1,)), ((), ())),
                        preferred_element_type=jnp.float32) + bx_ref[...]
    o_ref[...] = 1.0 / (1.0 + jnp.exp(-z))                     # sigmoid


# --------------------------------------------------------------------------- #
# Tiling / VMEM heuristics
# --------------------------------------------------------------------------- #
def _vmem_cap_bytes():
    try:
        cap = getattr(pltpu.get_tpu_info(), "vmem_capacity_bytes", None)
    except Exception:
        cap = None
    return int(cap) if cap else 64 * 1024 * 1024   # conservative (v7x per-core)


def _pick_vmem_limit_bytes(cap):
    # ~3/4 of physical VMEM, capped at 100 MiB: ~96 MiB on v5e/v6e, ~48 MiB v7x.
    return int(min(100 * 1024 * 1024, cap * 3 // 4))


def _auto_tile(batch, max_tb):
    """Pick the batch tile.

    batch < 128: single sublane-aligned tile (grid=1, pads <= 7 rows).
    otherwise  : multiple of 128, never larger than batch; prefer >=2 grid
                 steps (megacore), then minimal padded-row waste, then an even
                 step count (v7x TC balance), then the largest tile (fewer
                 per-step overheads).
    """
    if batch < 128:
        return _round_up(max(batch, 1), 8)
    best_tb, best_key = 128, None
    for tb in (2048, 1024, 512, 256, 128):
        if tb > max_tb or tb > batch:
            continue
        grid = -(-batch // tb)
        waste = grid * tb - batch
        key = (grid >= 2, -waste, grid % 2 == 0, tb)
        if best_key is None or key > best_key:
            best_tb, best_key = tb, key
    return best_tb


# --------------------------------------------------------------------------- #
# Parameter prep (one-time) + forward wrapper
# --------------------------------------------------------------------------- #
def prepare_params(params):
    """One-time conversion to kernel layout (bf16 weights, f32 biases/output
    row) so the per-call forward does no weight re-casting."""
    w1, b1, w2, b2, w3, b3, wx, bx = params
    bf = jnp.bfloat16
    return (
        w1.astype(bf), b1.reshape(1, -1).astype(jnp.float32),
        w2.astype(bf), b2.reshape(1, -1).astype(jnp.float32),
        w3.astype(bf), b3.reshape(1, -1).astype(jnp.float32),
        wx.reshape(1, 128).astype(jnp.float32),     # (128,1) -> (1,128)
        bx.reshape(1, 1).astype(jnp.float32),
    )


def spam_nn_forward(x, prepared, *, tb=None):
    """x: (B, 768) float array. Returns (B, 1) float32 sigmoid probabilities."""
    B, D = x.shape
    assert D == 768, f"expected 768 input features, got {D}"
    w1b, b1, w2b, b2, w3b, b3, wx_row, bx_s = prepared

    cap = _vmem_cap_bytes()
    max_tb = 2048 if cap >= 100 * 1024 * 1024 else 1024
    if tb is None:
        tb = _auto_tile(B, max_tb)

    x = x.astype(jnp.float32)          # bf16 cast happens inside the kernel
    if tb > B:                         # only for B < 128: pad <= 7 rows
        x = jnp.pad(x, ((0, tb - B), (0, 0)))
    grid = pl.cdiv(x.shape[0], tb)     # ragged last tile handled by Pallas

    # Weights/biases: constant block index -> fetched once, never re-DMA'd.
    const = lambda shape: pl.BlockSpec(shape, lambda i: (0, 0))

    out_row = pl.pallas_call(
        spam_mlp_kernel,
        out_shape=jax.ShapeDtypeStruct((1, grid * tb), jnp.float32),
        grid_spec=pltpu.PrefetchScalarGridSpec(
            num_scalar_prefetch=0,
            grid=(grid,),
            in_specs=[
                pl.BlockSpec((tb, 768), lambda i: (i, 0)),   # x batch tile (f32)
                const((768, 1024)), const((1, 1024)),        # fc1
                const((1024, 512)), const((1, 512)),         # fc2
                const((512, 128)),  const((1, 128)),         # fc3
                const((1, 128)),    const((1, 1)),           # fcx (row) + bias
            ],
            # Lane-dense output: (1, tb) block of a (1, grid*tb) row.
            out_specs=pl.BlockSpec((1, tb), lambda i: (0, i)),
        ),
        compiler_params=pltpu.CompilerParams(
            dimension_semantics=("parallel",),
            vmem_limit_bytes=_pick_vmem_limit_bytes(cap),
        ),
    )(x, w1b, b1, w2b, b2, w3b, b3, wx_row, bx_s)

    # (1, grid*tb) lane-dense row -> (B, 1) column, dropping padded/ragged rows.
    return out_row.reshape(grid * tb, 1)[:B]


# --------------------------------------------------------------------------- #
# Reference + init
# --------------------------------------------------------------------------- #
def init_params(key):
    """Deterministic init mirroring nn.Linear shapes (weights stored (in, out))."""
    dims = [(768, 1024), (1024, 512), (512, 128), (128, 1)]
    params = []
    for idx, (fan_in, fan_out) in enumerate(dims):
        kw, kb = jax.random.split(jax.random.fold_in(key, idx))
        bound = 1.0 / jnp.sqrt(fan_in)
        w = jax.random.uniform(kw, (fan_in, fan_out), jnp.float32, -bound, bound)
        b = jax.random.uniform(kb, (1, fan_out), jnp.float32, -bound, bound)
        params.extend([w, b])
    return tuple(params)


def spam_nn_ref(x, params):
    """Pure-JAX reference mirroring the kernel's bf16 MXU inputs / f32 accumulate."""
    w1, b1, w2, b2, w3, b3, wx, bx = params
    bf = jnp.bfloat16
    h = jax.nn.relu(jnp.dot(x.astype(bf), w1.astype(bf),
                            preferred_element_type=jnp.float32) + b1)
    h = jax.nn.relu(jnp.dot(h.astype(bf), w2.astype(bf),
                            preferred_element_type=jnp.float32) + b2)
    h = jax.nn.relu(jnp.dot(h.astype(bf), w3.astype(bf),
                            preferred_element_type=jnp.float32) + b3)
    return jax.nn.sigmoid(jnp.dot(h, wx) + bx)


if __name__ == "__main__":
    key = jax.random.PRNGKey(0)
    params = init_params(key)
    prepared = prepare_params(params)

    # Small batches: B=8 exercises the tiny single-tile path, B=200 exercises
    # grid>1 with a ragged (masked) last batch tile.
    for B in (8, 200):
        x = jax.random.normal(jax.random.fold_in(key, 100 + B),
                              (B, 768), jnp.float32)
        out = jax.block_until_ready(spam_nn_forward(x, prepared))
        ref = spam_nn_ref(x, params)
        assert out.shape == (B, 1), out.shape
        # bf16 weights/activations -> loosened tolerance vs. the f32-ish reference.
        assert jnp.allclose(out, ref, atol=2e-2, rtol=2e-2), float(
            jnp.max(jnp.abs(out - ref)))

    print("KERNEL_OK")
</pallas_src>

<mosaic_0001>
module attributes {stable_mosaic.version = 11 : i64} {
  func.func @spam_mlp_kernel(%arg0: i32, %arg1: memref<8x768xf32, #tpu.memory_space<vmem>>, %arg2: memref<768x1024xbf16, #tpu.memory_space<vmem>>, %arg3: memref<1x1024xf32, #tpu.memory_space<vmem>>, %arg4: memref<1024x512xbf16, #tpu.memory_space<vmem>>, %arg5: memref<1x512xf32, #tpu.memory_space<vmem>>, %arg6: memref<512x128xbf16, #tpu.memory_space<vmem>>, %arg7: memref<1x128xf32, #tpu.memory_space<vmem>>, %arg8: memref<1x128xf32, #tpu.memory_space<vmem>>, %arg9: memref<1x1xf32, #tpu.memory_space<vmem>>, %arg10: memref<1x8xf32, #tpu.memory_space<vmem>>) attributes {dimension_semantics = [#tpu.dimension_semantics<parallel>], iteration_bounds = array<i64: 1>, scalar_prefetch = 0 : i64, scratch_operands = 0 : i64, tpu.core_type = #tpu.core_type<tc>, window_params = [{transform_indices = @transform_0, window_bounds = array<i64: 8, 768>}, {pipeline_mode = #tpu.pipeline_mode<synchronous>, transform_indices = @transform_1, window_bounds = array<i64: 768, 1024>}, {pipeline_mode = #tpu.pipeline_mode<synchronous>, transform_indices = @transform_2, window_bounds = array<i64: 1, 1024>}, {pipeline_mode = #tpu.pipeline_mode<synchronous>, transform_indices = @transform_3, window_bounds = array<i64: 1024, 512>}, {pipeline_mode = #tpu.pipeline_mode<synchronous>, transform_indices = @transform_4, window_bounds = array<i64: 1, 512>}, {pipeline_mode = #tpu.pipeline_mode<synchronous>, transform_indices = @transform_5, window_bounds = array<i64: 512, 128>}, {pipeline_mode = #tpu.pipeline_mode<synchronous>, transform_indices = @transform_6, window_bounds = array<i64: 1, 128>}, {pipeline_mode = #tpu.pipeline_mode<synchronous>, transform_indices = @transform_7, window_bounds = array<i64: 1, 128>}, {pipeline_mode = #tpu.pipeline_mode<synchronous>, transform_indices = @transform_8, window_bounds = array<i64: 1, 1>}, {transform_indices = @transform_9, window_bounds = array<i64: 1, 8>}]} {
    %c0 = arith.constant 0 : index
    %c0_0 = arith.constant 0 : index
    %0 = vector.load %arg1[%c0, %c0_0] : memref<8x768xf32, #tpu.memory_space<vmem>>, vector<8x768xf32>
    %1 = arith.truncf %0 : vector<8x768xf32> to vector<8x768xbf16>
    %c0_1 = arith.constant 0 : index
    %c0_2 = arith.constant 0 : index
    %2 = vector.load %arg2[%c0_1, %c0_2] : memref<768x1024xbf16, #tpu.memory_space<vmem>>, vector<768x1024xbf16>
    %cst = arith.constant dense<0.000000e+00> : vector<8x1024xf32>
    %3 = tpu.matmul %1, %2, %cst {dimension_numbers = #tpu.dot_dimension_numbers<[1], [0], [0], [1], [0, 0, 1, 1], [], []>} : vector<8x768xbf16>, vector<768x1024xbf16>, vector<8x1024xf32> -> vector<8x1024xf32>
    %c0_3 = arith.constant 0 : index
    %c0_4 = arith.constant 0 : index
    %4 = vector.load %arg3[%c0_3, %c0_4] : memref<1x1024xf32, #tpu.memory_space<vmem>>, vector<1x1024xf32>
    %5 = vector.broadcast %4 : vector<1x1024xf32> to vector<8x1024xf32>
    %6 = arith.addf %3, %5 : vector<8x1024xf32>
    %cst_5 = arith.constant 0.000000e+00 : f32
    %7 = vector.broadcast %cst_5 : f32 to vector<8x1024xf32>
    %8 = arith.maximumf %6, %7 : vector<8x1024xf32>
    %9 = arith.truncf %8 : vector<8x1024xf32> to vector<8x1024xbf16>
    %c0_6 = arith.constant 0 : index
    %c0_7 = arith.constant 0 : index
    %10 = vector.load %arg4[%c0_6, %c0_7] : memref<1024x512xbf16, #tpu.memory_space<vmem>>, vector<1024x512xbf16>
    %cst_8 = arith.constant dense<0.000000e+00> : vector<8x512xf32>
    %11 = tpu.matmul %9, %10, %cst_8 {dimension_numbers = #tpu.dot_dimension_numbers<[1], [0], [0], [1], [0, 0, 1, 1], [], []>} : vector<8x1024xbf16>, vector<1024x512xbf16>, vector<8x512xf32> -> vector<8x512xf32>
    %c0_9 = arith.constant 0 : index
    %c0_10 = arith.constant 0 : index
    %12 = vector.load %arg5[%c0_9, %c0_10] : memref<1x512xf32, #tpu.memory_space<vmem>>, vector<1x512xf32>
    %13 = vector.broadcast %12 : vector<1x512xf32> to vector<8x512xf32>
    %14 = arith.addf %11, %13 : vector<8x512xf32>
    %cst_11 = arith.constant 0.000000e+00 : f32
    %15 = vector.broadcast %cst_11 : f32 to vector<8x512xf32>
    %16 = arith.maximumf %14, %15 : vector<8x512xf32>
    %17 = arith.truncf %16 : vector<8x512xf32> to vector<8x512xbf16>
    %c0_12 = arith.constant 0 : index
    %c0_13 = arith.constant 0 : index
    %18 = vector.load %arg6[%c0_12, %c0_13] : memref<512x128xbf16, #tpu.memory_space<vmem>>, vector<512x128xbf16>
    %cst_14 = arith.constant dense<0.000000e+00> : vector<8x128xf32>
    %19 = tpu.matmul %17, %18, %cst_14 {dimension_numbers = #tpu.dot_dimension_numbers<[1], [0], [0], [1], [0, 0, 1, 1], [], []>} : vector<8x512xbf16>, vector<512x128xbf16>, vector<8x128xf32> -> vector<8x128xf32>
    %c0_15 = arith.constant 0 : index
    %c0_16 = arith.constant 0 : index
    %20 = vector.load %arg7[%c0_15, %c0_16] : memref<1x128xf32, #tpu.memory_space<vmem>>, vector<1x128xf32>
    %21 = vector.broadcast %20 : vector<1x128xf32> to vector<8x128xf32>
    %22 = arith.addf %19, %21 : vector<8x128xf32>
    %cst_17 = arith.constant 0.000000e+00 : f32
    %23 = vector.broadcast %cst_17 : f32 to vector<8x128xf32>
    %24 = arith.maximumf %22, %23 : vector<8x128xf32>
    %c0_18 = arith.constant 0 : index
    %c0_19 = arith.constant 0 : index
    %25 = vector.load %arg8[%c0_18, %c0_19] : memref<1x128xf32, #tpu.memory_space<vmem>>, vector<1x128xf32>
    %cst_20 = arith.constant dense<0.000000e+00> : vector<1x8xf32>
    %26 = tpu.matmul %25, %24, %cst_20 {dimension_numbers = #tpu.dot_dimension_numbers<[1], [1], [0], [0], [0, 0, 1, 0], [], []>} : vector<1x128xf32>, vector<8x128xf32>, vector<1x8xf32> -> vector<1x8xf32>
    %c0_21 = arith.constant 0 : index
    %c0_22 = arith.constant 0 : index
    %27 = vector.load %arg9[%c0_21, %c0_22] : memref<1x1xf32, #tpu.memory_space<vmem>>, vector<1x1xf32>
    %28 = vector.broadcast %27 : vector<1x1xf32> to vector<1x8xf32>
    %29 = arith.addf %26, %28 : vector<1x8xf32>
    %cst_23 = arith.constant 0.000000e+00 : f32
    %30 = vector.broadcast %cst_23 : f32 to vector<1x8xf32>
    %31 = arith.subf %30, %29 : vector<1x8xf32>
    %32 = math.exp %31 : vector<1x8xf32>
    %cst_24 = arith.constant 1.000000e+00 : f32
    %33 = vector.broadcast %cst_24 : f32 to vector<1x8xf32>
    %34 = arith.addf %33, %32 : vector<1x8xf32>
    %cst_25 = arith.constant 1.000000e+00 : f32
    %35 = vector.broadcast %cst_25 : f32 to vector<1x8xf32>
    %36 = arith.divf %35, %34 : vector<1x8xf32>
    %c0_26 = arith.constant 0 : index
    %c0_27 = arith.constant 0 : index
    %37 = vector.load %arg10[%c0_26, %c0_27] : memref<1x8xf32, #tpu.memory_space<vmem>>, vector<1x8xf32>
    tpu.vector_store %arg10[%c0_26, %c0_27], %36 {strides = array<i32>} : memref<1x8xf32, #tpu.memory_space<vmem>>, vector<1x8xf32>,
    return
  }
  func.func @transform_0(%arg0: i32) -> (i32, i32) {
    %c0_i32 = arith.constant 0 : i32
    %c0_i32_0 = arith.constant 0 : i32
    return %arg0, %c0_i32 : i32, i32
  }
  func.func @transform_1(%arg0: i32) -> (i32, i32) {
    %c0_i32 = arith.constant 0 : i32
    %c0_i32_0 = arith.constant 0 : i32
    %c0_i32_1 = arith.constant 0 : i32
    return %c0_i32, %c0_i32_0 : i32, i32
  }
  func.func @transform_2(%arg0: i32) -> (i32, i32) {
    %c0_i32 = arith.constant 0 : i32
    %c0_i32_0 = arith.constant 0 : i32
    %c0_i32_1 = arith.constant 0 : i32
    return %c0_i32, %c0_i32_0 : i32, i32
  }
  func.func @transform_3(%arg0: i32) -> (i32, i32) {
    %c0_i32 = arith.constant 0 : i32
    %c0_i32_0 = arith.constant 0 : i32
    %c0_i32_1 = arith.constant 0 : i32
    return %c0_i32, %c0_i32_0 : i32, i32
  }
  func.func @transform_4(%arg0: i32) -> (i32, i32) {
    %c0_i32 = arith.constant 0 : i32
    %c0_i32_0 = arith.constant 0 : i32
    %c0_i32_1 = arith.constant 0 : i32
    return %c0_i32, %c0_i32_0 : i32, i32
  }
  func.func @transform_5(%arg0: i32) -> (i32, i32) {
    %c0_i32 = arith.constant 0 : i32
    %c0_i32_0 = arith.constant 0 : i32
    %c0_i32_1 = arith.constant 0 : i32
    return %c0_i32, %c0_i32_0 : i32, i32
  }
  func.func @transform_6(%arg0: i32) -> (i32, i32) {
    %c0_i32 = arith.constant 0 : i32
    %c0_i32_0 = arith.constant 0 : i32
    %c0_i32_1 = arith.constant 0 : i32
    return %c0_i32, %c0_i32_0 : i32, i32
  }
  func.func @transform_7(%arg0: i32) -> (i32, i32) {
    %c0_i32 = arith.constant 0 : i32
    %c0_i32_0 = arith.constant 0 : i32
    %c0_i32_1 = arith.constant 0 : i32
    return %c0_i32, %c0_i32_0 : i32, i32
  }
  func.func @transform_8(%arg0: i32) -> (i32, i32) {
    %c0_i32 = arith.constant 0 : i32
    %c0_i32_0 = arith.constant 0 : i32
    %c0_i32_1 = arith.constant 0 : i32
    return %c0_i32, %c0_i32_0 : i32, i32
  }
  func.func @transform_9(%arg0: i32) -> (i32, i32) {
    %c0_i32 = arith.constant 0 : i32
    %c0_i32_0 = arith.constant 0 : i32
    return %c0_i32, %arg0 : i32, i32
  }
}

</mosaic_0001>

<llo_original>
// kernel: tpu_custom_call.1
$region0: #{tpu_custom_call.1}
  #allocation0 [shape = 'u32[]', space=smem, size = 0x4, offset = 0x4, fixed_abs, tag = 'smem constant byte address 0x4 - core index']
  #allocation1 [shape = 'u32[144,128]{1,0:T(1,128)}', space=vmem, size = 0x12000, scoped, tag = 'internal scratch']
  #allocation2 [shape = 'f32[1,1]{1,0:T(1,128)S(1)}', space=vmem, size = 0x200, scoped, tag = 'scoped memory for tpu_custom_call.1']
  %s0 = inlined_call_operand.hbm [shape: f32[8,768], index: 0, kind: input, shape index: {}]
  %s1 = inlined_call_operand.hbm [shape: bf16[768,1024], index: 1, kind: input, shape index: {}]
  %s2 = inlined_call_operand.hbm [shape: f32[1,1024], index: 2, kind: input, shape index: {}]
  %s3 = inlined_call_operand.hbm [shape: bf16[1024,512], index: 3, kind: input, shape index: {}]
  %s4 = inlined_call_operand.hbm [shape: f32[1,512], index: 4, kind: input, shape index: {}]
  %s5 = inlined_call_operand.hbm [shape: bf16[512,128], index: 5, kind: input, shape index: {}]
  %s6 = inlined_call_operand.hbm [shape: f32[1,128], index: 6, kind: input, shape index: {}]
  %s7 = inlined_call_operand.hbm [shape: f32[1,128], index: 7, kind: input, shape index: {}]
  %s8 = inlined_call_operand.<no memory space> [shape: f32[1,1], index: 8, kind: input, shape index: {}]
  %s9 = inlined_call_operand.hbm [shape: f32[1,8], index: 9, kind: output, shape index: {}]
  %s10 = sld [smem:[#allocation0]]
  $region78: #{tpu_custom_call.1} parent=0
    _
  %s12 = ssub.s32 1, %s10
  %s13 = scalar_select 0, %s12, %s10
  %v14 = vstv %s8
  %15 = vst [vmem:[#allocation2] sm:$0x1] %v14
  $region1: #{tpu_custom_call.1} parent=0
    #allocation3 [shape = 'u8[24576]{0}', space=vmem, size = 0x6000, scoped, tag = 'input window, operand 0, single buffered']
    #allocation4 [shape = 's32[1]{0}', space=sflag, size = 0x4, scoped, tag = 'scoped memory for tpu_custom_call.1']
    #allocation5 [shape = 's32[1]{0}', space=sflag, size = 0x4, scoped, tag = 'scoped memory for tpu_custom_call.1']
    #allocation6 [shape = 'u8[1572864]{0}', space=vmem, size = 0x180000, scoped, tag = 'input window, operand 1, single buffered']
    #allocation7 [shape = 's32[1]{0}', space=sflag, size = 0x4, scoped, tag = 'scoped memory for tpu_custom_call.1']
    #allocation8 [shape = 'u8[4096]{0}', space=vmem, size = 0x1000, scoped, tag = 'input window, operand 2, single buffered']
    #allocation9 [shape = 'u8[1048576]{0}', space=vmem, size = 0x100000, scoped, tag = 'input window, operand 3, single buffered']
    #allocation10 [shape = 's32[1]{0}', space=sflag, size = 0x4, scoped, tag = 'scoped memory for tpu_custom_call.1']
    #allocation11 [shape = 'u8[2048]{0}', space=vmem, size = 0x800, scoped, tag = 'input window, operand 4, single buffered']
    #allocation12 [shape = 'u8[131072]{0}', space=vmem, size = 0x20000, scoped, tag = 'input window, operand 5, single buffered']
    #allocation13 [shape = 's32[1]{0}', space=sflag, size = 0x4, scoped, tag = 'scoped memory for tpu_custom_call.1']
    #allocation14 [shape = 'u8[512]{0}', space=vmem, size = 0x400, scoped, tag = 'input window, operand 6, single buffered']
    #allocation15 [shape = 'u8[512]{0}', space=vmem, size = 0x400, scoped, tag = 'input window, operand 7, single buffered']
    #allocation16 [shape = 's32[1]{0}', space=sflag, size = 0x4, scoped, tag = 'scoped memory for tpu_custom_call.1']
    #allocation17 [shape = 'u8[512]{0}', space=vmem, size = 0x400, scoped, tag = 'output window, operand 0, single buffered']
    %16 = vsyncpa [#allocation4], 0
    %17 = vsyncpa [#allocation7], 0
    %18 = vsyncpa [#allocation10], 0
    %19 = vsyncpa [#allocation13], 0
    %20 = vsyncpa [#allocation16], 0
    %21 = vsyncpa [#allocation5], 0
    // Predicated region
    $region2: #{tpu_custom_call.1} parent=1 // pred_check
      _
    $region3: #{tpu_custom_call.1} parent=1 // pred_check_branch
      %23 = sbr.rel (0) target = $region5
    $region4: #{tpu_custom_call.1} parent=1 // pred_region
      %s25 = ssub.s32 768, 768
      %26 = vsyncadd [#allocation4], %s25
      %s28 = sshll.u32 [#allocation3], 4
      %s29 = int_to_ptr.vmem [resolvable:$true] %s28
      %31 = dma.hbm_to_vmem [thread:$0]  %s0, 768, %s29, [#allocation4]
    $region5: #{tpu_custom_call.1} parent=1 // pred_fallthru
      _
    // Predicated region
    $region6: #{tpu_custom_call.1} parent=1 // pred_check
      _
    $region7: #{tpu_custom_call.1} parent=1 // pred_check_branch
      %33 = sbr.rel (0) target = $region9
    $region8: #{tpu_custom_call.1} parent=1 // pred_region
      %s35 = ssub.s32 49152, 49152
      %36 = vsyncadd [#allocation7], %s35
      %s37 = sshll.u32 [#allocation6], 4
      %s38 = int_to_ptr.vmem [resolvable:$true] %s37
      %43 = dma.hbm_to_vmem [thread:$0]  %s1, 49152, %s38, [#allocation7], 512, 512, 32
    $region9: #{tpu_custom_call.1} parent=1 // pred_fallthru
      _
    // Predicated region
    $region10: #{tpu_custom_call.1} parent=1 // pred_check
      _
    $region11: #{tpu_custom_call.1} parent=1 // pred_check_branch
      %45 = sbr.rel (0) target = $region13
    $region12: #{tpu_custom_call.1} parent=1 // pred_region
      %s47 = ssub.s32 128, 128
      %48 = vsyncadd [#allocation7], %s47
      %s50 = sshll.u32 [#allocation8], 4
      %s51 = int_to_ptr.vmem [resolvable:$true] %s50
      %53 = dma.hbm_to_vmem [thread:$0]  %s2, 128, %s51, [#allocation7]
    $region13: #{tpu_custom_call.1} parent=1 // pred_fallthru
      _
    // Predicated region
    $region14: #{tpu_custom_call.1} parent=1 // pred_check
      _
    $region15: #{tpu_custom_call.1} parent=1 // pred_check_branch
      %55 = sbr.rel (0) target = $region17
    $region16: #{tpu_custom_call.1} parent=1 // pred_region
      %s57 = ssub.s32 32768, 32768
      %58 = vsyncadd [#allocation10], %s57
      %s59 = sshll.u32 [#allocation9], 4
      %s60 = int_to_ptr.vmem [resolvable:$true] %s59
      %65 = dma.hbm_to_vmem [thread:$0]  %s3, 32768, %s60, [#allocation10], 256, 256, 16
    $region17: #{tpu_custom_call.1} parent=1 // pred_fallthru
      _
    // Predicated region
    $region18: #{tpu_custom_call.1} parent=1 // pred_check
      _
    $region19: #{tpu_custom_call.1} parent=1 // pred_check_branch
      %67 = sbr.rel (0) target = $region21
    $region20: #{tpu_custom_call.1} parent=1 // pred_region
      %s69 = ssub.s32 64, 64
      %70 = vsyncadd [#allocation10], %s69
      %s72 = sshll.u32 [#allocation11], 4
      %s73 = int_to_ptr.vmem [resolvable:$true] %s72
      %75 = dma.hbm_to_vmem [thread:$0]  %s4, 64, %s73, [#allocation10]
    $region21: #{tpu_custom_call.1} parent=1 // pred_fallthru
      _
    // Predicated region
    $region22: #{tpu_custom_call.1} parent=1 // pred_check
      _
    $region23: #{tpu_custom_call.1} parent=1 // pred_check_branch
      %77 = sbr.rel (0) target = $region25
    $region24: #{tpu_custom_call.1} parent=1 // pred_region
      %s79 = ssub.s32 4096, 4096
      %80 = vsyncadd [#allocation13], %s79
      %s81 = sshll.u32 [#allocation12], 4
      %s82 = int_to_ptr.vmem [resolvable:$true] %s81
      %87 = dma.hbm_to_vmem [thread:$0]  %s5, 4096, %s82, [#allocation13], 64, 64, 4
    $region25: #{tpu_custom_call.1} parent=1 // pred_fallthru
      _
    // Predicated region
    $region26: #{tpu_custom_call.1} parent=1 // pred_check
      _
    $region27: #{tpu_custom_call.1} parent=1 // pred_check_branch
      %89 = sbr.rel (0) target = $region29
    $region28: #{tpu_custom_call.1} parent=1 // pred_region
      %s91 = ssub.s32 16, 16
      %92 = vsyncadd [#allocation13], %s91
      %s94 = sshll.u32 [#allocation14], 4
      %s95 = int_to_ptr.vmem [resolvable:$true] %s94
      %97 = dma.hbm_to_vmem [thread:$0]  %s6, 16, %s95, [#allocation13]
    $region29: #{tpu_custom_call.1} parent=1 // pred_fallthru
      _
    // Predicated region
    $region30: #{tpu_custom_call.1} parent=1 // pred_check
      _
    $region31: #{tpu_custom_call.1} parent=1 // pred_check_branch
      %99 = sbr.rel (0) target = $region33
    $region32: #{tpu_custom_call.1} parent=1 // pred_region
      %s101 = ssub.s32 16, 16
      %102 = vsyncadd [#allocation16], %s101
      %s104 = sshll.u32 [#allocation15], 4
      %s105 = int_to_ptr.vmem [resolvable:$true] %s104
      %107 = dma.hbm_to_vmem [thread:$0]  %s7, 16, %s105, [#allocation16]
    $region33: #{tpu_custom_call.1} parent=1 // pred_fallthru
      _
    // Predicated region
    $region34: #{tpu_custom_call.1} parent=1 // pred_check
      _
    $region35: #{tpu_custom_call.1} parent=1 // pred_check_branch
      %109 = sbr.rel (0) target = $region37
    $region36: #{tpu_custom_call.1} parent=1 // pred_region
      _
    $region37: #{tpu_custom_call.1} parent=1 // pred_fallthru
      _
    // Predicated region
    $region38: #{tpu_custom_call.1} parent=1 // pred_check
      _
    $region39: #{tpu_custom_call.1} parent=1 // pred_check_branch
      %111 = sbr.rel (0) target = $region41
    $region40: #{tpu_custom_call.1} parent=1 // pred_region
      %112 = dma.done [#allocation4], 768
    $region41: #{tpu_custom_call.1} parent=1 // pred_fallthru
      _
    // Predicated region
    $region42: #{tpu_custom_call.1} parent=1 // pred_check
      _
    $region43: #{tpu_custom_call.1} parent=1 // pred_check_branch
      %114 = sbr.rel (0) target = $region45
    $region44: #{tpu_custom_call.1} parent=1 // pred_region
      %115 = dma.done [#allocation7], 49152
    $region45: #{tpu_custom_call.1} parent=1 // pred_fallthru
      _
    // Predicated region
    $region46: #{tpu_custom_call.1} parent=1 // pred_check
      _
    $region47: #{tpu_custom_call.1} parent=1 // pred_check_branch
      %117 = sbr.rel (0) target = $region49
    $region48: #{tpu_custom_call.1} parent=1 // pred_region
      %118 = dma.done [#allocation7], 128
    $region49: #{tpu_custom_call.1} parent=1 // pred_fallthru
      _
    // Predicated region
    $region50: #{tpu_custom_call.1} parent=1 // pred_check
      _
    $region51: #{tpu_custom_call.1} parent=1 // pred_check_branch
      %120 = sbr.rel (0) target = $region53
    $region52: #{tpu_custom_call.1} parent=1 // pred_region
      %121 = dma.done [#allocation10], 32768
    $region53: #{tpu_custom_call.1} parent=1 // pred_fallthru
      _
    // Predicated region
    $region54: #{tpu_custom_call.1} parent=1 // pred_check
      _
    $region55: #{tpu_custom_call.1} parent=1 // pred_check_branch
      %123 = sbr.rel (0) target = $region57
    $region56: #{tpu_custom_call.1} parent=1 // pred_region
      %124 = dma.done [#allocation10], 64
    $region57: #{tpu_custom_call.1} parent=1 // pred_fallthru
      _
    // Predicated region
    $region58: #{tpu_custom_call.1} parent=1 // pred_check
      _
    $region59: #{tpu_custom_call.1} parent=1 // pred_check_branch
      %126 = sbr.rel (0) target = $region61
    $region60: #{tpu_custom_call.1} parent=1 // pred_region
      %127 = dma.done [#allocation13], 4096
    $region61: #{tpu_custom_call.1} parent=1 // pred_fallthru
      _
    // Predicated region
    $region62: #{tpu_custom_call.1} parent=1 // pred_check
      _
    $region63: #{tpu_custom_call.1} parent=1 // pred_check_branch
      %129 = sbr.rel (0) target = $region65
    $region64: #{tpu_custom_call.1} parent=1 // pred_region
      %130 = dma.done [#allocation13], 16
    $region65: #{tpu_custom_call.1} parent=1 // pred_fallthru
      _
    // Predicated region
    $region66: #{tpu_custom_call.1} parent=1 // pred_check
      _
    $region67: #{tpu_custom_call.1} parent=1 // pred_check_branch
      %132 = sbr.rel (0) target = $region69
    $region68: #{tpu_custom_call.1} parent=1 // pred_region
      %133 = dma.done [#allocation16], 16
    $region69: #{tpu_custom_call.1} parent=1 // pred_fallthru
      _
    %v135 = vld [vmem:[#allocation3] sm:$0xff]
    %v136 = vld [vmem:[#allocation3 + $0x8] sm:$0xff]
    %v137 = vld [vmem:[#allocation3 + $0x10] sm:$0xff]
    %v138 = vld [vmem:[#allocation3 + $0x18] sm:$0xff]
    %v139 = vld [vmem:[#allocation3 + $0x20] sm:$0xff]
    %v140 = vld [vmem:[#allocation3 + $0x28] sm:$0xff]
    %v141 = vpack.c.bf16 %v135, %v135
    %v142 = vpack.c.bf16 %v136, %v136
    %v143 = vpack.c.bf16 %v137, %v137
    %v144 = vpack.c.bf16 %v138, %v138
    %v145 = vpack.c.bf16 %v139, %v139
    %v146 = vpack.c.bf16 %v140, %v140
    %v147 = vld [vmem:[#allocation6] sm:$0xff]
    %v148 = vld [vmem:[#allocation6 + $0x8] sm:$0xff]
    %v149 = vld [vmem:[#allocation6 + $0x10] sm:$0xff]
    %v150 = vld [vmem:[#allocation6 + $0x18] sm:$0xff]
    %v151 = vld [vmem:[#allocation6 + $0x20] sm:$0xff]
    %v152 = vld [vmem:[#allocation6 + $0x28] sm:$0xff]
    %v153 = vld [vmem:[#allocation6 + $0x30] sm:$0xff]
    %v154 = vld [vmem:[#allocation6 + $0x38] sm:$0xff]
    %v155 = vld [vmem:[#allocation6 + $0x40] sm:$0xff]
    %v156 = vld [vmem:[#allocation6 + $0x48] sm:$0xff]
    %v157 = vld [vmem:[#allocation6 + $0x50] sm:$0xff]
    %v158 = vld [vmem:[#allocation6 + $0x58] sm:$0xff]
    %v159 = vld [vmem:[#allocation6 + $0x60] sm:$0xff]
    %v160 = vld [vmem:[#allocation6 + $0x68] sm:$0xff]
    %v161 = vld [vmem:[#allocation6 + $0x70] sm:$0xff]
    %v162 = vld [vmem:[#allocation6 + $0x78] sm:$0xff]
    %v163 = vld [vmem:[#allocation6 + $0x80] sm:$0xff]
    %v164 = vld [vmem:[#allocation6 + $0x88] sm:$0xff]
    %v165 = vld [vmem:[#allocation6 + $0x90] sm:$0xff]
    %v166 = vld [vmem:[#allocation6 + $0x98] sm:$0xff]
    %v167 = vld [vmem:[#allocation6 + $0xa0] sm:$0xff]
    %v168 = vld [vmem:[#allocation6 + $0xa8] sm:$0xff]
    %v169 = vld [vmem:[#allocation6 + $0xb0] sm:$0xff]
    %v170 = vld [vmem:[#allocation6 + $0xb8] sm:$0xff]
    %v171 = vld [vmem:[#allocation6 + $0xc0] sm:$0xff]
    %v172 = vld [vmem:[#allocation6 + $0xc8] sm:$0xff]
    %v173 = vld [vmem:[#allocation6 + $0xd0] sm:$0xff]
    %v174 = vld [vmem:[#allocation6 + $0xd8] sm:$0xff]
    %v175 = vld [vmem:[#allocation6 + $0xe0] sm:$0xff]
    %v176 = vld [vmem:[#allocation6 + $0xe8] sm:$0xff]
    %v177 = vld [vmem:[#allocation6 + $0xf0] sm:$0xff]
    %v178 = vld [vmem:[#allocation6 + $0xf8] sm:$0xff]
    %v179 = vld [vmem:[#allocation6 + $0x100] sm:$0xff]
    %v180 = vld [vmem:[#allocation6 + $0x108] sm:$0xff]
    %v181 = vld [vmem:[#allocation6 + $0x110] sm:$0xff]
    %v182 = vld [vmem:[#allocation6 + $0x118] sm:$0xff]
    %v183 = vld [vmem:[#allocation6 + $0x120] sm:$0xff]
    %v184 = vld [vmem:[#allocation6 + $0x128] sm:$0xff]
    %v185 = vld [vmem:[#allocation6 + $0x130] sm:$0xff]
    %v186 = vld [vmem:[#allocation6 + $0x138] sm:$0xff]
    %v187 = vld [vmem:[#allocation6 + $0x140] sm:$0xff]
    %v188 = vld [vmem:[#allocation6 + $0x148] sm:$0xff]
    %v189 = vld [vmem:[#allocation6 + $0x150] sm:$0xff]
    %v190 = vld [vmem:[#allocation6 + $0x158] sm:$0xff]
    %v191 = vld [vmem:[#allocation6 + $0x160] sm:$0xff]
    %v192 = vld [vmem:[#allocation6 + $0x168] sm:$0xff]
    %v193 = vld [vmem:[#allocation6 + $0x170] sm:$0xff]
    %v194 = vld [vmem:[#allocation6 + $0x178] sm:$0xff]
    %v195 = vld [vmem:[#allocation6 + $0x180] sm:$0xff]
    %v196 = vld [vmem:[#allocation6 + $0x188] sm:$0xff]
    %v197 = vld [vmem:[#allocation6 + $0x190] sm:$0xff]
    %v198 = vld [vmem:[#allocation6 + $0x198] sm:$0xff]
    %v199 = vld [vmem:[#allocation6 + $0x1a0] sm:$0xff]
    %v200 = vld [vmem:[#allocation6 + $0x1a8] sm:$0xff]
    %v201 = vld [vmem:[#allocation6 + $0x1b0] sm:$0xff]
    %v202 = vld [vmem:[#allocation6 + $0x1b8] sm:$0xff]
    %v203 = vld [vmem:[#allocation6 + $0x1c0] sm:$0xff]
    %v204 = vld [vmem:[#allocation6 + $0x1c8] sm:$0xff]
    %v205 = vld [vmem:[#allocation6 + $0x1d0] sm:$0xff]
    %v206 = vld [vmem:[#allocation6 + $0x1d8] sm:$0xff]
    %v207 = vld [vmem:[#allocation6 + $0x1e0] sm:$0xff]
    %v208 = vld [vmem:[#allocation6 + $0x1e8] sm:$0xff]
    %v209 = vld [vmem:[#allocation6 + $0x1f0] sm:$0xff]
    %v210 = vld [vmem:[#allocation6 + $0x1f8] sm:$0xff]
    %v211 = vld [vmem:[#allocation6 + $0x200] sm:$0xff]
    %v212 = vld [vmem:[#allocation6 + $0x208] sm:$0xff]
    %v213 = vld [vmem:[#allocation6 + $0x210] sm:$0xff]
    %v214 = vld [vmem:[#allocation6 + $0x218] sm:$0xff]
    %v215 = vld [vmem:[#allocation6 + $0x220] sm:$0xff]
    %v216 = vld [vmem:[#allocation6 + $0x228] sm:$0xff]
    %v217 = vld [vmem:[#allocation6 + $0x230] sm:$0xff]
    %v218 = vld [vmem:[#allocation6 + $0x238] sm:$0xff]
    %v219 = vld [vmem:[#allocation6 + $0x240] sm:$0xff]
    %v220 = vld [vmem:[#allocation6 + $0x248] sm:$0xff]
    %v221 = vld [vmem:[#allocation6 + $0x250] sm:$0xff]
    %v222 = vld [vmem:[#allocation6 + $0x258] sm:$0xff]
    %v223 = vld [vmem:[#allocation6 + $0x260] sm:$0xff]
    %v224 = vld [vmem:[#allocation6 + $0x268] sm:$0xff]
    %v225 = vld [vmem:[#allocation6 + $0x270] sm:$0xff]
    %v226 = vld [vmem:[#allocation6 + $0x278] sm:$0xff]
    %v227 = vld [vmem:[#allocation6 + $0x280] sm:$0xff]
    %v228 = vld [vmem:[#allocation6 + $0x288] sm:$0xff]
    %v229 = vld [vmem:[#allocation6 + $0x290] sm:$0xff]
    %v230 = vld [vmem:[#allocation6 + $0x298] sm:$0xff]
    %v231 = vld [vmem:[#allocation6 + $0x2a0] sm:$0xff]
    %v232 = vld [vmem:[#allocation6 + $0x2a8] sm:$0xff]
    %v233 = vld [vmem:[#allocation6 + $0x2b0] sm:$0xff]
    %v234 = vld [vmem:[#allocation6 + $0x2b8] sm:$0xff]
    %v235 = vld [vmem:[#allocation6 + $0x2c0] sm:$0xff]
    %v236 = vld [vmem:[#allocation6 + $0x2c8] sm:$0xff]
    %v237 = vld [vmem:[#allocation6 + $0x2d0] sm:$0xff]
    %v238 = vld [vmem:[#allocation6 + $0x2d8] sm:$0xff]
    %v239 = vld [vmem:[#allocation6 + $0x2e0] sm:$0xff]
    %v240 = vld [vmem:[#allocation6 + $0x2e8] sm:$0xff]
    %v241 = vld [vmem:[#allocation6 + $0x2f0] sm:$0xff]
    %v242 = vld [vmem:[#allocation6 + $0x2f8] sm:$0xff]
    %v243 = vld [vmem:[#allocation6 + $0x300] sm:$0xff]
    %v244 = vld [vmem:[#allocation6 + $0x308] sm:$0xff]
    %v245 = vld [vmem:[#allocation6 + $0x310] sm:$0xff]
    %v246 = vld [vmem:[#allocation6 + $0x318] sm:$0xff]
    %v247 = vld [vmem:[#allocation6 + $0x320] sm:$0xff]
    %v248 = vld [vmem:[#allocation6 + $0x328] sm:$0xff]
    %v249 = vld [vmem:[#allocation6 + $0x330] sm:$0xff]
    %v250 = vld [vmem:[#allocation6 + $0x338] sm:$0xff]
    %v251 = vld [vmem:[#allocation6 + $0x340] sm:$0xff]
    %v252 = vld [vmem:[#allocation6 + $0x348] sm:$0xff]
    %v253 = vld [vmem:[#allocation6 + $0x350] sm:$0xff]
    %v254 = vld [vmem:[#allocation6 + $0x358] sm:$0xff]
    %v255 = vld [vmem:[#allocation6 + $0x360] sm:$0xff]
    %v256 = vld [vmem:[#allocation6 + $0x368] sm:$0xff]
    %v257 = vld [vmem:[#allocation6 + $0x370] sm:$0xff]
    %v258 = vld [vmem:[#allocation6 + $0x378] sm:$0xff]
    %v259 = vld [vmem:[#allocation6 + $0x380] sm:$0xff]
    %v260 = vld [vmem:[#allocation6 + $0x388] sm:$0xff]
    %v261 = vld [vmem:[#allocation6 + $0x390] sm:$0xff]
    %v262 = vld [vmem:[#allocation6 + $0x398] sm:$0xff]
    %v263 = vld [vmem:[#allocation6 + $0x3a0] sm:$0xff]
    %v264 = vld [vmem:[#allocation6 + $0x3a8] sm:$0xff]
    %v265 = vld [vmem:[#allocation6 + $0x3b0] sm:$0xff]
    %v266 = vld [vmem:[#allocation6 + $0x3b8] sm:$0xff]
    %v267 = vld [vmem:[#allocation6 + $0x3c0] sm:$0xff]
    %v268 = vld [vmem:[#allocation6 + $0x3c8] sm:$0xff]
    %v269 = vld [vmem:[#allocation6 + $0x3d0] sm:$0xff]
    %v270 = vld [vmem:[#allocation6 + $0x3d8] sm:$0xff]
    %v271 = vld [vmem:[#allocation6 + $0x3e0] sm:$0xff]
    %v272 = vld [vmem:[#allocation6 + $0x3e8] sm:$0xff]
    %v273 = vld [vmem:[#allocation6 + $0x3f0] sm:$0xff]
    %v274 = vld [vmem:[#allocation6 + $0x3f8] sm:$0xff]
    %v275 = vld [vmem:[#allocation6 + $0x400] sm:$0xff]
    %v276 = vld [vmem:[#allocation6 + $0x408] sm:$0xff]
    %v277 = vld [vmem:[#allocation6 + $0x410] sm:$0xff]
    %v278 = vld [vmem:[#allocation6 + $0x418] sm:$0xff]
    %v279 = vld [vmem:[#allocation6 + $0x420] sm:$0xff]
    %v280 = vld [vmem:[#allocation6 + $0x428] sm:$0xff]
    %v281 = vld [vmem:[#allocation6 + $0x430] sm:$0xff]
    %v282 = vld [vmem:[#allocation6 + $0x438] sm:$0xff]
    %v283 = vld [vmem:[#allocation6 + $0x440] sm:$0xff]
    %v284 = vld [vmem:[#allocation6 + $0x448] sm:$0xff]
    %v285 = vld [vmem:[#allocation6 + $0x450] sm:$0xff]
    %v286 = vld [vmem:[#allocation6 + $0x458] sm:$0xff]
    %v287 = vld [vmem:[#allocation6 + $0x460] sm:$0xff]
    %v288 = vld [vmem:[#allocation6 + $0x468] sm:$0xff]
    %v289 = vld [vmem:[#allocation6 + $0x470] sm:$0xff]
    %v290 = vld [vmem:[#allocation6 + $0x478] sm:$0xff]
    %v291 = vld [vmem:[#allocation6 + $0x480] sm:$0xff]
    %v292 = vld [vmem:[#allocation6 + $0x488] sm:$0xff]
    %v293 = vld [vmem:[#allocation6 + $0x490] sm:$0xff]
    %v294 = vld [vmem:[#allocation6 + $0x498] sm:$0xff]
    %v295 = vld [vmem:[#allocation6 + $0x4a0] sm:$0xff]
    %v296 = vld [vmem:[#allocation6 + $0x4a8] sm:$0xff]
    %v297 = vld [vmem:[#allocation6 + $0x4b0] sm:$0xff]
    %v298 = vld [vmem:[#allocation6 + $0x4b8] sm:$0xff]
    %v299 = vld [vmem:[#allocation6 + $0x4c0] sm:$0xff]
    %v300 = vld [vmem:[#allocation6 + $0x4c8] sm:$0xff]
    %v301 = vld [vmem:[#allocation6 + $0x4d0] sm:$0xff]
    %v302 = vld [vmem:[#allocation6 + $0x4d8] sm:$0xff]
    %v303 = vld [vmem:[#allocation6 + $0x4e0] sm:$0xff]
    %v304 = vld [vmem:[#allocation6 + $0x4e8] sm:$0xff]
    %v305 = vld [vmem:[#allocation6 + $0x4f0] sm:$0xff]
    %v306 = vld [vmem:[#allocation6 + $0x4f8] sm:$0xff]
    %v307 = vld [vmem:[#allocation6 + $0x500] sm:$0xff]
    %v308 = vld [vmem:[#allocation6 + $0x508] sm:$0xff]
    %v309 = vld [vmem:[#allocation6 + $0x510] sm:$0xff]
    %v310 = vld [vmem:[#allocation6 + $0x518] sm:$0xff]
    %v311 = vld [vmem:[#allocation6 + $0x520] sm:$0xff]
    %v312 = vld [vmem:[#allocation6 + $0x528] sm:$0xff]
    %v313 = vld [vmem:[#allocation6 + $0x530] sm:$0xff]
    %v314 = vld [vmem:[#allocation6 + $0x538] sm:$0xff]
    %v315 = vld [vmem:[#allocation6 + $0x540] sm:$0xff]
    %v316 = vld [vmem:[#allocation6 + $0x548] sm:$0xff]
    %v317 = vld [vmem:[#allocation6 + $0x550] sm:$0xff]
    %v318 = vld [vmem:[#allocation6 + $0x558] sm:$0xff]
    %v319 = vld [vmem:[#allocation6 + $0x560] sm:$0xff]
    %v320 = vld [vmem:[#allocation6 + $0x568] sm:$0xff]
    %v321 = vld [vmem:[#allocation6 + $0x570] sm:$0xff]
    %v322 = vld [vmem:[#allocation6 + $0x578] sm:$0xff]
    %v323 = vld [vmem:[#allocation6 + $0x580] sm:$0xff]
    %v324 = vld [vmem:[#allocation6 + $0x588] sm:$0xff]
    %v325 = vld [vmem:[#allocation6 + $0x590] sm:$0xff]
    %v326 = vld [vmem:[#allocation6 + $0x598] sm:$0xff]
    %v327 = vld [vmem:[#allocation6 + $0x5a0] sm:$0xff]
    %v328 = vld [vmem:[#allocation6 + $0x5a8] sm:$0xff]
    %v329 = vld [vmem:[#allocation6 + $0x5b0] sm:$0xff]
    %v330 = vld [vmem:[#allocation6 + $0x5b8] sm:$0xff]
    %v331 = vld [vmem:[#allocation6 + $0x5c0] sm:$0xff]
    %v332 = vld [vmem:[#allocation6 + $0x5c8] sm:$0xff]
    %v333 = vld [vmem:[#allocation6 + $0x5d0] sm:$0xff]
    %v334 = vld [vmem:[#allocation6 + $0x5d8] sm:$0xff]
    %v335 = vld [vmem:[#allocation6 + $0x5e0] sm:$0xff]
    %v336 = vld [vmem:[#allocation6 + $0x5e8] sm:$0xff]
    %v337 = vld [vmem:[#allocation6 + $0x5f0] sm:$0xff]
    %v338 = vld [vmem:[#allocation6 + $0x5f8] sm:$0xff]
    %v339 = vld [vmem:[#allocation6 + $0x600] sm:$0xff]
    %v340 = vld [vmem:[#allocation6 + $0x608] sm:$0xff]
    %v341 = vld [vmem:[#allocation6 + $0x610] sm:$0xff]
    %v342 = vld [vmem:[#allocation6 + $0x618] sm:$0xff]
    %v343 = vld [vmem:[#allocation6 + $0x620] sm:$0xff]
    %v344 = vld [vmem:[#allocation6 + $0x628] sm:$0xff]
    %v345 = vld [vmem:[#allocation6 + $0x630] sm:$0xff]
    %v346 = vld [vmem:[#allocation6 + $0x638] sm:$0xff]
    %v347 = vld [vmem:[#allocation6 + $0x640] sm:$0xff]
    %v348 = vld [vmem:[#allocation6 + $0x648] sm:$0xff]
    %v349 = vld [vmem:[#allocation6 + $0x650] sm:$0xff]
    %v350 = vld [vmem:[#allocation6 + $0x658] sm:$0xff]
    %v351 = vld [vmem:[#allocation6 + $0x660] sm:$0xff]
    %v352 = vld [vmem:[#allocation6 + $0x668] sm:$0xff]
    %v353 = vld [vmem:[#allocation6 + $0x670] sm:$0xff]
    %v354 = vld [vmem:[#allocation6 + $0x678] sm:$0xff]
    %v355 = vld [vmem:[#allocation6 + $0x680] sm:$0xff]
    %v356 = vld [vmem:[#allocation6 + $0x688] sm:$0xff]
    %v357 = vld [vmem:[#allocation6 + $0x690] sm:$0xff]
    %v358 = vld [vmem:[#allocation6 + $0x698] sm:$0xff]
    %v359 = vld [vmem:[#allocation6 + $0x6a0] sm:$0xff]
    %v360 = vld [vmem:[#allocation6 + $0x6a8] sm:$0xff]
    %v361 = vld [vmem:[#allocation6 + $0x6b0] sm:$0xff]
    %v362 = vld [vmem:[#allocation6 + $0x6b8] sm:$0xff]
    %v363 = vld [vmem:[#allocation6 + $0x6c0] sm:$0xff]
    %v364 = vld [vmem:[#allocation6 + $0x6c8] sm:$0xff]
    %v365 = vld [vmem:[#allocation6 + $0x6d0] sm:$0xff]
    %v366 = vld [vmem:[#allocation6 + $0x6d8] sm:$0xff]
    %v367 = vld [vmem:[#allocation6 + $0x6e0] sm:$0xff]
    %v368 = vld [vmem:[#allocation6 + $0x6e8] sm:$0xff]
    %v369 = vld [vmem:[#allocation6 + $0x6f0] sm:$0xff]
    %v370 = vld [vmem:[#allocation6 + $0x6f8] sm:$0xff]
    %v371 = vld [vmem:[#allocation6 + $0x700] sm:$0xff]
    %v372 = vld [vmem:[#allocation6 + $0x708] sm:$0xff]
    %v373 = vld [vmem:[#allocation6 + $0x710] sm:$0xff]
    %v374 = vld [vmem:[#allocation6 + $0x718] sm:$0xff]
    %v375 = vld [vmem:[#allocation6 + $0x720] sm:$0xff]
    %v376 = vld [vmem:[#allocation6 + $0x728] sm:$0xff]
    %v377 = vld [vmem:[#allocation6 + $0x730] sm:$0xff]
    %v378 = vld [vmem:[#allocation6 + $0x738] sm:$0xff]
    %v379 = vld [vmem:[#allocation6 + $0x740] sm:$0xff]
    %v380 = vld [vmem:[#allocation6 + $0x748] sm:$0xff]
    %v381 = vld [vmem:[#allocation6 + $0x750] sm:$0xff]
    %v382 = vld [vmem:[#allocation6 + $0x758] sm:$0xff]
    %v383 = vld [vmem:[#allocation6 + $0x760] sm:$0xff]
    %v384 = vld [vmem:[#allocation6 + $0x768] sm:$0xff]
    %v385 = vld [vmem:[#allocation6 + $0x770] sm:$0xff]
    %v386 = vld [vmem:[#allocation6 + $0x778] sm:$0xff]
    %v387 = vld [vmem:[#allocation6 + $0x780] sm:$0xff]
    %v388 = vld [vmem:[#allocation6 + $0x788] sm:$0xff]
    %v389 = vld [vmem:[#allocation6 + $0x790] sm:$0xff]
    %v390 = vld [vmem:[#allocation6 + $0x798] sm:$0xff]
    %v391 = vld [vmem:[#allocation6 + $0x7a0] sm:$0xff]
    %v392 = vld [vmem:[#allocation6 + $0x7a8] sm:$0xff]
    %v393 = vld [vmem:[#allocation6 + $0x7b0] sm:$0xff]
    %v394 = vld [vmem:[#allocation6 + $0x7b8] sm:$0xff]
    %v395 = vld [vmem:[#allocation6 + $0x7c0] sm:$0xff]
    %v396 = vld [vmem:[#allocation6 + $0x7c8] sm:$0xff]
    %v397 = vld [vmem:[#allocation6 + $0x7d0] sm:$0xff]
    %v398 = vld [vmem:[#allocation6 + $0x7d8] sm:$0xff]
    %v399 = vld [vmem:[#allocation6 + $0x7e0] sm:$0xff]
    %v400 = vld [vmem:[#allocation6 + $0x7e8] sm:$0xff]
    %v401 = vld [vmem:[#allocation6 + $0x7f0] sm:$0xff]
    %v402 = vld [vmem:[#allocation6 + $0x7f8] sm:$0xff]
    %v403 = vld [vmem:[#allocation6 + $0x800] sm:$0xff]
    %v404 = vld [vmem:[#allocation6 + $0x808] sm:$0xff]
    %v405 = vld [vmem:[#allocation6 + $0x810] sm:$0xff]
    %v406 = vld [vmem:[#allocation6 + $0x818] sm:$0xff]
    %v407 = vld [vmem:[#allocation6 + $0x820] sm:$0xff]
    %v408 = vld [vmem:[#allocation6 + $0x828] sm:$0xff]
    %v409 = vld [vmem:[#allocation6 + $0x830] sm:$0xff]
    %v410 = vld [vmem:[#allocation6 + $0x838] sm:$0xff]
    %v411 = vld [vmem:[#allocation6 + $0x840] sm:$0xff]
    %v412 = vld [vmem:[#allocation6 + $0x848] sm:$0xff]
    %v413 = vld [vmem:[#allocation6 + $0x850] sm:$0xff]
    %v414 = vld [vmem:[#allocation6 + $0x858] sm:$0xff]
    %v415 = vld [vmem:[#allocation6 + $0x860] sm:$0xff]
    %v416 = vld [vmem:[#allocation6 + $0x868] sm:$0xff]
    %v417 = vld [vmem:[#allocation6 + $0x870] sm:$0xff]
    %v418 = vld [vmem:[#allocation6 + $0x878] sm:$0xff]
    %v419 = vld [vmem:[#allocation6 + $0x880] sm:$0xff]
    %v420 = vld [vmem:[#allocation6 + $0x888] sm:$0xff]
    %v421 = vld [vmem:[#allocation6 + $0x890] sm:$0xff]
    %v422 = vld [vmem:[#allocation6 + $0x898] sm:$0xff]
    %v423 = vld [vmem:[#allocation6 + $0x8a0] sm:$0xff]
    %v424 = vld [vmem:[#allocation6 + $0x8a8] sm:$0xff]
    %v425 = vld [vmem:[#allocation6 + $0x8b0] sm:$0xff]
    %v426 = vld [vmem:[#allocation6 + $0x8b8] sm:$0xff]
    %v427 = vld [vmem:[#allocation6 + $0x8c0] sm:$0xff]
    %v428 = vld [vmem:[#allocation6 + $0x8c8] sm:$0xff]
    %v429 = vld [vmem:[#allocation6 + $0x8d0] sm:$0xff]
    %v430 = vld [vmem:[#allocation6 + $0x8d8] sm:$0xff]
    %v431 = vld [vmem:[#allocation6 + $0x8e0] sm:$0xff]
    %v432 = vld [vmem:[#allocation6 + $0x8e8] sm:$0xff]
    %v433 = vld [vmem:[#allocation6 + $0x8f0] sm:$0xff]
    %v434 = vld [vmem:[#allocation6 + $0x8f8] sm:$0xff]
    %v435 = vld [vmem:[#allocation6 + $0x900] sm:$0xff]
    %v436 = vld [vmem:[#allocation6 + $0x908] sm:$0xff]
    %v437 = vld [vmem:[#allocation6 + $0x910] sm:$0xff]
    %v438 = vld [vmem:[#allocation6 + $0x918] sm:$0xff]
    %v439 = vld [vmem:[#allocation6 + $0x920] sm:$0xff]
    %v440 = vld [vmem:[#allocation6 + $0x928] sm:$0xff]
    %v441 = vld [vmem:[#allocation6 + $0x930] sm:$0xff]
    %v442 = vld [vmem:[#allocation6 + $0x938] sm:$0xff]
    %v443 = vld [vmem:[#allocation6 + $0x940] sm:$0xff]
    %v444 = vld [vmem:[#allocation6 + $0x948] sm:$0xff]
    %v445 = vld [vmem:[#allocation6 + $0x950] sm:$0xff]
    %v446 = vld [vmem:[#allocation6 + $0x958] sm:$0xff]
    %v447 = vld [vmem:[#allocation6 + $0x960] sm:$0xff]
    %v448 = vld [vmem:[#allocation6 + $0x968] sm:$0xff]
    %v449 = vld [vmem:[#allocation6 + $0x970] sm:$0xff]
    %v450 = vld [vmem:[#allocation6 + $0x978] sm:$0xff]
    %v451 = vld [vmem:[#allocation6 + $0x980] sm:$0xff]
    %v452 = vld [vmem:[#allocation6 + $0x988] sm:$0xff]
    %v453 = vld [vmem:[#allocation6 + $0x990] sm:$0xff]
    %v454 = vld [vmem:[#allocation6 + $0x998] sm:$0xff]
    %v455 = vld [vmem:[#allocation6 + $0x9a0] sm:$0xff]
    %v456 = vld [vmem:[#allocation6 + $0x9a8] sm:$0xff]
    %v457 = vld [vmem:[#allocation6 + $0x9b0] sm:$0xff]
    %v458 = vld [vmem:[#allocation6 + $0x9b8] sm:$0xff]
    %v459 = vld [vmem:[#allocation6 + $0x9c0] sm:$0xff]
    %v460 = vld [vmem:[#allocation6 + $0x9c8] sm:$0xff]
    %v461 = vld [vmem:[#allocation6 + $0x9d0] sm:$0xff]
    %v462 = vld [vmem:[#allocation6 + $0x9d8] sm:$0xff]
    %v463 = vld [vmem:[#allocation6 + $0x9e0] sm:$0xff]
    %v464 = vld [vmem:[#allocation6 + $0x9e8] sm:$0xff]
    %v465 = vld [vmem:[#allocation6 + $0x9f0] sm:$0xff]
    %v466 = vld [vmem:[#allocation6 + $0x9f8] sm:$0xff]
    %v467 = vld [vmem:[#allocation6 + $0xa00] sm:$0xff]
    %v468 = vld [vmem:[#allocation6 + $0xa08] sm:$0xff]
    %v469 = vld [vmem:[#allocation6 + $0xa10] sm:$0xff]
    %v470 = vld [vmem:[#allocation6 + $0xa18] sm:$0xff]
    %v471 = vld [vmem:[#allocation6 + $0xa20] sm:$0xff]
    %v472 = vld [vmem:[#allocation6 + $0xa28] sm:$0xff]
    %v473 = vld [vmem:[#allocation6 + $0xa30] sm:$0xff]
    %v474 = vld [vmem:[#allocation6 + $0xa38] sm:$0xff]
    %v475 = vld [vmem:[#allocation6 + $0xa40] sm:$0xff]
    %v476 = vld [vmem:[#allocation6 + $0xa48] sm:$0xff]
    %v477 = vld [vmem:[#allocation6 + $0xa50] sm:$0xff]
    %v478 = vld [vmem:[#allocation6 + $0xa58] sm:$0xff]
    %v479 = vld [vmem:[#allocation6 + $0xa60] sm:$0xff]
    %v480 = vld [vmem:[#allocation6 + $0xa68] sm:$0xff]
    %v481 = vld [vmem:[#allocation6 + $0xa70] sm:$0xff]
    %v482 = vld [vmem:[#allocation6 + $0xa78] sm:$0xff]
    %v483 = vld [vmem:[#allocation6 + $0xa80] sm:$0xff]
    %v484 = vld [vmem:[#allocation6 + $0xa88] sm:$0xff]
    %v485 = vld [vmem:[#allocation6 + $0xa90] sm:$0xff]
    %v486 = vld [vmem:[#allocation6 + $0xa98] sm:$0xff]
    %v487 = vld [vmem:[#allocation6 + $0xaa0] sm:$0xff]
    %v488 = vld [vmem:[#allocation6 + $0xaa8] sm:$0xff]
    %v489 = vld [vmem:[#allocation6 + $0xab0] sm:$0xff]
    %v490 = vld [vmem:[#allocation6 + $0xab8] sm:$0xff]
    %v491 = vld [vmem:[#allocation6 + $0xac0] sm:$0xff]
    %v492 = vld [vmem:[#allocation6 + $0xac8] sm:$0xff]
    %v493 = vld [vmem:[#allocation6 + $0xad0] sm:$0xff]
    %v494 = vld [vmem:[#allocation6 + $0xad8] sm:$0xff]
    %v495 = vld [vmem:[#allocation6 + $0xae0] sm:$0xff]
    %v496 = vld [vmem:[#allocation6 + $0xae8] sm:$0xff]
    %v497 = vld [vmem:[#allocation6 + $0xaf0] sm:$0xff]
    %v498 = vld [vmem:[#allocation6 + $0xaf8] sm:$0xff]
    %v499 = vld [vmem:[#allocation6 + $0xb00] sm:$0xff]
    %v500 = vld [vmem:[#allocation6 + $0xb08] sm:$0xff]
    %v501 = vld [vmem:[#allocation6 + $0xb10] sm:$0xff]
    %v502 = vld [vmem:[#allocation6 + $0xb18] sm:$0xff]
    %v503 = vld [vmem:[#allocation6 + $0xb20] sm:$0xff]
    %v504 = vld [vmem:[#allocation6 + $0xb28] sm:$0xff]
    %v505 = vld [vmem:[#allocation6 + $0xb30] sm:$0xff]
    %v506 = vld [vmem:[#allocation6 + $0xb38] sm:$0xff]
    %v507 = vld [vmem:[#allocation6 + $0xb40] sm:$0xff]
    %v508 = vld [vmem:[#allocation6 + $0xb48] sm:$0xff]
    %v509 = vld [vmem:[#allocation6 + $0xb50] sm:$0xff]
    %v510 = vld [vmem:[#allocation6 + $0xb58] sm:$0xff]
    %v511 = vld [vmem:[#allocation6 + $0xb60] sm:$0xff]
    %v512 = vld [vmem:[#allocation6 + $0xb68] sm:$0xff]
    %v513 = vld [vmem:[#allocation6 + $0xb70] sm:$0xff]
    %v514 = vld [vmem:[#allocation6 + $0xb78] sm:$0xff]
    %v515 = vld [vmem:[#allocation6 + $0xb80] sm:$0xff]
    %v516 = vld [vmem:[#allocation6 + $0xb88] sm:$0xff]
    %v517 = vld [vmem:[#allocation6 + $0xb90] sm:$0xff]
    %v518 = vld [vmem:[#allocation6 + $0xb98] sm:$0xff]
    %v519 = vld [vmem:[#allocation6 + $0xba0] sm:$0xff]
    %v520 = vld [vmem:[#allocation6 + $0xba8] sm:$0xff]
    %v521 = vld [vmem:[#allocation6 + $0xbb0] sm:$0xff]
    %v522 = vld [vmem:[#allocation6 + $0xbb8] sm:$0xff]
    %v523 = vld [vmem:[#allocation6 + $0xbc0] sm:$0xff]
    %v524 = vld [vmem:[#allocation6 + $0xbc8] sm:$0xff]
    %v525 = vld [vmem:[#allocation6 + $0xbd0] sm:$0xff]
    %v526 = vld [vmem:[#allocation6 + $0xbd8] sm:$0xff]
    %v527 = vld [vmem:[#allocation6 + $0xbe0] sm:$0xff]
    %v528 = vld [vmem:[#allocation6 + $0xbe8] sm:$0xff]
    %v529 = vld [vmem:[#allocation6 + $0xbf0] sm:$0xff]
    %v530 = vld [vmem:[#allocation6 + $0xbf8] sm:$0xff]
    %v531 = vld [vmem:[#allocation8] sm:$0xff]
    %v533 = vlaneseq
    %v534 = vshrl.u32 %v533, 7
    %v535 = vsub.s32 0, %v534
    %v536 = vrot.slane %v531, %v535
    %v537 = vlaneseq
    %v538 = vshrl.u32 %v537, 7
    %v539 = vsub.s32 1, %v538
    %v540 = vrot.slane %v531, %v539
    %v541 = vlaneseq
    %v542 = vshrl.u32 %v541, 7
    %v543 = vsub.s32 2, %v542
    %v544 = vrot.slane %v531, %v543
    %v545 = vlaneseq
    %v546 = vshrl.u32 %v545, 7
    %v547 = vsub.s32 3, %v546
    %v548 = vrot.slane %v531, %v547
    %v549 = vlaneseq
    %v550 = vshrl.u32 %v549, 7
    %v551 = vsub.s32 4, %v550
    %v552 = vrot.slane %v531, %v551
    %v553 = vlaneseq
    %v554 = vshrl.u32 %v553, 7
    %v555 = vsub.s32 5, %v554
    %v556 = vrot.slane %v531, %v555
    %v557 = vlaneseq
    %v558 = vshrl.u32 %v557, 7
    %v559 = vsub.s32 6, %v558
    %v560 = vrot.slane %v531, %v559
    %v561 = vlaneseq
    %v562 = vshrl.u32 %v561, 7
    %v563 = vsub.s32 7, %v562
    %v564 = vrot.slane %v531, %v563
    %v957 = vunpack.c.l.b16 %v147
    %v958 = vunpack.c.h.b16 %v147
    %v959 = vunpack.c.l.b16 %v148
    %v960 = vunpack.c.h.b16 %v148
    %v961 = vunpack.c.l.b16 %v149
    %v962 = vunpack.c.h.b16 %v149
    %v963 = vunpack.c.l.b16 %v150
    %v964 = vunpack.c.h.b16 %v150
    %v965 = vunpack.c.l.b16 %v151
    %v966 = vunpack.c.h.b16 %v151
    %v967 = vunpack.c.l.b16 %v152
    %v968 = vunpack.c.h.b16 %v152
    %v969 = vunpack.c.l.b16 %v153
    %v970 = vunpack.c.h.b16 %v153
    %v971 = vunpack.c.l.b16 %v154
    %v972 = vunpack.c.h.b16 %v154
    %v973 = vunpack.c.l.b16 %v155
    %v974 = vunpack.c.h.b16 %v155
    %v975 = vunpack.c.l.b16 %v156
    %v976 = vunpack.c.h.b16 %v156
    %v977 = vunpack.c.l.b16 %v157
    %v978 = vunpack.c.h.b16 %v157
    %v979 = vunpack.c.l.b16 %v158
    %v980 = vunpack.c.h.b16 %v158
    %v981 = vunpack.c.l.b16 %v159
    %v982 = vunpack.c.h.b16 %v159
    %v983 = vunpack.c.l.b16 %v160
    %v984 = vunpack.c.h.b16 %v160
    %v985 = vunpack.c.l.b16 %v161
    %v986 = vunpack.c.h.b16 %v161
    %v987 = vunpack.c.l.b16 %v162
    %v988 = vunpack.c.h.b16 %v162
    %v989 = vunpack.c.l.b16 %v163
    %v990 = vunpack.c.h.b16 %v163
    %v991 = vunpack.c.l.b16 %v164
    %v992 = vunpack.c.h.b16 %v164
    %v993 = vunpack.c.l.b16 %v165
    %v994 = vunpack.c.h.b16 %v165
    %v995 = vunpack.c.l.b16 %v166
    %v996 = vunpack.c.h.b16 %v166
    %v997 = vunpack.c.l.b16 %v167
    %v998 = vunpack.c.h.b16 %v167
    %v999 = vunpack.c.l.b16 %v168
    %v1000 = vunpack.c.h.b16 %v168
    %v1001 = vunpack.c.l.b16 %v169
    %v1002 = vunpack.c.h.b16 %v169
    %v1003 = vunpack.c.l.b16 %v170
    %v1004 = vunpack.c.h.b16 %v170
    %v1005 = vunpack.c.l.b16 %v171
    %v1006 = vunpack.c.h.b16 %v171
    %v1007 = vunpack.c.l.b16 %v172
    %v1008 = vunpack.c.h.b16 %v172
    %v1009 = vunpack.c.l.b16 %v173
    %v1010 = vunpack.c.h.b16 %v173
    %v1011 = vunpack.c.l.b16 %v174
    %v1012 = vunpack.c.h.b16 %v174
    %v1013 = vunpack.c.l.b16 %v175
    %v1014 = vunpack.c.h.b16 %v175
    %v1015 = vunpack.c.l.b16 %v176
    %v1016 = vunpack.c.h.b16 %v176
    %v1017 = vunpack.c.l.b16 %v177
    %v1018 = vunpack.c.h.b16 %v177
    %v1019 = vunpack.c.l.b16 %v178
    %v1020 = vunpack.c.h.b16 %v178
    %v1021 = vunpack.c.l.b16 %v179
    %v1022 = vunpack.c.h.b16 %v179
    %v1023 = vunpack.c.l.b16 %v180
    %v1024 = vunpack.c.h.b16 %v180
    %v1025 = vunpack.c.l.b16 %v181
    %v1026 = vunpack.c.h.b16 %v181
    %v1027 = vunpack.c.l.b16 %v182
    %v1028 = vunpack.c.h.b16 %v182
    %v1029 = vunpack.c.l.b16 %v183
    %v1030 = vunpack.c.h.b16 %v183
    %v1031 = vunpack.c.l.b16 %v184
    %v1032 = vunpack.c.h.b16 %v184
    %v1033 = vunpack.c.l.b16 %v185
    %v1034 = vunpack.c.h.b16 %v185
    %v1035 = vunpack.c.l.b16 %v186
    %v1036 = vunpack.c.h.b16 %v186
    %v1037 = vunpack.c.l.b16 %v187
    %v1038 = vunpack.c.h.b16 %v187
    %v1039 = vunpack.c.l.b16 %v188
    %v1040 = vunpack.c.h.b16 %v188
    %v1041 = vunpack.c.l.b16 %v189
    %v1042 = vunpack.c.h.b16 %v189
    %v1043 = vunpack.c.l.b16 %v190
    %v1044 = vunpack.c.h.b16 %v190
    %v1045 = vunpack.c.l.b16 %v191
    %v1046 = vunpack.c.h.b16 %v191
    %v1047 = vunpack.c.l.b16 %v192
    %v1048 = vunpack.c.h.b16 %v192
    %v1049 = vunpack.c.l.b16 %v193
    %v1050 = vunpack.c.h.b16 %v193
    %v1051 = vunpack.c.l.b16 %v194
    %v1052 = vunpack.c.h.b16 %v194
    %v1053 = vunpack.c.l.b16 %v195
    %v1054 = vunpack.c.h.b16 %v195
    %v1055 = vunpack.c.l.b16 %v196
    %v1056 = vunpack.c.h.b16 %v196
    %v1057 = vunpack.c.l.b16 %v197
    %v1058 = vunpack.c.h.b16 %v197
    %v1059 = vunpack.c.l.b16 %v198
    %v1060 = vunpack.c.h.b16 %v198
    %v1061 = vunpack.c.l.b16 %v199
    %v1062 = vunpack.c.h.b16 %v199
    %v1063 = vunpack.c.l.b16 %v200
    %v1064 = vunpack.c.h.b16 %v200
    %v1065 = vunpack.c.l.b16 %v201
    %v1066 = vunpack.c.h.b16 %v201
    %v1067 = vunpack.c.l.b16 %v202
    %v1068 = vunpack.c.h.b16 %v202
    %v1069 = vunpack.c.l.b16 %v203
    %v1070 = vunpack.c.h.b16 %v203
    %v1071 = vunpack.c.l.b16 %v204
    %v1072 = vunpack.c.h.b16 %v204
    %v1073 = vunpack.c.l.b16 %v205
    %v1074 = vunpack.c.h.b16 %v205
    %v1075 = vunpack.c.l.b16 %v206
    %v1076 = vunpack.c.h.b16 %v206
    %v1077 = vunpack.c.l.b16 %v207
    %v1078 = vunpack.c.h.b16 %v207
    %v1079 = vunpack.c.l.b16 %v208
    %v1080 = vunpack.c.h.b16 %v208
    %v1081 = vunpack.c.l.b16 %v209
    %v1082 = vunpack.c.h.b16 %v209
    %v1083 = vunpack.c.l.b16 %v210
    %v1084 = vunpack.c.h.b16 %v210
    %v1085 = vunpack.c.l.b16 %v211
    %v1086 = vunpack.c.h.b16 %v211
    %v1087 = vunpack.c.l.b16 %v212
    %v1088 = vunpack.c.h.b16 %v212
    %v1089 = vunpack.c.l.b16 %v213
    %v1090 = vunpack.c.h.b16 %v213
    %v1091 = vunpack.c.l.b16 %v214
    %v1092 = vunpack.c.h.b16 %v214
    %v1093 = vunpack.c.l.b16 %v215
    %v1094 = vunpack.c.h.b16 %v215
    %v1095 = vunpack.c.l.b16 %v216
    %v1096 = vunpack.c.h.b16 %v216
    %v1097 = vunpack.c.l.b16 %v217
    %v1098 = vunpack.c.h.b16 %v217
    %v1099 = vunpack.c.l.b16 %v218
    %v1100 = vunpack.c.h.b16 %v218
    %v1101 = vunpack.c.l.b16 %v219
    %v1102 = vunpack.c.h.b16 %v219
    %v1103 = vunpack.c.l.b16 %v220
    %v1104 = vunpack.c.h.b16 %v220
    %v1105 = vunpack.c.l.b16 %v221
    %v1106 = vunpack.c.h.b16 %v221
    %v1107 = vunpack.c.l.b16 %v222
    %v1108 = vunpack.c.h.b16 %v222
    %v1109 = vunpack.c.l.b16 %v223
    %v1110 = vunpack.c.h.b16 %v223
    %v1111 = vunpack.c.l.b16 %v224
    %v1112 = vunpack.c.h.b16 %v224
    %v1113 = vunpack.c.l.b16 %v225
    %v1114 = vunpack.c.h.b16 %v225
    %v1115 = vunpack.c.l.b16 %v226
    %v1116 = vunpack.c.h.b16 %v226
    %v1117 = vunpack.c.l.b16 %v227
    %v1118 = vunpack.c.h.b16 %v227
    %v1119 = vunpack.c.l.b16 %v228
    %v1120 = vunpack.c.h.b16 %v228
    %v1121 = vunpack.c.l.b16 %v229
    %v1122 = vunpack.c.h.b16 %v229
    %v1123 = vunpack.c.l.b16 %v230
    %v1124 = vunpack.c.h.b16 %v230
    %v1125 = vunpack.c.l.b16 %v231
    %v1126 = vunpack.c.h.b16 %v231
    %v1127 = vunpack.c.l.b16 %v232
    %v1128 = vunpack.c.h.b16 %v232
    %v1129 = vunpack.c.l.b16 %v233
    %v1130 = vunpack.c.h.b16 %v233
    %v1131 = vunpack.c.l.b16 %v234
    %v1132 = vunpack.c.h.b16 %v234
    %v1133 = vunpack.c.l.b16 %v235
    %v1134 = vunpack.c.h.b16 %v235
    %v1135 = vunpack.c.l.b16 %v236
    %v1136 = vunpack.c.h.b16 %v236
    %v1137 = vunpack.c.l.b16 %v237
    %v1138 = vunpack.c.h.b16 %v237
    %v1139 = vunpack.c.l.b16 %v238
    %v1140 = vunpack.c.h.b16 %v238
    %v1141 = vunpack.c.l.b16 %v239
    %v1142 = vunpack.c.h.b16 %v239
    %v1143 = vunpack.c.l.b16 %v240
    %v1144 = vunpack.c.h.b16 %v240
    %v1145 = vunpack.c.l.b16 %v241
    %v1146 = vunpack.c.h.b16 %v241
    %v1147 = vunpack.c.l.b16 %v242
    %v1148 = vunpack.c.h.b16 %v242
    %v1149 = vunpack.c.l.b16 %v243
    %v1150 = vunpack.c.h.b16 %v243
    %v1151 = vunpack.c.l.b16 %v244
    %v1152 = vunpack.c.h.b16 %v244
    %v1153 = vunpack.c.l.b16 %v245
    %v1154 = vunpack.c.h.b16 %v245
    %v1155 = vunpack.c.l.b16 %v246
    %v1156 = vunpack.c.h.b16 %v246
    %v1157 = vunpack.c.l.b16 %v247
    %v1158 = vunpack.c.h.b16 %v247
    %v1159 = vunpack.c.l.b16 %v248
    %v1160 = vunpack.c.h.b16 %v248
    %v1161 = vunpack.c.l.b16 %v249
    %v1162 = vunpack.c.h.b16 %v249
    %v1163 = vunpack.c.l.b16 %v250
    %v1164 = vunpack.c.h.b16 %v250
    %v1165 = vunpack.c.l.b16 %v251
    %v1166 = vunpack.c.h.b16 %v251
    %v1167 = vunpack.c.l.b16 %v252
    %v1168 = vunpack.c.h.b16 %v252
    %v1169 = vunpack.c.l.b16 %v253
    %v1170 = vunpack.c.h.b16 %v253
    %v1171 = vunpack.c.l.b16 %v254
    %v1172 = vunpack.c.h.b16 %v254
    %v1173 = vunpack.c.l.b16 %v255
    %v1174 = vunpack.c.h.b16 %v255
    %v1175 = vunpack.c.l.b16 %v256
    %v1176 = vunpack.c.h.b16 %v256
    %v1177 = vunpack.c.l.b16 %v257
    %v1178 = vunpack.c.h.b16 %v257
    %v1179 = vunpack.c.l.b16 %v258
    %v1180 = vunpack.c.h.b16 %v258
    %v1181 = vunpack.c.l.b16 %v259
    %v1182 = vunpack.c.h.b16 %v259
    %v1183 = vunpack.c.l.b16 %v260
    %v1184 = vunpack.c.h.b16 %v260
    %v1185 = vunpack.c.l.b16 %v261
    %v1186 = vunpack.c.h.b16 %v261
    %v1187 = vunpack.c.l.b16 %v262
    %v1188 = vunpack.c.h.b16 %v262
    %v1189 = vunpack.c.l.b16 %v263
    %v1190 = vunpack.c.h.b16 %v263
    %v1191 = vunpack.c.l.b16 %v264
    %v1192 = vunpack.c.h.b16 %v264
    %v1193 = vunpack.c.l.b16 %v265
    %v1194 = vunpack.c.h.b16 %v265
    %v1195 = vunpack.c.l.b16 %v266
    %v1196 = vunpack.c.h.b16 %v266
    %v1197 = vunpack.c.l.b16 %v267
    %v1198 = vunpack.c.h.b16 %v267
    %v1199 = vunpack.c.l.b16 %v268
    %v1200 = vunpack.c.h.b16 %v268
    %v1201 = vunpack.c.l.b16 %v269
    %v1202 = vunpack.c.h.b16 %v269
    %v1203 = vunpack.c.l.b16 %v270
    %v1204 = vunpack.c.h.b16 %v270
    %v1205 = vunpack.c.l.b16 %v271
    %v1206 = vunpack.c.h.b16 %v271
    %v1207 = vunpack.c.l.b16 %v272
    %v1208 = vunpack.c.h.b16 %v272
    %v1209 = vunpack.c.l.b16 %v273
    %v1210 = vunpack.c.h.b16 %v273
    %v1211 = vunpack.c.l.b16 %v274
    %v1212 = vunpack.c.h.b16 %v274
    %v1213 = vunpack.c.l.b16 %v275
    %v1214 = vunpack.c.h.b16 %v275
    %v1215 = vunpack.c.l.b16 %v276
    %v1216 = vunpack.c.h.b16 %v276
    %v1217 = vunpack.c.l.b16 %v277
    %v1218 = vunpack.c.h.b16 %v277
    %v1219 = vunpack.c.l.b16 %v278
    %v1220 = vunpack.c.h.b16 %v278
    %v1221 = vunpack.c.l.b16 %v279
    %v1222 = vunpack.c.h.b16 %v279
    %v1223 = vunpack.c.l.b16 %v280
    %v1224 = vunpack.c.h.b16 %v280
    %v1225 = vunpack.c.l.b16 %v281
    %v1226 = vunpack.c.h.b16 %v281
    %v1227 = vunpack.c.l.b16 %v282
    %v1228 = vunpack.c.h.b16 %v282
    %v1229 = vunpack.c.l.b16 %v283
    %v1230 = vunpack.c.h.b16 %v283
    %v1231 = vunpack.c.l.b16 %v284
    %v1232 = vunpack.c.h.b16 %v284
    %v1233 = vunpack.c.l.b16 %v285
    %v1234 = vunpack.c.h.b16 %v285
    %v1235 = vunpack.c.l.b16 %v286
    %v1236 = vunpack.c.h.b16 %v286
    %v1237 = vunpack.c.l.b16 %v287
    %v1238 = vunpack.c.h.b16 %v287
    %v1239 = vunpack.c.l.b16 %v288
    %v1240 = vunpack.c.h.b16 %v288
    %v1241 = vunpack.c.l.b16 %v289
    %v1242 = vunpack.c.h.b16 %v289
    %v1243 = vunpack.c.l.b16 %v290
    %v1244 = vunpack.c.h.b16 %v290
    %v1245 = vunpack.c.l.b16 %v291
    %v1246 = vunpack.c.h.b16 %v291
    %v1247 = vunpack.c.l.b16 %v292
    %v1248 = vunpack.c.h.b16 %v292
    %v1249 = vunpack.c.l.b16 %v293
    %v1250 = vunpack.c.h.b16 %v293
    %v1251 = vunpack.c.l.b16 %v294
    %v1252 = vunpack.c.h.b16 %v294
    %v1253 = vunpack.c.l.b16 %v295
    %v1254 = vunpack.c.h.b16 %v295
    %v1255 = vunpack.c.l.b16 %v296
    %v1256 = vunpack.c.h.b16 %v296
    %v1257 = vunpack.c.l.b16 %v297
    %v1258 = vunpack.c.h.b16 %v297
    %v1259 = vunpack.c.l.b16 %v298
    %v1260 = vunpack.c.h.b16 %v298
    %v1261 = vunpack.c.l.b16 %v299
    %v1262 = vunpack.c.h.b16 %v299
    %v1263 = vunpack.c.l.b16 %v300
    %v1264 = vunpack.c.h.b16 %v300
    %v1265 = vunpack.c.l.b16 %v301
    %v1266 = vunpack.c.h.b16 %v301
    %v1267 = vunpack.c.l.b16 %v302
    %v1268 = vunpack.c.h.b16 %v302
    %v1269 = vunpack.c.l.b16 %v303
    %v1270 = vunpack.c.h.b16 %v303
    %v1271 = vunpack.c.l.b16 %v304
    %v1272 = vunpack.c.h.b16 %v304
    %v1273 = vunpack.c.l.b16 %v305
    %v1274 = vunpack.c.h.b16 %v305
    %v1275 = vunpack.c.l.b16 %v306
    %v1276 = vunpack.c.h.b16 %v306
    %v1277 = vunpack.c.l.b16 %v307
    %v1278 = vunpack.c.h.b16 %v307
    %v1279 = vunpack.c.l.b16 %v308
    %v1280 = vunpack.c.h.b16 %v308
    %v1281 = vunpack.c.l.b16 %v309
    %v1282 = vunpack.c.h.b16 %v309
    %v1283 = vunpack.c.l.b16 %v310
    %v1284 = vunpack.c.h.b16 %v310
    %v1285 = vunpack.c.l.b16 %v311
    %v1286 = vunpack.c.h.b16 %v311
    %v1287 = vunpack.c.l.b16 %v312
    %v1288 = vunpack.c.h.b16 %v312
    %v1289 = vunpack.c.l.b16 %v313
    %v1290 = vunpack.c.h.b16 %v313
    %v1291 = vunpack.c.l.b16 %v314
    %v1292 = vunpack.c.h.b16 %v314
    %v1293 = vunpack.c.l.b16 %v315
    %v1294 = vunpack.c.h.b16 %v315
    %v1295 = vunpack.c.l.b16 %v316
    %v1296 = vunpack.c.h.b16 %v316
    %v1297 = vunpack.c.l.b16 %v317
    %v1298 = vunpack.c.h.b16 %v317
    %v1299 = vunpack.c.l.b16 %v318
    %v1300 = vunpack.c.h.b16 %v318
    %v1301 = vunpack.c.l.b16 %v319
    %v1302 = vunpack.c.h.b16 %v319
    %v1303 = vunpack.c.l.b16 %v320
    %v1304 = vunpack.c.h.b16 %v320
    %v1305 = vunpack.c.l.b16 %v321
    %v1306 = vunpack.c.h.b16 %v321
    %v1307 = vunpack.c.l.b16 %v322
    %v1308 = vunpack.c.h.b16 %v322
    %v1309 = vunpack.c.l.b16 %v323
    %v1310 = vunpack.c.h.b16 %v323
    %v1311 = vunpack.c.l.b16 %v324
    %v1312 = vunpack.c.h.b16 %v324
    %v1313 = vunpack.c.l.b16 %v325
    %v1314 = vunpack.c.h.b16 %v325
    %v1315 = vunpack.c.l.b16 %v326
    %v1316 = vunpack.c.h.b16 %v326
    %v1317 = vunpack.c.l.b16 %v327
    %v1318 = vunpack.c.h.b16 %v327
    %v1319 = vunpack.c.l.b16 %v328
    %v1320 = vunpack.c.h.b16 %v328
    %v1321 = vunpack.c.l.b16 %v329
    %v1322 = vunpack.c.h.b16 %v329
    %v1323 = vunpack.c.l.b16 %v330
    %v1324 = vunpack.c.h.b16 %v330
    %v1325 = vunpack.c.l.b16 %v331
    %v1326 = vunpack.c.h.b16 %v331
    %v1327 = vunpack.c.l.b16 %v332
    %v1328 = vunpack.c.h.b16 %v332
    %v1329 = vunpack.c.l.b16 %v333
    %v1330 = vunpack.c.h.b16 %v333
    %v1331 = vunpack.c.l.b16 %v334
    %v1332 = vunpack.c.h.b16 %v334
    %v1333 = vunpack.c.l.b16 %v335
    %v1334 = vunpack.c.h.b16 %v335
    %v1335 = vunpack.c.l.b16 %v336
    %v1336 = vunpack.c.h.b16 %v336
    %v1337 = vunpack.c.l.b16 %v337
    %v1338 = vunpack.c.h.b16 %v337
    %v1339 = vunpack.c.l.b16 %v338
    %v1340 = vunpack.c.h.b16 %v338
    %v1341 = vunpack.c.l.b16 %v339
    %v1342 = vunpack.c.h.b16 %v339
    %v1343 = vunpack.c.l.b16 %v340
    %v1344 = vunpack.c.h.b16 %v340
    %v1345 = vunpack.c.l.b16 %v341
    %v1346 = vunpack.c.h.b16 %v341
    %v1347 = vunpack.c.l.b16 %v342
    %v1348 = vunpack.c.h.b16 %v342
    %v1349 = vunpack.c.l.b16 %v343
    %v1350 = vunpack.c.h.b16 %v343
    %v1351 = vunpack.c.l.b16 %v344
    %v1352 = vunpack.c.h.b16 %v344
    %v1353 = vunpack.c.l.b16 %v345
    %v1354 = vunpack.c.h.b16 %v345
    %v1355 = vunpack.c.l.b16 %v346
    %v1356 = vunpack.c.h.b16 %v346
    %v1357 = vunpack.c.l.b16 %v347
    %v1358 = vunpack.c.h.b16 %v347
    %v1359 = vunpack.c.l.b16 %v348
    %v1360 = vunpack.c.h.b16 %v348
    %v1361 = vunpack.c.l.b16 %v349
    %v1362 = vunpack.c.h.b16 %v349
    %v1363 = vunpack.c.l.b16 %v350
    %v1364 = vunpack.c.h.b16 %v350
    %v1365 = vunpack.c.l.b16 %v351
    %v1366 = vunpack.c.h.b16 %v351
    %v1367 = vunpack.c.l.b16 %v352
    %v1368 = vunpack.c.h.b16 %v352
    %v1369 = vunpack.c.l.b16 %v353
    %v1370 = vunpack.c.h.b16 %v353
    %v1371 = vunpack.c.l.b16 %v354
    %v1372 = vunpack.c.h.b16 %v354
    %v1373 = vunpack.c.l.b16 %v355
    %v1374 = vunpack.c.h.b16 %v355
    %v1375 = vunpack.c.l.b16 %v356
    %v1376 = vunpack.c.h.b16 %v356
    %v1377 = vunpack.c.l.b16 %v357
    %v1378 = vunpack.c.h.b16 %v357
    %v1379 = vunpack.c.l.b16 %v358
    %v1380 = vunpack.c.h.b16 %v358
    %v1381 = vunpack.c.l.b16 %v359
    %v1382 = vunpack.c.h.b16 %v359
    %v1383 = vunpack.c.l.b16 %v360
    %v1384 = vunpack.c.h.b16 %v360
    %v1385 = vunpack.c.l.b16 %v361
    %v1386 = vunpack.c.h.b16 %v361
    %v1387 = vunpack.c.l.b16 %v362
    %v1388 = vunpack.c.h.b16 %v362
    %v1389 = vunpack.c.l.b16 %v363
    %v1390 = vunpack.c.h.b16 %v363
    %v1391 = vunpack.c.l.b16 %v364
    %v1392 = vunpack.c.h.b16 %v364
    %v1393 = vunpack.c.l.b16 %v365
    %v1394 = vunpack.c.h.b16 %v365
    %v1395 = vunpack.c.l.b16 %v366
    %v1396 = vunpack.c.h.b16 %v366
    %v1397 = vunpack.c.l.b16 %v367
    %v1398 = vunpack.c.h.b16 %v367
    %v1399 = vunpack.c.l.b16 %v368
    %v1400 = vunpack.c.h.b16 %v368
    %v1401 = vunpack.c.l.b16 %v369
    %v1402 = vunpack.c.h.b16 %v369
    %v1403 = vunpack.c.l.b16 %v370
    %v1404 = vunpack.c.h.b16 %v370
    %v1405 = vunpack.c.l.b16 %v371
    %v1406 = vunpack.c.h.b16 %v371
    %v1407 = vunpack.c.l.b16 %v372
    %v1408 = vunpack.c.h.b16 %v372
    %v1409 = vunpack.c.l.b16 %v373
    %v1410 = vunpack.c.h.b16 %v373
    %v1411 = vunpack.c.l.b16 %v374
    %v1412 = vunpack.c.h.b16 %v374
    %v1413 = vunpack.c.l.b16 %v375
    %v1414 = vunpack.c.h.b16 %v375
    %v1415 = vunpack.c.l.b16 %v376
    %v1416 = vunpack.c.h.b16 %v376
    %v1417 = vunpack.c.l.b16 %v377
    %v1418 = vunpack.c.h.b16 %v377
    %v1419 = vunpack.c.l.b16 %v378
    %v1420 = vunpack.c.h.b16 %v378
    %v1421 = vunpack.c.l.b16 %v379
    %v1422 = vunpack.c.h.b16 %v379
    %v1423 = vunpack.c.l.b16 %v380
    %v1424 = vunpack.c.h.b16 %v380
    %v1425 = vunpack.c.l.b16 %v381
    %v1426 = vunpack.c.h.b16 %v381
    %v1427 = vunpack.c.l.b16 %v382
    %v1428 = vunpack.c.h.b16 %v382
    %v1429 = vunpack.c.l.b16 %v383
    %v1430 = vunpack.c.h.b16 %v383
    %v1431 = vunpack.c.l.b16 %v384
    %v1432 = vunpack.c.h.b16 %v384
    %v1433 = vunpack.c.l.b16 %v385
    %v1434 = vunpack.c.h.b16 %v385
    %v1435 = vunpack.c.l.b16 %v386
    %v1436 = vunpack.c.h.b16 %v386
    %v1437 = vunpack.c.l.b16 %v387
    %v1438 = vunpack.c.h.b16 %v387
    %v1439 = vunpack.c.l.b16 %v388
    %v1440 = vunpack.c.h.b16 %v388
    %v1441 = vunpack.c.l.b16 %v389
    %v1442 = vunpack.c.h.b16 %v389
    %v1443 = vunpack.c.l.b16 %v390
    %v1444 = vunpack.c.h.b16 %v390
    %v1445 = vunpack.c.l.b16 %v391
    %v1446 = vunpack.c.h.b16 %v391
    %v1447 = vunpack.c.l.b16 %v392
    %v1448 = vunpack.c.h.b16 %v392
    %v1449 = vunpack.c.l.b16 %v393
    %v1450 = vunpack.c.h.b16 %v393
    %v1451 = vunpack.c.l.b16 %v394
    %v1452 = vunpack.c.h.b16 %v394
    %v1453 = vunpack.c.l.b16 %v395
    %v1454 = vunpack.c.h.b16 %v395
    %v1455 = vunpack.c.l.b16 %v396
    %v1456 = vunpack.c.h.b16 %v396
    %v1457 = vunpack.c.l.b16 %v397
    %v1458 = vunpack.c.h.b16 %v397
    %v1459 = vunpack.c.l.b16 %v398
    %v1460 = vunpack.c.h.b16 %v398
    %v1461 = vunpack.c.l.b16 %v399
    %v1462 = vunpack.c.h.b16 %v399
    %v1463 = vunpack.c.l.b16 %v400
    %v1464 = vunpack.c.h.b16 %v400
    %v1465 = vunpack.c.l.b16 %v401
    %v1466 = vunpack.c.h.b16 %v401
    %v1467 = vunpack.c.l.b16 %v402
    %v1468 = vunpack.c.h.b16 %v402
    %v1469 = vunpack.c.l.b16 %v403
    %v1470 = vunpack.c.h.b16 %v403
    %v1471 = vunpack.c.l.b16 %v404
    %v1472 = vunpack.c.h.b16 %v404
    %v1473 = vunpack.c.l.b16 %v405
    %v1474 = vunpack.c.h.b16 %v405
    %v1475 = vunpack.c.l.b16 %v406
    %v1476 = vunpack.c.h.b16 %v406
    %v1477 = vunpack.c.l.b16 %v407
    %v1478 = vunpack.c.h.b16 %v407
    %v1479 = vunpack.c.l.b16 %v408
    %v1480 = vunpack.c.h.b16 %v408
    %v1481 = vunpack.c.l.b16 %v409
    %v1482 = vunpack.c.h.b16 %v409
    %v1483 = vunpack.c.l.b16 %v410
    %v1484 = vunpack.c.h.b16 %v410
    %v1485 = vunpack.c.l.b16 %v411
    %v1486 = vunpack.c.h.b16 %v411
    %v1487 = vunpack.c.l.b16 %v412
    %v1488 = vunpack.c.h.b16 %v412
    %v1489 = vunpack.c.l.b16 %v413
    %v1490 = vunpack.c.h.b16 %v413
    %v1491 = vunpack.c.l.b16 %v414
    %v1492 = vunpack.c.h.b16 %v414
    %v1493 = vunpack.c.l.b16 %v415
    %v1494 = vunpack.c.h.b16 %v415
    %v1495 = vunpack.c.l.b16 %v416
    %v1496 = vunpack.c.h.b16 %v416
    %v1497 = vunpack.c.l.b16 %v417
    %v1498 = vunpack.c.h.b16 %v417
    %v1499 = vunpack.c.l.b16 %v418
    %v1500 = vunpack.c.h.b16 %v418
    %v1501 = vunpack.c.l.b16 %v419
    %v1502 = vunpack.c.h.b16 %v419
    %v1503 = vunpack.c.l.b16 %v420
    %v1504 = vunpack.c.h.b16 %v420
    %v1505 = vunpack.c.l.b16 %v421
    %v1506 = vunpack.c.h.b16 %v421
    %v1507 = vunpack.c.l.b16 %v422
    %v1508 = vunpack.c.h.b16 %v422
    %v1509 = vunpack.c.l.b16 %v423
    %v1510 = vunpack.c.h.b16 %v423
    %v1511 = vunpack.c.l.b16 %v424
    %v1512 = vunpack.c.h.b16 %v424
    %v1513 = vunpack.c.l.b16 %v425
    %v1514 = vunpack.c.h.b16 %v425
    %v1515 = vunpack.c.l.b16 %v426
    %v1516 = vunpack.c.h.b16 %v426
    %v1517 = vunpack.c.l.b16 %v427
    %v1518 = vunpack.c.h.b16 %v427
    %v1519 = vunpack.c.l.b16 %v428
    %v1520 = vunpack.c.h.b16 %v428
    %v1521 = vunpack.c.l.b16 %v429
    %v1522 = vunpack.c.h.b16 %v429
    %v1523 = vunpack.c.l.b16 %v430
    %v1524 = vunpack.c.h.b16 %v430
    %v1525 = vunpack.c.l.b16 %v431
    %v1526 = vunpack.c.h.b16 %v431
    %v1527 = vunpack.c.l.b16 %v432
    %v1528 = vunpack.c.h.b16 %v432
    %v1529 = vunpack.c.l.b16 %v433
    %v1530 = vunpack.c.h.b16 %v433
    %v1531 = vunpack.c.l.b16 %v434
    %v1532 = vunpack.c.h.b16 %v434
    %v1533 = vunpack.c.l.b16 %v435
    %v1534 = vunpack.c.h.b16 %v435
    %v1535 = vunpack.c.l.b16 %v436
    %v1536 = vunpack.c.h.b16 %v436
    %v1537 = vunpack.c.l.b16 %v437
    %v1538 = vunpack.c.h.b16 %v437
    %v1539 = vunpack.c.l.b16 %v438
    %v1540 = vunpack.c.h.b16 %v438
    %v1541 = vunpack.c.l.b16 %v439
    %v1542 = vunpack.c.h.b16 %v439
    %v1543 = vunpack.c.l.b16 %v440
    %v1544 = vunpack.c.h.b16 %v440
    %v1545 = vunpack.c.l.b16 %v441
    %v1546 = vunpack.c.h.b16 %v441
    %v1547 = vunpack.c.l.b16 %v442
    %v1548 = vunpack.c.h.b16 %v442
    %v1549 = vunpack.c.l.b16 %v443
    %v1550 = vunpack.c.h.b16 %v443
    %v1551 = vunpack.c.l.b16 %v444
    %v1552 = vunpack.c.h.b16 %v444
    %v1553 = vunpack.c.l.b16 %v445
    %v1554 = vunpack.c.h.b16 %v445
    %v1555 = vunpack.c.l.b16 %v446
    %v1556 = vunpack.c.h.b16 %v446
    %v1557 = vunpack.c.l.b16 %v447
    %v1558 = vunpack.c.h.b16 %v447
    %v1559 = vunpack.c.l.b16 %v448
    %v1560 = vunpack.c.h.b16 %v448
    %v1561 = vunpack.c.l.b16 %v449
    %v1562 = vunpack.c.h.b16 %v449
    %v1563 = vunpack.c.l.b16 %v450
    %v1564 = vunpack.c.h.b16 %v450
    %v1565 = vunpack.c.l.b16 %v451
    %v1566 = vunpack.c.h.b16 %v451
    %v1567 = vunpack.c.l.b16 %v452
    %v1568 = vunpack.c.h.b16 %v452
    %v1569 = vunpack.c.l.b16 %v453
    %v1570 = vunpack.c.h.b16 %v453
    %v1571 = vunpack.c.l.b16 %v454
    %v1572 = vunpack.c.h.b16 %v454
    %v1573 = vunpack.c.l.b16 %v455
    %v1574 = vunpack.c.h.b16 %v455
    %v1575 = vunpack.c.l.b16 %v456
    %v1576 = vunpack.c.h.b16 %v456
    %v1577 = vunpack.c.l.b16 %v457
    %v1578 = vunpack.c.h.b16 %v457
    %v1579 = vunpack.c.l.b16 %v458
    %v1580 = vunpack.c.h.b16 %v458
    %v1581 = vunpack.c.l.b16 %v459
    %v1582 = vunpack.c.h.b16 %v459
    %v1583 = vunpack.c.l.b16 %v460
    %v1584 = vunpack.c.h.b16 %v460
    %v1585 = vunpack.c.l.b16 %v461
    %v1586 = vunpack.c.h.b16 %v461
    %v1587 = vunpack.c.l.b16 %v462
    %v1588 = vunpack.c.h.b16 %v462
    %v1589 = vunpack.c.l.b16 %v463
    %v1590 = vunpack.c.h.b16 %v463
    %v1591 = vunpack.c.l.b16 %v464
    %v1592 = vunpack.c.h.b16 %v464
    %v1593 = vunpack.c.l.b16 %v465
    %v1594 = vunpack.c.h.b16 %v465
    %v1595 = vunpack.c.l.b16 %v466
    %v1596 = vunpack.c.h.b16 %v466
    %v1597 = vunpack.c.l.b16 %v467
    %v1598 = vunpack.c.h.b16 %v467
    %v1599 = vunpack.c.l.b16 %v468
    %v1600 = vunpack.c.h.b16 %v468
    %v1601 = vunpack.c.l.b16 %v469
    %v1602 = vunpack.c.h.b16 %v469
    %v1603 = vunpack.c.l.b16 %v470
    %v1604 = vunpack.c.h.b16 %v470
    %v1605 = vunpack.c.l.b16 %v471
    %v1606 = vunpack.c.h.b16 %v471
    %v1607 = vunpack.c.l.b16 %v472
    %v1608 = vunpack.c.h.b16 %v472
    %v1609 = vunpack.c.l.b16 %v473
    %v1610 = vunpack.c.h.b16 %v473
    %v1611 = vunpack.c.l.b16 %v474
    %v1612 = vunpack.c.h.b16 %v474
    %v1613 = vunpack.c.l.b16 %v475
    %v1614 = vunpack.c.h.b16 %v475
    %v1615 = vunpack.c.l.b16 %v476
    %v1616 = vunpack.c.h.b16 %v476
    %v1617 = vunpack.c.l.b16 %v477
    %v1618 = vunpack.c.h.b16 %v477
    %v1619 = vunpack.c.l.b16 %v478
    %v1620 = vunpack.c.h.b16 %v478
    %v1621 = vunpack.c.l.b16 %v479
    %v1622 = vunpack.c.h.b16 %v479
    %v1623 = vunpack.c.l.b16 %v480
    %v1624 = vunpack.c.h.b16 %v480
    %v1625 = vunpack.c.l.b16 %v481
    %v1626 = vunpack.c.h.b16 %v481
    %v1627 = vunpack.c.l.b16 %v482
    %v1628 = vunpack.c.h.b16 %v482
    %v1629 = vunpack.c.l.b16 %v483
    %v1630 = vunpack.c.h.b16 %v483
    %v1631 = vunpack.c.l.b16 %v484
    %v1632 = vunpack.c.h.b16 %v484
    %v1633 = vunpack.c.l.b16 %v485
    %v1634 = vunpack.c.h.b16 %v485
    %v1635 = vunpack.c.l.b16 %v486
    %v1636 = vunpack.c.h.b16 %v486
    %v1637 = vunpack.c.l.b16 %v487
    %v1638 = vunpack.c.h.b16 %v487
    %v1639 = vunpack.c.l.b16 %v488
    %v1640 = vunpack.c.h.b16 %v488
    %v1641 = vunpack.c.l.b16 %v489
    %v1642 = vunpack.c.h.b16 %v489
    %v1643 = vunpack.c.l.b16 %v490
    %v1644 = vunpack.c.h.b16 %v490
    %v1645 = vunpack.c.l.b16 %v491
    %v1646 = vunpack.c.h.b16 %v491
    %v1647 = vunpack.c.l.b16 %v492
    %v1648 = vunpack.c.h.b16 %v492
    %v1649 = vunpack.c.l.b16 %v493
    %v1650 = vunpack.c.h.b16 %v493
    %v1651 = vunpack.c.l.b16 %v494
    %v1652 = vunpack.c.h.b16 %v494
    %v1653 = vunpack.c.l.b16 %v495
    %v1654 = vunpack.c.h.b16 %v495
    %v1655 = vunpack.c.l.b16 %v496
    %v1656 = vunpack.c.h.b16 %v496
    %v1657 = vunpack.c.l.b16 %v497
    %v1658 = vunpack.c.h.b16 %v497
    %v1659 = vunpack.c.l.b16 %v498
    %v1660 = vunpack.c.h.b16 %v498
    %v1661 = vunpack.c.l.b16 %v499
    %v1662 = vunpack.c.h.b16 %v499
    %v1663 = vunpack.c.l.b16 %v500
    %v1664 = vunpack.c.h.b16 %v500
    %v1665 = vunpack.c.l.b16 %v501
    %v1666 = vunpack.c.h.b16 %v501
    %v1667 = vunpack.c.l.b16 %v502
    %v1668 = vunpack.c.h.b16 %v502
    %v1669 = vunpack.c.l.b16 %v503
    %v1670 = vunpack.c.h.b16 %v503
    %v1671 = vunpack.c.l.b16 %v504
    %v1672 = vunpack.c.h.b16 %v504
    %v1673 = vunpack.c.l.b16 %v505
    %v1674 = vunpack.c.h.b16 %v505
    %v1675 = vunpack.c.l.b16 %v506
    %v1676 = vunpack.c.h.b16 %v506
    %v1677 = vunpack.c.l.b16 %v507
    %v1678 = vunpack.c.h.b16 %v507
    %v1679 = vunpack.c.l.b16 %v508
    %v1680 = vunpack.c.h.b16 %v508
    %v1681 = vunpack.c.l.b16 %v509
    %v1682 = vunpack.c.h.b16 %v509
    %v1683 = vunpack.c.l.b16 %v510
    %v1684 = vunpack.c.h.b16 %v510
    %v1685 = vunpack.c.l.b16 %v511
    %v1686 = vunpack.c.h.b16 %v511
    %v1687 = vunpack.c.l.b16 %v512
    %v1688 = vunpack.c.h.b16 %v512
    %v1689 = vunpack.c.l.b16 %v513
    %v1690 = vunpack.c.h.b16 %v513
    %v1691 = vunpack.c.l.b16 %v514
    %v1692 = vunpack.c.h.b16 %v514
    %v1693 = vunpack.c.l.b16 %v515
    %v1694 = vunpack.c.h.b16 %v515
    %v1695 = vunpack.c.l.b16 %v516
    %v1696 = vunpack.c.h.b16 %v516
    %v1697 = vunpack.c.l.b16 %v517
    %v1698 = vunpack.c.h.b16 %v517
    %v1699 = vunpack.c.l.b16 %v518
    %v1700 = vunpack.c.h.b16 %v518
    %v1701 = vunpack.c.l.b16 %v519
    %v1702 = vunpack.c.h.b16 %v519
    %v1703 = vunpack.c.l.b16 %v520
    %v1704 = vunpack.c.h.b16 %v520
    %v1705 = vunpack.c.l.b16 %v521
    %v1706 = vunpack.c.h.b16 %v521
    %v1707 = vunpack.c.l.b16 %v522
    %v1708 = vunpack.c.h.b16 %v522
    %v1709 = vunpack.c.l.b16 %v523
    %v1710 = vunpack.c.h.b16 %v523
    %v1711 = vunpack.c.l.b16 %v524
    %v1712 = vunpack.c.h.b16 %v524
    %v1713 = vunpack.c.l.b16 %v525
    %v1714 = vunpack.c.h.b16 %v525
    %v1715 = vunpack.c.l.b16 %v526
    %v1716 = vunpack.c.h.b16 %v526
    %v1717 = vunpack.c.l.b16 %v527
    %v1718 = vunpack.c.h.b16 %v527
    %v1719 = vunpack.c.l.b16 %v528
    %v1720 = vunpack.c.h.b16 %v528
    %v1721 = vunpack.c.l.b16 %v529
    %v1722 = vunpack.c.h.b16 %v529
    %v1723 = vunpack.c.l.b16 %v530
    %v1724 = vunpack.c.h.b16 %v530
    %v1725 = vpack.c.b16 %v965, %v957
    %v1726 = vpack.c.b16 %v966, %v958
    %v1727 = vpack.c.b16 %v967, %v959
    %v1728 = vpack.c.b16 %v968, %v960
    %v1729 = vpack.c.b16 %v969, %v961
    %v1730 = vpack.c.b16 %v970, %v962
    %v1731 = vpack.c.b16 %v971, %v963
    %v1732 = vpack.c.b16 %v972, %v964
    %v1733 = vpack.c.b16 %v981, %v973
    %v1734 = vpack.c.b16 %v982, %v974
    %v1735 = vpack.c.b16 %v983, %v975
    %v1736 = vpack.c.b16 %v984, %v976
    %v1737 = vpack.c.b16 %v985, %v977
    %v1738 = vpack.c.b16 %v986, %v978
    %v1739 = vpack.c.b16 %v987, %v979
    %v1740 = vpack.c.b16 %v988, %v980
    %v1741 = vpack.c.b16 %v997, %v989
    %v1742 = vpack.c.b16 %v998, %v990
    %v1743 = vpack.c.b16 %v999, %v991
    %v1744 = vpack.c.b16 %v1000, %v992
    %v1745 = vpack.c.b16 %v1001, %v993
    %v1746 = vpack.c.b16 %v1002, %v994
    %v1747 = vpack.c.b16 %v1003, %v995
    %v1748 = vpack.c.b16 %v1004, %v996
    %v1749 = vpack.c.b16 %v1013, %v1005
    %v1750 = vpack.c.b16 %v1014, %v1006
    %v1751 = vpack.c.b16 %v1015, %v1007
    %v1752 = vpack.c.b16 %v1016, %v1008
    %v1753 = vpack.c.b16 %v1017, %v1009
    %v1754 = vpack.c.b16 %v1018, %v1010
    %v1755 = vpack.c.b16 %v1019, %v1011
    %v1756 = vpack.c.b16 %v1020, %v1012
    %v1757 = vpack.c.b16 %v1029, %v1021
    %v1758 = vpack.c.b16 %v1030, %v1022
    %v1759 = vpack.c.b16 %v1031, %v1023
    %v1760 = vpack.c.b16 %v1032, %v1024
    %v1761 = vpack.c.b16 %v1033, %v1025
    %v1762 = vpack.c.b16 %v1034, %v1026
    %v1763 = vpack.c.b16 %v1035, %v1027
    %v1764 = vpack.c.b16 %v1036, %v1028
    %v1765 = vpack.c.b16 %v1045, %v1037
    %v1766 = vpack.c.b16 %v1046, %v1038
    %v1767 = vpack.c.b16 %v1047, %v1039
    %v1768 = vpack.c.b16 %v1048, %v1040
    %v1769 = vpack.c.b16 %v1049, %v1041
    %v1770 = vpack.c.b16 %v1050, %v1042
    %v1771 = vpack.c.b16 %v1051, %v1043
    %v1772 = vpack.c.b16 %v1052, %v1044
    %v1773 = vpack.c.b16 %v1061, %v1053
    %v1774 = vpack.c.b16 %v1062, %v1054
    %v1775 = vpack.c.b16 %v1063, %v1055
    %v1776 = vpack.c.b16 %v1064, %v1056
    %v1777 = vpack.c.b16 %v1065, %v1057
    %v1778 = vpack.c.b16 %v1066, %v1058
    %v1779 = vpack.c.b16 %v1067, %v1059
    %v1780 = vpack.c.b16 %v1068, %v1060
    %v1781 = vpack.c.b16 %v1077, %v1069
    %v1782 = vpack.c.b16 %v1078, %v1070
    %v1783 = vpack.c.b16 %v1079, %v1071
    %v1784 = vpack.c.b16 %v1080, %v1072
    %v1785 = vpack.c.b16 %v1081, %v1073
    %v1786 = vpack.c.b16 %v1082, %v1074
    %v1787 = vpack.c.b16 %v1083, %v1075
    %v1788 = vpack.c.b16 %v1084, %v1076
    %v1789 = vpack.c.b16 %v1093, %v1085
    %v1790 = vpack.c.b16 %v1094, %v1086
    %v1791 = vpack.c.b16 %v1095, %v1087
    %v1792 = vpack.c.b16 %v1096, %v1088
    %v1793 = vpack.c.b16 %v1097, %v1089
    %v1794 = vpack.c.b16 %v1098, %v1090
    %v1795 = vpack.c.b16 %v1099, %v1091
    %v1796 = vpack.c.b16 %v1100, %v1092
    %v1797 = vpack.c.b16 %v1109, %v1101
    %v1798 = vpack.c.b16 %v1110, %v1102
    %v1799 = vpack.c.b16 %v1111, %v1103
    %v1800 = vpack.c.b16 %v1112, %v1104
    %v1801 = vpack.c.b16 %v1113, %v1105
    %v1802 = vpack.c.b16 %v1114, %v1106
    %v1803 = vpack.c.b16 %v1115, %v1107
    %v1804 = vpack.c.b16 %v1116, %v1108
    %v1805 = vpack.c.b16 %v1125, %v1117
    %v1806 = vpack.c.b16 %v1126, %v1118
    %v1807 = vpack.c.b16 %v1127, %v1119
    %v1808 = vpack.c.b16 %v1128, %v1120
    %v1809 = vpack.c.b16 %v1129, %v1121
    %v1810 = vpack.c.b16 %v1130, %v1122
    %v1811 = vpack.c.b16 %v1131, %v1123
    %v1812 = vpack.c.b16 %v1132, %v1124
    %v1813 = vpack.c.b16 %v1141, %v1133
    %v1814 = vpack.c.b16 %v1142, %v1134
    %v1815 = vpack.c.b16 %v1143, %v1135
    %v1816 = vpack.c.b16 %v1144, %v1136
    %v1817 = vpack.c.b16 %v1145, %v1137
    %v1818 = vpack.c.b16 %v1146, %v1138
    %v1819 = vpack.c.b16 %v1147, %v1139
    %v1820 = vpack.c.b16 %v1148, %v1140
    %v1821 = vpack.c.b16 %v1157, %v1149
    %v1822 = vpack.c.b16 %v1158, %v1150
    %v1823 = vpack.c.b16 %v1159, %v1151
    %v1824 = vpack.c.b16 %v1160, %v1152
    %v1825 = vpack.c.b16 %v1161, %v1153
    %v1826 = vpack.c.b16 %v1162, %v1154
    %v1827 = vpack.c.b16 %v1163, %v1155
    %v1828 = vpack.c.b16 %v1164, %v1156
    %v1829 = vpack.c.b16 %v1173, %v1165
    %v1830 = vpack.c.b16 %v1174, %v1166
    %v1831 = vpack.c.b16 %v1175, %v1167
    %v1832 = vpack.c.b16 %v1176, %v1168
    %v1833 = vpack.c.b16 %v1177, %v1169
    %v1834 = vpack.c.b16 %v1178, %v1170
    %v1835 = vpack.c.b16 %v1179, %v1171
    %v1836 = vpack.c.b16 %v1180, %v1172
    %v1837 = vpack.c.b16 %v1189, %v1181
    %v1838 = vpack.c.b16 %v1190, %v1182
    %v1839 = vpack.c.b16 %v1191, %v1183
    %v1840 = vpack.c.b16 %v1192, %v1184
    %v1841 = vpack.c.b16 %v1193, %v1185
    %v1842 = vpack.c.b16 %v1194, %v1186
    %v1843 = vpack.c.b16 %v1195, %v1187
    %v1844 = vpack.c.b16 %v1196, %v1188
    %v1845 = vpack.c.b16 %v1205, %v1197
    %v1846 = vpack.c.b16 %v1206, %v1198
    %v1847 = vpack.c.b16 %v1207, %v1199
    %v1848 = vpack.c.b16 %v1208, %v1200
    %v1849 = vpack.c.b16 %v1209, %v1201
    %v1850 = vpack.c.b16 %v1210, %v1202
    %v1851 = vpack.c.b16 %v1211, %v1203
    %v1852 = vpack.c.b16 %v1212, %v1204
    %v1853 = vpack.c.b16 %v1221, %v1213
    %v1854 = vpack.c.b16 %v1222, %v1214
    %v1855 = vpack.c.b16 %v1223, %v1215
    %v1856 = vpack.c.b16 %v1224, %v1216
    %v1857 = vpack.c.b16 %v1225, %v1217
    %v1858 = vpack.c.b16 %v1226, %v1218
    %v1859 = vpack.c.b16 %v1227, %v1219
    %v1860 = vpack.c.b16 %v1228, %v1220
    %v1861 = vpack.c.b16 %v1237, %v1229
    %v1862 = vpack.c.b16 %v1238, %v1230
    %v1863 = vpack.c.b16 %v1239, %v1231
    %v1864 = vpack.c.b16 %v1240, %v1232
    %v1865 = vpack.c.b16 %v1241, %v1233
    %v1866 = vpack.c.b16 %v1242, %v1234
    %v1867 = vpack.c.b16 %v1243, %v1235
    %v1868 = vpack.c.b16 %v1244, %v1236
    %v1869 = vpack.c.b16 %v1253, %v1245
    %v1870 = vpack.c.b16 %v1254, %v1246
    %v1871 = vpack.c.b16 %v1255, %v1247
    %v1872 = vpack.c.b16 %v1256, %v1248
    %v1873 = vpack.c.b16 %v1257, %v1249
    %v1874 = vpack.c.b16 %v1258, %v1250
    %v1875 = vpack.c.b16 %v1259, %v1251
    %v1876 = vpack.c.b16 %v1260, %v1252
    %v1877 = vpack.c.b16 %v1269, %v1261
    %v1878 = vpack.c.b16 %v1270, %v1262
    %v1879 = vpack.c.b16 %v1271, %v1263
    %v1880 = vpack.c.b16 %v1272, %v1264
    %v1881 = vpack.c.b16 %v1273, %v1265
    %v1882 = vpack.c.b16 %v1274, %v1266
    %v1883 = vpack.c.b16 %v1275, %v1267
    %v1884 = vpack.c.b16 %v1276, %v1268
    %v1885 = vpack.c.b16 %v1285, %v1277
    %v1886 = vpack.c.b16 %v1286, %v1278
    %v1887 = vpack.c.b16 %v1287, %v1279
    %v1888 = vpack.c.b16 %v1288, %v1280
    %v1889 = vpack.c.b16 %v1289, %v1281
    %v1890 = vpack.c.b16 %v1290, %v1282
    %v1891 = vpack.c.b16 %v1291, %v1283
    %v1892 = vpack.c.b16 %v1292, %v1284
    %v1893 = vpack.c.b16 %v1301, %v1293
    %v1894 = vpack.c.b16 %v1302, %v1294
    %v1895 = vpack.c.b16 %v1303, %v1295
    %v1896 = vpack.c.b16 %v1304, %v1296
    %v1897 = vpack.c.b16 %v1305, %v1297
    %v1898 = vpack.c.b16 %v1306, %v1298
    %v1899 = vpack.c.b16 %v1307, %v1299
    %v1900 = vpack.c.b16 %v1308, %v1300
    %v1901 = vpack.c.b16 %v1317, %v1309
    %v1902 = vpack.c.b16 %v1318, %v1310
    %v1903 = vpack.c.b16 %v1319, %v1311
    %v1904 = vpack.c.b16 %v1320, %v1312
    %v1905 = vpack.c.b16 %v1321, %v1313
    %v1906 = vpack.c.b16 %v1322, %v1314
    %v1907 = vpack.c.b16 %v1323, %v1315
    %v1908 = vpack.c.b16 %v1324, %v1316
    %v1909 = vpack.c.b16 %v1333, %v1325
    %v1910 = vpack.c.b16 %v1334, %v1326
    %v1911 = vpack.c.b16 %v1335, %v1327
    %v1912 = vpack.c.b16 %v1336, %v1328
    %v1913 = vpack.c.b16 %v1337, %v1329
    %v1914 = vpack.c.b16 %v1338, %v1330
    %v1915 = vpack.c.b16 %v1339, %v1331
    %v1916 = vpack.c.b16 %v1340, %v1332
    %v1917 = vpack.c.b16 %v1349, %v1341
    %v1918 = vpack.c.b16 %v1350, %v1342
    %v1919 = vpack.c.b16 %v1351, %v1343
    %v1920 = vpack.c.b16 %v1352, %v1344
    %v1921 = vpack.c.b16 %v1353, %v1345
    %v1922 = vpack.c.b16 %v1354, %v1346
    %v1923 = vpack.c.b16 %v1355, %v1347
    %v1924 = vpack.c.b16 %v1356, %v1348
    %v1925 = vpack.c.b16 %v1365, %v1357
    %v1926 = vpack.c.b16 %v1366, %v1358
    %v1927 = vpack.c.b16 %v1367, %v1359
    %v1928 = vpack.c.b16 %v1368, %v1360
    %v1929 = vpack.c.b16 %v1369, %v1361
    %v1930 = vpack.c.b16 %v1370, %v1362
    %v1931 = vpack.c.b16 %v1371, %v1363
    %v1932 = vpack.c.b16 %v1372, %v1364
    %v1933 = vpack.c.b16 %v1381, %v1373
    %v1934 = vpack.c.b16 %v1382, %v1374
    %v1935 = vpack.c.b16 %v1383, %v1375
    %v1936 = vpack.c.b16 %v1384, %v1376
    %v1937 = vpack.c.b16 %v1385, %v1377
    %v1938 = vpack.c.b16 %v1386, %v1378
    %v1939 = vpack.c.b16 %v1387, %v1379
    %v1940 = vpack.c.b16 %v1388, %v1380
    %v1941 = vpack.c.b16 %v1397, %v1389
    %v1942 = vpack.c.b16 %v1398, %v1390
    %v1943 = vpack.c.b16 %v1399, %v1391
    %v1944 = vpack.c.b16 %v1400, %v1392
    %v1945 = vpack.c.b16 %v1401, %v1393
    %v1946 = vpack.c.b16 %v1402, %v1394
    %v1947 = vpack.c.b16 %v1403, %v1395
    %v1948 = vpack.c.b16 %v1404, %v1396
    %v1949 = vpack.c.b16 %v1413, %v1405
    %v1950 = vpack.c.b16 %v1414, %v1406
    %v1951 = vpack.c.b16 %v1415, %v1407
    %v1952 = vpack.c.b16 %v1416, %v1408
    %v1953 = vpack.c.b16 %v1417, %v1409
    %v1954 = vpack.c.b16 %v1418, %v1410
    %v1955 = vpack.c.b16 %v1419, %v1411
    %v1956 = vpack.c.b16 %v1420, %v1412
    %v1957 = vpack.c.b16 %v1429, %v1421
    %v1958 = vpack.c.b16 %v1430, %v1422
    %v1959 = vpack.c.b16 %v1431, %v1423
    %v1960 = vpack.c.b16 %v1432, %v1424
    %v1961 = vpack.c.b16 %v1433, %v1425
    %v1962 = vpack.c.b16 %v1434, %v1426
    %v1963 = vpack.c.b16 %v1435, %v1427
    %v1964 = vpack.c.b16 %v1436, %v1428
    %v1965 = vpack.c.b16 %v1445, %v1437
    %v1966 = vpack.c.b16 %v1446, %v1438
    %v1967 = vpack.c.b16 %v1447, %v1439
    %v1968 = vpack.c.b16 %v1448, %v1440
    %v1969 = vpack.c.b16 %v1449, %v1441
    %v1970 = vpack.c.b16 %v1450, %v1442
    %v1971 = vpack.c.b16 %v1451, %v1443
    %v1972 = vpack.c.b16 %v1452, %v1444
    %v1973 = vpack.c.b16 %v1461, %v1453
    %v1974 = vpack.c.b16 %v1462, %v1454
    %v1975 = vpack.c.b16 %v1463, %v1455
    %v1976 = vpack.c.b16 %v1464, %v1456
    %v1977 = vpack.c.b16 %v1465, %v1457
    %v1978 = vpack.c.b16 %v1466, %v1458
    %v1979 = vpack.c.b16 %v1467, %v1459
    %v1980 = vpack.c.b16 %v1468, %v1460
    %v1981 = vpack.c.b16 %v1477, %v1469
    %v1982 = vpack.c.b16 %v1478, %v1470
    %v1983 = vpack.c.b16 %v1479, %v1471
    %v1984 = vpack.c.b16 %v1480, %v1472
    %v1985 = vpack.c.b16 %v1481, %v1473
    %v1986 = vpack.c.b16 %v1482, %v1474
    %v1987 = vpack.c.b16 %v1483, %v1475
    %v1988 = vpack.c.b16 %v1484, %v1476
    %v1989 = vpack.c.b16 %v1493, %v1485
    %v1990 = vpack.c.b16 %v1494, %v1486
    %v1991 = vpack.c.b16 %v1495, %v1487
    %v1992 = vpack.c.b16 %v1496, %v1488
    %v1993 = vpack.c.b16 %v1497, %v1489
    %v1994 = vpack.c.b16 %v1498, %v1490
    %v1995 = vpack.c.b16 %v1499, %v1491
    %v1996 = vpack.c.b16 %v1500, %v1492
    %v1997 = vpack.c.b16 %v1509, %v1501
    %v1998 = vpack.c.b16 %v1510, %v1502
    %v1999 = vpack.c.b16 %v1511, %v1503
    %v2000 = vpack.c.b16 %v1512, %v1504
    %v2001 = vpack.c.b16 %v1513, %v1505
    %v2002 = vpack.c.b16 %v1514, %v1506
    %v2003 = vpack.c.b16 %v1515, %v1507
    %v2004 = vpack.c.b16 %v1516, %v1508
    %v2005 = vpack.c.b16 %v1525, %v1517
    %v2006 = vpack.c.b16 %v1526, %v1518
    %v2007 = vpack.c.b16 %v1527, %v1519
    %v2008 = vpack.c.b16 %v1528, %v1520
    %v2009 = vpack.c.b16 %v1529, %v1521
    %v2010 = vpack.c.b16 %v1530, %v1522
    %v2011 = vpack.c.b16 %v1531, %v1523
    %v2012 = vpack.c.b16 %v1532, %v1524
    %v2013 = vpack.c.b16 %v1541, %v1533
    %v2014 = vpack.c.b16 %v1542, %v1534
    %v2015 = vpack.c.b16 %v1543, %v1535
    %v2016 = vpack.c.b16 %v1544, %v1536
    %v2017 = vpack.c.b16 %v1545, %v1537
    %v2018 = vpack.c.b16 %v1546, %v1538
    %v2019 = vpack.c.b16 %v1547, %v1539
    %v2020 = vpack.c.b16 %v1548, %v1540
    %v2021 = vpack.c.b16 %v1557, %v1549
    %v2022 = vpack.c.b16 %v1558, %v1550
    %v2023 = vpack.c.b16 %v1559, %v1551
    %v2024 = vpack.c.b16 %v1560, %v1552
    %v2025 = vpack.c.b16 %v1561, %v1553
    %v2026 = vpack.c.b16 %v1562, %v1554
    %v2027 = vpack.c.b16 %v1563, %v1555
    %v2028 = vpack.c.b16 %v1564, %v1556
    %v2029 = vpack.c.b16 %v1573, %v1565
    %v2030 = vpack.c.b16 %v1574, %v1566
    %v2031 = vpack.c.b16 %v1575, %v1567
    %v2032 = vpack.c.b16 %v1576, %v1568
    %v2033 = vpack.c.b16 %v1577, %v1569
    %v2034 = vpack.c.b16 %v1578, %v1570
    %v2035 = vpack.c.b16 %v1579, %v1571
    %v2036 = vpack.c.b16 %v1580, %v1572
    %v2037 = vpack.c.b16 %v1589, %v1581
    %v2038 = vpack.c.b16 %v1590, %v1582
    %v2039 = vpack.c.b16 %v1591, %v1583
    %v2040 = vpack.c.b16 %v1592, %v1584
    %v2041 = vpack.c.b16 %v1593, %v1585
    %v2042 = vpack.c.b16 %v1594, %v1586
    %v2043 = vpack.c.b16 %v1595, %v1587
    %v2044 = vpack.c.b16 %v1596, %v1588
    %v2045 = vpack.c.b16 %v1605, %v1597
    %v2046 = vpack.c.b16 %v1606, %v1598
    %v2047 = vpack.c.b16 %v1607, %v1599
    %v2048 = vpack.c.b16 %v1608, %v1600
    %v2049 = vpack.c.b16 %v1609, %v1601
    %v2050 = vpack.c.b16 %v1610, %v1602
    %v2051 = vpack.c.b16 %v1611, %v1603
    %v2052 = vpack.c.b16 %v1612, %v1604
    %v2053 = vpack.c.b16 %v1621, %v1613
    %v2054 = vpack.c.b16 %v1622, %v1614
    %v2055 = vpack.c.b16 %v1623, %v1615
    %v2056 = vpack.c.b16 %v1624, %v1616
    %v2057 = vpack.c.b16 %v1625, %v1617
    %v2058 = vpack.c.b16 %v1626, %v1618
    %v2059 = vpack.c.b16 %v1627, %v1619
    %v2060 = vpack.c.b16 %v1628, %v1620
    %v2061 = vpack.c.b16 %v1637, %v1629
    %v2062 = vpack.c.b16 %v1638, %v1630
    %v2063 = vpack.c.b16 %v1639, %v1631
    %v2064 = vpack.c.b16 %v1640, %v1632
    %v2065 = vpack.c.b16 %v1641, %v1633
    %v2066 = vpack.c.b16 %v1642, %v1634
    %v2067 = vpack.c.b16 %v1643, %v1635
    %v2068 = vpack.c.b16 %v1644, %v1636
    %v2069 = vpack.c.b16 %v1653, %v1645
    %v2070 = vpack.c.b16 %v1654, %v1646
    %v2071 = vpack.c.b16 %v1655, %v1647
    %v2072 = vpack.c.b16 %v1656, %v1648
    %v2073 = vpack.c.b16 %v1657, %v1649
    %v2074 = vpack.c.b16 %v1658, %v1650
    %v2075 = vpack.c.b16 %v1659, %v1651
    %v2076 = vpack.c.b16 %v1660, %v1652
    %v2077 = vpack.c.b16 %v1669, %v1661
    %v2078 = vpack.c.b16 %v1670, %v1662
    %v2079 = vpack.c.b16 %v1671, %v1663
    %v2080 = vpack.c.b16 %v1672, %v1664
    %v2081 = vpack.c.b16 %v1673, %v1665
    %v2082 = vpack.c.b16 %v1674, %v1666
    %v2083 = vpack.c.b16 %v1675, %v1667
    %v2084 = vpack.c.b16 %v1676, %v1668
    %v2085 = vpack.c.b16 %v1685, %v1677
    %v2086 = vpack.c.b16 %v1686, %v1678
    %v2087 = vpack.c.b16 %v1687, %v1679
    %v2088 = vpack.c.b16 %v1688, %v1680
    %v2089 = vpack.c.b16 %v1689, %v1681
    %v2090 = vpack.c.b16 %v1690, %v1682
    %v2091 = vpack.c.b16 %v1691, %v1683
    %v2092 = vpack.c.b16 %v1692, %v1684
    %v2093 = vpack.c.b16 %v1701, %v1693
    %v2094 = vpack.c.b16 %v1702, %v1694
    %v2095 = vpack.c.b16 %v1703, %v1695
    %v2096 = vpack.c.b16 %v1704, %v1696
    %v2097 = vpack.c.b16 %v1705, %v1697
    %v2098 = vpack.c.b16 %v1706, %v1698
    %v2099 = vpack.c.b16 %v1707, %v1699
    %v2100 = vpack.c.b16 %v1708, %v1700
    %v2101 = vpack.c.b16 %v1717, %v1709
    %v2102 = vpack.c.b16 %v1718, %v1710
    %v2103 = vpack.c.b16 %v1719, %v1711
    %v2104 = vpack.c.b16 %v1720, %v1712
    %v2105 = vpack.c.b16 %v1721, %v1713
    %v2106 = vpack.c.b16 %v1722, %v1714
    %v2107 = vpack.c.b16 %v1723, %v1715
    %v2108 = vpack.c.b16 %v1724, %v1716
    %2493 = vmatprep.subr.bf16.mxu0 %v1726
    %2494 = vmatpush1.bf16.msra.mxu0 %v1725
    %2495 = vmatprep.subr.bf16.mxu0 %v1734
    %2496 = vmatpush1.bf16.msra.mxu0 %v1733
    %2497 = vmatprep.subr.bf16.mxu0 %v1742
    %2498 = vmatpush1.bf16.msra.mxu0 %v1741
    %2499 = vmatprep.subr.bf16.mxu0 %v1750
    %2500 = vmatpush1.bf16.msra.mxu0 %v1749
    %2501 = vmatprep.subr.bf16.mxu0 %v1758
    %2502 = vmatpush1.bf16.msra.mxu0 %v1757
    %2503 = vmatprep.subr.bf16.mxu0 %v1766
    %2504 = vmatpush1.bf16.msra.mxu0 %v1765
    %2505 = vmatprep.subr.bf16.mxu0 %v1774
    %2506 = vmatpush1.bf16.msra.mxu0 %v1773
    %2507 = vmatprep.subr.bf16.mxu0 %v1782
    %2508 = vmatpush1.bf16.msra.mxu0 %v1781
    %2509 = vmatprep.subr.bf16.mxu0 %v1790
    %2510 = vmatpush1.bf16.msra.mxu0 %v1789
    %2511 = vmatprep.subr.bf16.mxu0 %v1798
    %2512 = vmatpush1.bf16.msra.mxu0 %v1797
    %2513 = vmatprep.subr.bf16.mxu0 %v1806
    %2514 = vmatpush1.bf16.msra.mxu0 %v1805
    %2515 = vmatprep.subr.bf16.mxu0 %v1814
    %2516 = vmatpush1.bf16.msra.mxu0 %v1813
    %2517 = vmatprep.subr.bf16.mxu0 %v1822
    %2518 = vmatpush1.bf16.msra.mxu0 %v1821
    %2519 = vmatprep.subr.bf16.mxu0 %v1830
    %2520 = vmatpush1.bf16.msra.mxu0 %v1829
    %2521 = vmatprep.subr.bf16.mxu0 %v1838
    %2522 = vmatpush1.bf16.msra.mxu0 %v1837
    %2523 = vmatprep.subr.bf16.mxu0 %v1846
    %2524 = vmatpush1.bf16.msra.mxu0 %v1845
    %2525 = vmatprep.mubr.bf16.mxu0 %v142
    %2526 = vmatmul.mubr.bf16.gmra.mrb[0].mxu0 %v141
    %v2527 = vpop.f32.mrb[0].mxu0
    %v2528 = vadd.f32 %v536, %v2527
    %v2529 = vpop.f32.mrb[0].mxu0
    %v2530 = vadd.f32 %v540, %v2529
    %v2531 = vpop.f32.mrb[0].mxu0
    %v2532 = vpop.f32.mrb[0].mxu0
    %2533 = vdwg.mxu0
    %2534 = vmatprep.subr.bf16.mxu0 %v1854
    %2535 = vmatpush1.bf16.msra.mxu0 %v1853
    %2536 = vmatprep.subr.bf16.mxu0 %v1862
    %2537 = vmatpush1.bf16.msra.mxu0 %v1861
    %2538 = vmatprep.subr.bf16.mxu0 %v1870
    %2539 = vmatpush1.bf16.msra.mxu0 %v1869
    %2540 = vmatprep.subr.bf16.mxu0 %v1878
    %2541 = vmatpush1.bf16.msra.mxu0 %v1877
    %2542 = vmatprep.subr.bf16.mxu0 %v1886
    %2543 = vmatpush1.bf16.msra.mxu0 %v1885
    %2544 = vmatprep.subr.bf16.mxu0 %v1894
    %2545 = vmatpush1.bf16.msra.mxu0 %v1893
    %2546 = vmatprep.subr.bf16.mxu0 %v1902
    %2547 = vmatpush1.bf16.msra.mxu0 %v1901
    %2548 = vmatprep.subr.bf16.mxu0 %v1910
    %2549 = vmatpush1.bf16.msra.mxu0 %v1909
    %2550 = vmatprep.subr.bf16.mxu0 %v1918
    %2551 = vmatpush1.bf16.msra.mxu0 %v1917
    %2552 = vmatprep.subr.bf16.mxu0 %v1926
    %2553 = vmatpush1.bf16.msra.mxu0 %v1925
    %2554 = vmatprep.subr.bf16.mxu0 %v1934
    %2555 = vmatpush1.bf16.msra.mxu0 %v1933
    %2556 = vmatprep.subr.bf16.mxu0 %v1942
    %2557 = vmatpush1.bf16.msra.mxu0 %v1941
    %2558 = vmatprep.subr.bf16.mxu0 %v1950
    %2559 = vmatpush1.bf16.msra.mxu0 %v1949
    %2560 = vmatprep.subr.bf16.mxu0 %v1958
    %2561 = vmatpush1.bf16.msra.mxu0 %v1957
    %2562 = vmatprep.subr.bf16.mxu0 %v1966
    %2563 = vmatpush1.bf16.msra.mxu0 %v1965
    %2564 = vmatprep.subr.bf16.mxu0 %v1974
    %2565 = vmatpush1.bf16.msra.mxu0 %v1973
    %2566 = vmatprep.mubr.bf16.mxu0 %v144
    %2567 = vmatmul.mubr.bf16.gmra.mrb[0].mxu0 %v143
    %v2568 = vpop.f32.mrb[0].mxu0
    %v2569 = vadd.f32 %v2528, %v2568
    %v2570 = vpop.f32.mrb[0].mxu0
    %v2571 = vadd.f32 %v2530, %v2570
    %v2572 = vpop.f32.mrb[0].mxu0
    %v2573 = vpop.f32.mrb[0].mxu0
    %2574 = vdwg.mxu0
    %2575 = vmatprep.subr.bf16.mxu0 %v1982
    %2576 = vmatpush1.bf16.msra.mxu0 %v1981
    %2577 = vmatprep.subr.bf16.mxu0 %v1990
    %2578 = vmatpush1.bf16.msra.mxu0 %v1989
    %2579 = vmatprep.subr.bf16.mxu0 %v1998
    %2580 = vmatpush1.bf16.msra.mxu0 %v1997
    %2581 = vmatprep.subr.bf16.mxu0 %v2006
    %2582 = vmatpush1.bf16.msra.mxu0 %v2005
    %2583 = vmatprep.subr.bf16.mxu0 %v2014
    %2584 = vmatpush1.bf16.msra.mxu0 %v2013
    %2585 = vmatprep.subr.bf16.mxu0 %v2022
    %2586 = vmatpush1.bf16.msra.mxu0 %v2021
    %2587 = vmatprep.subr.bf16.mxu0 %v2030
    %2588 = vmatpush1.bf16.msra.mxu0 %v2029
    %2589 = vmatprep.subr.bf16.mxu0 %v2038
    %2590 = vmatpush1.bf16.msra.mxu0 %v2037
    %2591 = vmatprep.subr.bf16.mxu0 %v2046
    %2592 = vmatpush1.bf16.msra.mxu0 %v2045
    %2593 = vmatprep.subr.bf16.mxu0 %v2054
    %2594 = vmatpush1.bf16.msra.mxu0 %v2053
    %2595 = vmatprep.subr.bf16.mxu0 %v2062
    %2596 = vmatpush1.bf16.msra.mxu0 %v2061
    %2597 = vmatprep.subr.bf16.mxu0 %v2070
    %2598 = vmatpush1.bf16.msra.mxu0 %v2069
    %2599 = vmatprep.subr.bf16.mxu0 %v2078
    %2600 = vmatpush1.bf16.msra.mxu0 %v2077
    %2601 = vmatprep.subr.bf16.mxu0 %v2086
    %2602 = vmatpush1.bf16.msra.mxu0 %v2085
    %2603 = vmatprep.subr.bf16.mxu0 %v2094
    %2604 = vmatpush1.bf16.msra.mxu0 %v2093
    %2605 = vmatprep.subr.bf16.mxu0 %v2102
    %2606 = vmatpush1.bf16.msra.mxu0 %v2101
    %2607 = vmatprep.mubr.bf16.mxu0 %v146
    %2608 = vmatmul.mubr.bf16.gmra.mrb[0].mxu0 %v145
    %v2609 = vpop.f32.mrb[0].mxu0
    %v2610 = vadd.f32 %v2569, %v2609
    %v2611 = vpop.f32.mrb[0].mxu0
    %v2612 = vadd.f32 %v2571, %v2611
    %v2613 = vpop.f32.mrb[0].mxu0
    %v2614 = vpop.f32.mrb[0].mxu0
    %2615 = vdwg.mxu0
    %2616 = vmatprep.subr.bf16.mxu0 %v1728
    %2617 = vmatpush1.bf16.msra.mxu0 %v1727
    %2618 = vmatprep.subr.bf16.mxu0 %v1736
    %2619 = vmatpush1.bf16.msra.mxu0 %v1735
    %2620 = vmatprep.subr.bf16.mxu0 %v1744
    %2621 = vmatpush1.bf16.msra.mxu0 %v1743
    %2622 = vmatprep.subr.bf16.mxu0 %v1752
    %2623 = vmatpush1.bf16.msra.mxu0 %v1751
    %2624 = vmatprep.subr.bf16.mxu0 %v1760
    %2625 = vmatpush1.bf16.msra.mxu0 %v1759
    %2626 = vmatprep.subr.bf16.mxu0 %v1768
    %2627 = vmatpush1.bf16.msra.mxu0 %v1767
    %2628 = vmatprep.subr.bf16.mxu0 %v1776
    %2629 = vmatpush1.bf16.msra.mxu0 %v1775
    %2630 = vmatprep.subr.bf16.mxu0 %v1784
    %2631 = vmatpush1.bf16.msra.mxu0 %v1783
    %2632 = vmatprep.subr.bf16.mxu0 %v1792
    %2633 = vmatpush1.bf16.msra.mxu0 %v1791
    %2634 = vmatprep.subr.bf16.mxu0 %v1800
    %2635 = vmatpush1.bf16.msra.mxu0 %v1799
    %2636 = vmatprep.subr.bf16.mxu0 %v1808
    %2637 = vmatpush1.bf16.msra.mxu0 %v1807
    %2638 = vmatprep.subr.bf16.mxu0 %v1816
    %2639 = vmatpush1.bf16.msra.mxu0 %v1815
    %2640 = vmatprep.subr.bf16.mxu0 %v1824
    %2641 = vmatpush1.bf16.msra.mxu0 %v1823
    %2642 = vmatprep.subr.bf16.mxu0 %v1832
    %2643 = vmatpush1.bf16.msra.mxu0 %v1831
    %2644 = vmatprep.subr.bf16.mxu0 %v1840
    %2645 = vmatpush1.bf16.msra.mxu0 %v1839
    %2646 = vmatprep.subr.bf16.mxu0 %v1848
    %2647 = vmatpush1.bf16.msra.mxu0 %v1847
    %2648 = vmatprep.mubr.bf16.mxu0 %v142
    %2649 = vmatmul.mubr.bf16.gmra.mrb[0].mxu0 %v141
    %v2650 = vpop.f32.mrb[0].mxu0
    %v2651 = vadd.f32 %v544, %v2650
    %v2652 = vpop.f32.mrb[0].mxu0
    %v2653 = vadd.f32 %v548, %v2652
    %v2654 = vpop.f32.mrb[0].mxu0
    %v2655 = vpop.f32.mrb[0].mxu0
    %2656 = vdwg.mxu0
    %2657 = vmatprep.subr.bf16.mxu0 %v1856
    %2658 = vmatpush1.bf16.msra.mxu0 %v1855
    %2659 = vmatprep.subr.bf16.mxu0 %v1864
    %2660 = vmatpush1.bf16.msra.mxu0 %v1863
    %2661 = vmatprep.subr.bf16.mxu0 %v1872
    %2662 = vmatpush1.bf16.msra.mxu0 %v1871
    %2663 = vmatprep.subr.bf16.mxu0 %v1880
    %2664 = vmatpush1.bf16.msra.mxu0 %v1879
    %2665 = vmatprep.subr.bf16.mxu0 %v1888
    %2666 = vmatpush1.bf16.msra.mxu0 %v1887
    %2667 = vmatprep.subr.bf16.mxu0 %v1896
    %2668 = vmatpush1.bf16.msra.mxu0 %v1895
    %2669 = vmatprep.subr.bf16.mxu0 %v1904
    %2670 = vmatpush1.bf16.msra.mxu0 %v1903
    %2671 = vmatprep.subr.bf16.mxu0 %v1912
    %2672 = vmatpush1.bf16.msra.mxu0 %v1911
    %2673 = vmatprep.subr.bf16.mxu0 %v1920
    %2674 = vmatpush1.bf16.msra.mxu0 %v1919
    %2675 = vmatprep.subr.bf16.mxu0 %v1928
    %2676 = vmatpush1.bf16.msra.mxu0 %v1927
    %2677 = vmatprep.subr.bf16.mxu0 %v1936
    %2678 = vmatpush1.bf16.msra.mxu0 %v1935
    %2679 = vmatprep.subr.bf16.mxu0 %v1944
    %2680 = vmatpush1.bf16.msra.mxu0 %v1943
    %2681 = vmatprep.subr.bf16.mxu0 %v1952
    %2682 = vmatpush1.bf16.msra.mxu0 %v1951
    %2683 = vmatprep.subr.bf16.mxu0 %v1960
    %2684 = vmatpush1.bf16.msra.mxu0 %v1959
    %2685 = vmatprep.subr.bf16.mxu0 %v1968
    %2686 = vmatpush1.bf16.msra.mxu0 %v1967
    %2687 = vmatprep.subr.bf16.mxu0 %v1976
    %2688 = vmatpush1.bf16.msra.mxu0 %v1975
    %2689 = vmatprep.mubr.bf16.mxu0 %v144
    %2690 = vmatmul.mubr.bf16.gmra.mrb[0].mxu0 %v143
    %v2691 = vpop.f32.mrb[0].mxu0
    %v2692 = vadd.f32 %v2651, %v2691
    %v2693 = vpop.f32.mrb[0].mxu0
    %v2694 = vadd.f32 %v2653, %v2693
    %v2695 = vpop.f32.mrb[0].mxu0
    %v2696 = vpop.f32.mrb[0].mxu0
    %2697 = vdwg.mxu0
    %2698 = vmatprep.subr.bf16.mxu0 %v1984
    %2699 = vmatpush1.bf16.msra.mxu0 %v1983
    %2700 = vmatprep.subr.bf16.mxu0 %v1992
    %2701 = vmatpush1.bf16.msra.mxu0 %v1991
    %2702 = vmatprep.subr.bf16.mxu0 %v2000
    %2703 = vmatpush1.bf16.msra.mxu0 %v1999
    %2704 = vmatprep.subr.bf16.mxu0 %v2008
    %2705 = vmatpush1.bf16.msra.mxu0 %v2007
    %2706 = vmatprep.subr.bf16.mxu0 %v2016
    %2707 = vmatpush1.bf16.msra.mxu0 %v2015
    %2708 = vmatprep.subr.bf16.mxu0 %v2024
    %2709 = vmatpush1.bf16.msra.mxu0 %v2023
    %2710 = vmatprep.subr.bf16.mxu0 %v2032
    %2711 = vmatpush1.bf16.msra.mxu0 %v2031
    %2712 = vmatprep.subr.bf16.mxu0 %v2040
    %2713 = vmatpush1.bf16.msra.mxu0 %v2039
    %2714 = vmatprep.subr.bf16.mxu0 %v2048
    %2715 = vmatpush1.bf16.msra.mxu0 %v2047
    %2716 = vmatprep.subr.bf16.mxu0 %v2056
    %2717 = vmatpush1.bf16.msra.mxu0 %v2055
    %2718 = vmatprep.subr.bf16.mxu0 %v2064
    %2719 = vmatpush1.bf16.msra.mxu0 %v2063
    %2720 = vmatprep.subr.bf16.mxu0 %v2072
    %2721 = vmatpush1.bf16.msra.mxu0 %v2071
    %2722 = vmatprep.subr.bf16.mxu0 %v2080
    %2723 = vmatpush1.bf16.msra.mxu0 %v2079
    %2724 = vmatprep.subr.bf16.mxu0 %v2088
    %2725 = vmatpush1.bf16.msra.mxu0 %v2087
    %2726 = vmatprep.subr.bf16.mxu0 %v2096
    %2727 = vmatpush1.bf16.msra.mxu0 %v2095
    %2728 = vmatprep.subr.bf16.mxu0 %v2104
    %2729 = vmatpush1.bf16.msra.mxu0 %v2103
    %2730 = vmatprep.mubr.bf16.mxu0 %v146
    %2731 = vmatmul.mubr.bf16.gmra.mrb[0].mxu0 %v145
    %v2732 = vpop.f32.mrb[0].mxu0
    %v2733 = vadd.f32 %v2692, %v2732
    %v2734 = vpop.f32.mrb[0].mxu0
    %v2735 = vadd.f32 %v2694, %v2734
    %v2736 = vpop.f32.mrb[0].mxu0
    %v2737 = vpop.f32.mrb[0].mxu0
    %2738 = vdwg.mxu0
    %2739 = vmatprep.subr.bf16.mxu0 %v1730
    %2740 = vmatpush1.bf16.msra.mxu0 %v1729
    %2741 = vmatprep.subr.bf16.mxu0 %v1738
    %2742 = vmatpush1.bf16.msra.mxu0 %v1737
    %2743 = vmatprep.subr.bf16.mxu0 %v1746
    %2744 = vmatpush1.bf16.msra.mxu0 %v1745
    %2745 = vmatprep.subr.bf16.mxu0 %v1754
    %2746 = vmatpush1.bf16.msra.mxu0 %v1753
    %2747 = vmatprep.subr.bf16.mxu0 %v1762
    %2748 = vmatpush1.bf16.msra.mxu0 %v1761
    %2749 = vmatprep.subr.bf16.mxu0 %v1770
    %2750 = vmatpush1.bf16.msra.mxu0 %v1769
    %2751 = vmatprep.subr.bf16.mxu0 %v1778
    %2752 = vmatpush1.bf16.msra.mxu0 %v1777
    %2753 = vmatprep.subr.bf16.mxu0 %v1786
    %2754 = vmatpush1.bf16.msra.mxu0 %v1785
    %2755 = vmatprep.subr.bf16.mxu0 %v1794
    %2756 = vmatpush1.bf16.msra.mxu0 %v1793
    %2757 = vmatprep.subr.bf16.mxu0 %v1802
    %2758 = vmatpush1.bf16.msra.mxu0 %v1801
    %2759 = vmatprep.subr.bf16.mxu0 %v1810
    %2760 = vmatpush1.bf16.msra.mxu0 %v1809
    %2761 = vmatprep.subr.bf16.mxu0 %v1818
    %2762 = vmatpush1.bf16.msra.mxu0 %v1817
    %2763 = vmatprep.subr.bf16.mxu0 %v1826
    %2764 = vmatpush1.bf16.msra.mxu0 %v1825
    %2765 = vmatprep.subr.bf16.mxu0 %v1834
    %2766 = vmatpush1.bf16.msra.mxu0 %v1833
    %2767 = vmatprep.subr.bf16.mxu0 %v1842
    %2768 = vmatpush1.bf16.msra.mxu0 %v1841
    %2769 = vmatprep.subr.bf16.mxu0 %v1850
    %2770 = vmatpush1.bf16.msra.mxu0 %v1849
    %2771 = vmatprep.mubr.bf16.mxu0 %v142
    %2772 = vmatmul.mubr.bf16.gmra.mrb[0].mxu0 %v141
    %v2773 = vpop.f32.mrb[0].mxu0
    %v2774 = vadd.f32 %v552, %v2773
    %v2775 = vpop.f32.mrb[0].mxu0
    %v2776 = vadd.f32 %v556, %v2775
    %v2777 = vpop.f32.mrb[0].mxu0
    %v2778 = vpop.f32.mrb[0].mxu0
    %2779 = vdwg.mxu0
    %2780 = vmatprep.subr.bf16.mxu0 %v1858
    %2781 = vmatpush1.bf16.msra.mxu0 %v1857
    %2782 = vmatprep.subr.bf16.mxu0 %v1866
    %2783 = vmatpush1.bf16.msra.mxu0 %v1865
    %2784 = vmatprep.subr.bf16.mxu0 %v1874
    %2785 = vmatpush1.bf16.msra.mxu0 %v1873
    %2786 = vmatprep.subr.bf16.mxu0 %v1882
    %2787 = vmatpush1.bf16.msra.mxu0 %v1881
    %2788 = vmatprep.subr.bf16.mxu0 %v1890
    %2789 = vmatpush1.bf16.msra.mxu0 %v1889
    %2790 = vmatprep.subr.bf16.mxu0 %v1898
    %2791 = vmatpush1.bf16.msra.mxu0 %v1897
    %2792 = vmatprep.subr.bf16.mxu0 %v1906
    %2793 = vmatpush1.bf16.msra.mxu0 %v1905
    %2794 = vmatprep.subr.bf16.mxu0 %v1914
    %2795 = vmatpush1.bf16.msra.mxu0 %v1913
    %2796 = vmatprep.subr.bf16.mxu0 %v1922
    %2797 = vmatpush1.bf16.msra.mxu0 %v1921
    %2798 = vmatprep.subr.bf16.mxu0 %v1930
    %2799 = vmatpush1.bf16.msra.mxu0 %v1929
    %2800 = vmatprep.subr.bf16.mxu0 %v1938
    %2801 = vmatpush1.bf16.msra.mxu0 %v1937
    %2802 = vmatprep.subr.bf16.mxu0 %v1946
    %2803 = vmatpush1.bf16.msra.mxu0 %v1945
    %2804 = vmatprep.subr.bf16.mxu0 %v1954
    %2805 = vmatpush1.bf16.msra.mxu0 %v1953
    %2806 = vmatprep.subr.bf16.mxu0 %v1962
    %2807 = vmatpush1.bf16.msra.mxu0 %v1961
    %2808 = vmatprep.subr.bf16.mxu0 %v1970
    %2809 = vmatpush1.bf16.msra.mxu0 %v1969
    %2810 = vmatprep.subr.bf16.mxu0 %v1978
    %2811 = vmatpush1.bf16.msra.mxu0 %v1977
    %2812 = vmatprep.mubr.bf16.mxu0 %v144
    %2813 = vmatmul.mubr.bf16.gmra.mrb[0].mxu0 %v143
    %v2814 = vpop.f32.mrb[0].mxu0
    %v2815 = vadd.f32 %v2774, %v2814
    %v2816 = vpop.f32.mrb[0].mxu0
    %v2817 = vadd.f32 %v2776, %v2816
    %v2818 = vpop.f32.mrb[0].mxu0
    %v2819 = vpop.f32.mrb[0].mxu0
    %2820 = vdwg.mxu0
    %2821 = vmatprep.subr.bf16.mxu0 %v1986
    %2822 = vmatpush1.bf16.msra.mxu0 %v1985
    %2823 = vmatprep.subr.bf16.mxu0 %v1994
    %2824 = vmatpush1.bf16.msra.mxu0 %v1993
    %2825 = vmatprep.subr.bf16.mxu0 %v2002
    %2826 = vmatpush1.bf16.msra.mxu0 %v2001
    %2827 = vmatprep.subr.bf16.mxu0 %v2010
    %2828 = vmatpush1.bf16.msra.mxu0 %v2009
    %2829 = vmatprep.subr.bf16.mxu0 %v2018
    %2830 = vmatpush1.bf16.msra.mxu0 %v2017
    %2831 = vmatprep.subr.bf16.mxu0 %v2026
    %2832 = vmatpush1.bf16.msra.mxu0 %v2025
    %2833 = vmatprep.subr.bf16.mxu0 %v2034
    %2834 = vmatpush1.bf16.msra.mxu0 %v2033
    %2835 = vmatprep.subr.bf16.mxu0 %v2042
    %2836 = vmatpush1.bf16.msra.mxu0 %v2041
    %2837 = vmatprep.subr.bf16.mxu0 %v2050
    %2838 = vmatpush1.bf16.msra.mxu0 %v2049
    %2839 = vmatprep.subr.bf16.mxu0 %v2058
    %2840 = vmatpush1.bf16.msra.mxu0 %v2057
    %2841 = vmatprep.subr.bf16.mxu0 %v2066
    %2842 = vmatpush1.bf16.msra.mxu0 %v2065
    %2843 = vmatprep.subr.bf16.mxu0 %v2074
    %2844 = vmatpush1.bf16.msra.mxu0 %v2073
    %2845 = vmatprep.subr.bf16.mxu0 %v2082
    %2846 = vmatpush1.bf16.msra.mxu0 %v2081
    %2847 = vmatprep.subr.bf16.mxu0 %v2090
    %2848 = vmatpush1.bf16.msra.mxu0 %v2089
    %2849 = vmatprep.subr.bf16.mxu0 %v2098
    %2850 = vmatpush1.bf16.msra.mxu0 %v2097
    %2851 = vmatprep.subr.bf16.mxu0 %v2106
    %2852 = vmatpush1.bf16.msra.mxu0 %v2105
    %2853 = vmatprep.mubr.bf16.mxu0 %v146
    %2854 = vmatmul.mubr.bf16.gmra.mrb[0].mxu0 %v145
    %v2855 = vpop.f32.mrb[0].mxu0
    %v2856 = vadd.f32 %v2815, %v2855
    %v2857 = vpop.f32.mrb[0].mxu0
    %v2858 = vadd.f32 %v2817, %v2857
    %v2859 = vpop.f32.mrb[0].mxu0
    %v2860 = vpop.f32.mrb[0].mxu0
    %2861 = vdwg.mxu0
    %2862 = vmatprep.subr.bf16.mxu0 %v1732
    %2863 = vmatpush1.bf16.msra.mxu0 %v1731
    %2864 = vmatprep.subr.bf16.mxu0 %v1740
    %2865 = vmatpush1.bf16.msra.mxu0 %v1739
    %2866 = vmatprep.subr.bf16.mxu0 %v1748
    %2867 = vmatpush1.bf16.msra.mxu0 %v1747
    %2868 = vmatprep.subr.bf16.mxu0 %v1756
    %2869 = vmatpush1.bf16.msra.mxu0 %v1755
    %2870 = vmatprep.subr.bf16.mxu0 %v1764
    %2871 = vmatpush1.bf16.msra.mxu0 %v1763
    %2872 = vmatprep.subr.bf16.mxu0 %v1772
    %2873 = vmatpush1.bf16.msra.mxu0 %v1771
    %2874 = vmatprep.subr.bf16.mxu0 %v1780
    %2875 = vmatpush1.bf16.msra.mxu0 %v1779
    %2876 = vmatprep.subr.bf16.mxu0 %v1788
    %2877 = vmatpush1.bf16.msra.mxu0 %v1787
    %2878 = vmatprep.subr.bf16.mxu0 %v1796
    %2879 = vmatpush1.bf16.msra.mxu0 %v1795
    %2880 = vmatprep.subr.bf16.mxu0 %v1804
    %2881 = vmatpush1.bf16.msra.mxu0 %v1803
    %2882 = vmatprep.subr.bf16.mxu0 %v1812
    %2883 = vmatpush1.bf16.msra.mxu0 %v1811
    %2884 = vmatprep.subr.bf16.mxu0 %v1820
    %2885 = vmatpush1.bf16.msra.mxu0 %v1819
    %2886 = vmatprep.subr.bf16.mxu0 %v1828
    %2887 = vmatpush1.bf16.msra.mxu0 %v1827
    %2888 = vmatprep.subr.bf16.mxu0 %v1836
    %2889 = vmatpush1.bf16.msra.mxu0 %v1835
    %2890 = vmatprep.subr.bf16.mxu0 %v1844
    %2891 = vmatpush1.bf16.msra.mxu0 %v1843
    %2892 = vmatprep.subr.bf16.mxu0 %v1852
    %2893 = vmatpush1.bf16.msra.mxu0 %v1851
    %2894 = vmatprep.mubr.bf16.mxu0 %v142
    %2895 = vmatmul.mubr.bf16.gmra.mrb[0].mxu0 %v141
    %v2896 = vpop.f32.mrb[0].mxu0
    %v2897 = vadd.f32 %v560, %v2896
    %v2898 = vpop.f32.mrb[0].mxu0
    %v2899 = vadd.f32 %v564, %v2898
    %v2900 = vpop.f32.mrb[0].mxu0
    %v2901 = vpop.f32.mrb[0].mxu0
    %2902 = vdwg.mxu0
    %2903 = vmatprep.subr.bf16.mxu0 %v1860
    %2904 = vmatpush1.bf16.msra.mxu0 %v1859
    %2905 = vmatprep.subr.bf16.mxu0 %v1868
    %2906 = vmatpush1.bf16.msra.mxu0 %v1867
    %2907 = vmatprep.subr.bf16.mxu0 %v1876
    %2908 = vmatpush1.bf16.msra.mxu0 %v1875
    %2909 = vmatprep.subr.bf16.mxu0 %v1884
    %2910 = vmatpush1.bf16.msra.mxu0 %v1883
    %2911 = vmatprep.subr.bf16.mxu0 %v1892
    %2912 = vmatpush1.bf16.msra.mxu0 %v1891
    %2913 = vmatprep.subr.bf16.mxu0 %v1900
    %2914 = vmatpush1.bf16.msra.mxu0 %v1899
    %2915 = vmatprep.subr.bf16.mxu0 %v1908
    %2916 = vmatpush1.bf16.msra.mxu0 %v1907
    %2917 = vmatprep.subr.bf16.mxu0 %v1916
    %2918 = vmatpush1.bf16.msra.mxu0 %v1915
    %2919 = vmatprep.subr.bf16.mxu0 %v1924
    %2920 = vmatpush1.bf16.msra.mxu0 %v1923
    %2921 = vmatprep.subr.bf16.mxu0 %v1932
    %2922 = vmatpush1.bf16.msra.mxu0 %v1931
    %2923 = vmatprep.subr.bf16.mxu0 %v1940
    %2924 = vmatpush1.bf16.msra.mxu0 %v1939
    %2925 = vmatprep.subr.bf16.mxu0 %v1948
    %2926 = vmatpush1.bf16.msra.mxu0 %v1947
    %2927 = vmatprep.subr.bf16.mxu0 %v1956
    %2928 = vmatpush1.bf16.msra.mxu0 %v1955
    %2929 = vmatprep.subr.bf16.mxu0 %v1964
    %2930 = vmatpush1.bf16.msra.mxu0 %v1963
    %2931 = vmatprep.subr.bf16.mxu0 %v1972
    %2932 = vmatpush1.bf16.msra.mxu0 %v1971
    %2933 = vmatprep.subr.bf16.mxu0 %v1980
    %2934 = vmatpush1.bf16.msra.mxu0 %v1979
    %2935 = vmatprep.mubr.bf16.mxu0 %v144
    %2936 = vmatmul.mubr.bf16.gmra.mrb[0].mxu0 %v143
    %v2937 = vpop.f32.mrb[0].mxu0
    %v2938 = vadd.f32 %v2897, %v2937
    %v2939 = vpop.f32.mrb[0].mxu0
    %v2940 = vadd.f32 %v2899, %v2939
    %v2941 = vpop.f32.mrb[0].mxu0
    %v2942 = vpop.f32.mrb[0].mxu0
    %2943 = vdwg.mxu0
    %2944 = vmatprep.subr.bf16.mxu0 %v1988
    %2945 = vmatpush1.bf16.msra.mxu0 %v1987
    %2946 = vmatprep.subr.bf16.mxu0 %v1996
    %2947 = vmatpush1.bf16.msra.mxu0 %v1995
    %2948 = vmatprep.subr.bf16.mxu0 %v2004
    %2949 = vmatpush1.bf16.msra.mxu0 %v2003
    %2950 = vmatprep.subr.bf16.mxu0 %v2012
    %2951 = vmatpush1.bf16.msra.mxu0 %v2011
    %2952 = vmatprep.subr.bf16.mxu0 %v2020
    %2953 = vmatpush1.bf16.msra.mxu0 %v2019
    %2954 = vmatprep.subr.bf16.mxu0 %v2028
    %2955 = vmatpush1.bf16.msra.mxu0 %v2027
    %2956 = vmatprep.subr.bf16.mxu0 %v2036
    %2957 = vmatpush1.bf16.msra.mxu0 %v2035
    %2958 = vmatprep.subr.bf16.mxu0 %v2044
    %2959 = vmatpush1.bf16.msra.mxu0 %v2043
    %2960 = vmatprep.subr.bf16.mxu0 %v2052
    %2961 = vmatpush1.bf16.msra.mxu0 %v2051
    %2962 = vmatprep.subr.bf16.mxu0 %v2060
    %2963 = vmatpush1.bf16.msra.mxu0 %v2059
    %2964 = vmatprep.subr.bf16.mxu0 %v2068
    %2965 = vmatpush1.bf16.msra.mxu0 %v2067
    %2966 = vmatprep.subr.bf16.mxu0 %v2076
    %2967 = vmatpush1.bf16.msra.mxu0 %v2075
    %2968 = vmatprep.subr.bf16.mxu0 %v2084
    %2969 = vmatpush1.bf16.msra.mxu0 %v2083
    %2970 = vmatprep.subr.bf16.mxu0 %v2092
    %2971 = vmatpush1.bf16.msra.mxu0 %v2091
    %2972 = vmatprep.subr.bf16.mxu0 %v2100
    %2973 = vmatpush1.bf16.msra.mxu0 %v2099
    %2974 = vmatprep.subr.bf16.mxu0 %v2108
    %2975 = vmatpush1.bf16.msra.mxu0 %v2107
    %2976 = vmatprep.mubr.bf16.mxu0 %v146
    %2977 = vmatmul.mubr.bf16.gmra.mrb[0].mxu0 %v145
    %v2978 = vpop.f32.mrb[0].mxu0
    %v2979 = vadd.f32 %v2938, %v2978
    %v2980 = vpop.f32.mrb[0].mxu0
    %v2981 = vadd.f32 %v2940, %v2980
    %v2982 = vpop.f32.mrb[0].mxu0
    %v2983 = vpop.f32.mrb[0].mxu0
    %2984 = vdwg.mxu0
    %v2985 = vmax.f32 %v2610, 0.0
    %v2986 = vmax.f32 %v2612, 0.0
    %v2987 = vmax.f32 %v2733, 0.0
    %v2988 = vmax.f32 %v2735, 0.0
    %v2989 = vmax.f32 %v2856, 0.0
    %v2990 = vmax.f32 %v2858, 0.0
    %v2991 = vmax.f32 %v2979, 0.0
    %v2992 = vmax.f32 %v2981, 0.0
    %v2993 = vpack.c.bf16 %v2985, %v2985
    %v2994 = vpack.c.bf16 %v2986, %v2986
    %v2995 = vpack.c.bf16 %v2987, %v2987
    %v2996 = vpack.c.bf16 %v2988, %v2988
    %v2997 = vpack.c.bf16 %v2989, %v2989
    %v2998 = vpack.c.bf16 %v2990, %v2990
    %v2999 = vpack.c.bf16 %v2991, %v2991
    %v3000 = vpack.c.bf16 %v2992, %v2992
    %v3001 = vld [vmem:[#allocation9] sm:$0xff]
    %v3002 = vld [vmem:[#allocation9 + $0x8] sm:$0xff]
    %v3003 = vld [vmem:[#allocation9 + $0x10] sm:$0xff]
    %v3004 = vld [vmem:[#allocation9 + $0x18] sm:$0xff]
    %v3005 = vld [vmem:[#allocation9 + $0x20] sm:$0xff]
    %v3006 = vld [vmem:[#allocation9 + $0x28] sm:$0xff]
    %v3007 = vld [vmem:[#allocation9 + $0x30] sm:$0xff]
    %v3008 = vld [vmem:[#allocation9 + $0x38] sm:$0xff]
    %v3009 = vld [vmem:[#allocation9 + $0x40] sm:$0xff]
    %v3010 = vld [vmem:[#allocation9 + $0x48] sm:$0xff]
    %v3011 = vld [vmem:[#allocation9 + $0x50] sm:$0xff]
    %v3012 = vld [vmem:[#allocation9 + $0x58] sm:$0xff]
    %v3013 = vld [vmem:[#allocation9 + $0x60] sm:$0xff]
    %v3014 = vld [vmem:[#allocation9 + $0x68] sm:$0xff]
    %v3015 = vld [vmem:[#allocation9 + $0x70] sm:$0xff]
    %v3016 = vld [vmem:[#allocation9 + $0x78] sm:$0xff]
    %v3017 = vld [vmem:[#allocation9 + $0x80] sm:$0xff]
    %v3018 = vld [vmem:[#allocation9 + $0x88] sm:$0xff]
    %v3019 = vld [vmem:[#allocation9 + $0x90] sm:$0xff]
    %v3020 = vld [vmem:[#allocation9 + $0x98] sm:$0xff]
    %v3021 = vld [vmem:[#allocation9 + $0xa0] sm:$0xff]
    %v3022 = vld [vmem:[#allocation9 + $0xa8] sm:$0xff]
    %v3023 = vld [vmem:[#allocation9 + $0xb0] sm:$0xff]
    %v3024 = vld [vmem:[#allocation9 + $0xb8] sm:$0xff]
    %v3025 = vld [vmem:[#allocation9 + $0xc0] sm:$0xff]
    %v3026 = vld [vmem:[#allocation9 + $0xc8] sm:$0xff]
    %v3027 = vld [vmem:[#allocation9 + $0xd0] sm:$0xff]
    %v3028 = vld [vmem:[#allocation9 + $0xd8] sm:$0xff]
    %v3029 = vld [vmem:[#allocation9 + $0xe0] sm:$0xff]
    %v3030 = vld [vmem:[#allocation9 + $0xe8] sm:$0xff]
    %v3031 = vld [vmem:[#allocation9 + $0xf0] sm:$0xff]
    %v3032 = vld [vmem:[#allocation9 + $0xf8] sm:$0xff]
    %v3033 = vld [vmem:[#allocation9 + $0x100] sm:$0xff]
    %v3034 = vld [vmem:[#allocation9 + $0x108] sm:$0xff]
    %v3035 = vld [vmem:[#allocation9 + $0x110] sm:$0xff]
    %v3036 = vld [vmem:[#allocation9 + $0x118] sm:$0xff]
    %v3037 = vld [vmem:[#allocation9 + $0x120] sm:$0xff]
    %v3038 = vld [vmem:[#allocation9 + $0x128] sm:$0xff]
    %v3039 = vld [vmem:[#allocation9 + $0x130] sm:$0xff]
    %v3040 = vld [vmem:[#allocation9 + $0x138] sm:$0xff]
    %v3041 = vld [vmem:[#allocation9 + $0x140] sm:$0xff]
    %v3042 = vld [vmem:[#allocation9 + $0x148] sm:$0xff]
    %v3043 = vld [vmem:[#allocation9 + $0x150] sm:$0xff]
    %v3044 = vld [vmem:[#allocation9 + $0x158] sm:$0xff]
    %v3045 = vld [vmem:[#allocation9 + $0x160] sm:$0xff]
    %v3046 = vld [vmem:[#allocation9 + $0x168] sm:$0xff]
    %v3047 = vld [vmem:[#allocation9 + $0x170] sm:$0xff]
    %v3048 = vld [vmem:[#allocation9 + $0x178] sm:$0xff]
    %v3049 = vld [vmem:[#allocation9 + $0x180] sm:$0xff]
    %v3050 = vld [vmem:[#allocation9 + $0x188] sm:$0xff]
    %v3051 = vld [vmem:[#allocation9 + $0x190] sm:$0xff]
    %v3052 = vld [vmem:[#allocation9 + $0x198] sm:$0xff]
    %v3053 = vld [vmem:[#allocation9 + $0x1a0] sm:$0xff]
    %v3054 = vld [vmem:[#allocation9 + $0x1a8] sm:$0xff]
    %v3055 = vld [vmem:[#allocation9 + $0x1b0] sm:$0xff]
    %v3056 = vld [vmem:[#allocation9 + $0x1b8] sm:$0xff]
    %v3057 = vld [vmem:[#allocation9 + $0x1c0] sm:$0xff]
    %v3058 = vld [vmem:[#allocation9 + $0x1c8] sm:$0xff]
    %v3059 = vld [vmem:[#allocation9 + $0x1d0] sm:$0xff]
    %v3060 = vld [vmem:[#allocation9 + $0x1d8] sm:$0xff]
    %v3061 = vld [vmem:[#allocation9 + $0x1e0] sm:$0xff]
    %v3062 = vld [vmem:[#allocation9 + $0x1e8] sm:$0xff]
    %v3063 = vld [vmem:[#allocation9 + $0x1f0] sm:$0xff]
    %v3064 = vld [vmem:[#allocation9 + $0x1f8] sm:$0xff]
    %v3065 = vld [vmem:[#allocation9 + $0x200] sm:$0xff]
    %v3066 = vld [vmem:[#allocation9 + $0x208] sm:$0xff]
    %v3067 = vld [vmem:[#allocation9 + $0x210] sm:$0xff]
    %v3068 = vld [vmem:[#allocation9 + $0x218] sm:$0xff]
    %v3069 = vld [vmem:[#allocation9 + $0x220] sm:$0xff]
    %v3070 = vld [vmem:[#allocation9 + $0x228] sm:$0xff]
    %v3071 = vld [vmem:[#allocation9 + $0x230] sm:$0xff]
    %v3072 = vld [vmem:[#allocation9 + $0x238] sm:$0xff]
    %v3073 = vld [vmem:[#allocation9 + $0x240] sm:$0xff]
    %v3074 = vld [vmem:[#allocation9 + $0x248] sm:$0xff]
    %v3075 = vld [vmem:[#allocation9 + $0x250] sm:$0xff]
    %v3076 = vld [vmem:[#allocation9 + $0x258] sm:$0xff]
    %v3077 = vld [vmem:[#allocation9 + $0x260] sm:$0xff]
    %v3078 = vld [vmem:[#allocation9 + $0x268] sm:$0xff]
    %v3079 = vld [vmem:[#allocation9 + $0x270] sm:$0xff]
    %v3080 = vld [vmem:[#allocation9 + $0x278] sm:$0xff]
    %v3081 = vld [vmem:[#allocation9 + $0x280] sm:$0xff]
    %v3082 = vld [vmem:[#allocation9 + $0x288] sm:$0xff]
    %v3083 = vld [vmem:[#allocation9 + $0x290] sm:$0xff]
    %v3084 = vld [vmem:[#allocation9 + $0x298] sm:$0xff]
    %v3085 = vld [vmem:[#allocation9 + $0x2a0] sm:$0xff]
    %v3086 = vld [vmem:[#allocation9 + $0x2a8] sm:$0xff]
    %v3087 = vld [vmem:[#allocation9 + $0x2b0] sm:$0xff]
    %v3088 = vld [vmem:[#allocation9 + $0x2b8] sm:$0xff]
    %v3089 = vld [vmem:[#allocation9 + $0x2c0] sm:$0xff]
    %v3090 = vld [vmem:[#allocation9 + $0x2c8] sm:$0xff]
    %v3091 = vld [vmem:[#allocation9 + $0x2d0] sm:$0xff]
    %v3092 = vld [vmem:[#allocation9 + $0x2d8] sm:$0xff]
    %v3093 = vld [vmem:[#allocation9 + $0x2e0] sm:$0xff]
    %v3094 = vld [vmem:[#allocation9 + $0x2e8] sm:$0xff]
    %v3095 = vld [vmem:[#allocation9 + $0x2f0] sm:$0xff]
    %v3096 = vld [vmem:[#allocation9 + $0x2f8] sm:$0xff]
    %v3097 = vld [vmem:[#allocation9 + $0x300] sm:$0xff]
    %v3098 = vld [vmem:[#allocation9 + $0x308] sm:$0xff]
    %v3099 = vld [vmem:[#allocation9 + $0x310] sm:$0xff]
    %v3100 = vld [vmem:[#allocation9 + $0x318] sm:$0xff]
    %v3101 = vld [vmem:[#allocation9 + $0x320] sm:$0xff]
    %v3102 = vld [vmem:[#allocation9 + $0x328] sm:$0xff]
    %v3103 = vld [vmem:[#allocation9 + $0x330] sm:$0xff]
    %v3104 = vld [vmem:[#allocation9 + $0x338] sm:$0xff]
    %v3105 = vld [vmem:[#allocation9 + $0x340] sm:$0xff]
    %v3106 = vld [vmem:[#allocation9 + $0x348] sm:$0xff]
    %v3107 = vld [vmem:[#allocation9 + $0x350] sm:$0xff]
    %v3108 = vld [vmem:[#allocation9 + $0x358] sm:$0xff]
    %v3109 = vld [vmem:[#allocation9 + $0x360] sm:$0xff]
    %v3110 = vld [vmem:[#allocation9 + $0x368] sm:$0xff]
    %v3111 = vld [vmem:[#allocation9 + $0x370] sm:$0xff]
    %v3112 = vld [vmem:[#allocation9 + $0x378] sm:$0xff]
    %v3113 = vld [vmem:[#allocation9 + $0x380] sm:$0xff]
    %v3114 = vld [vmem:[#allocation9 + $0x388] sm:$0xff]
    %v3115 = vld [vmem:[#allocation9 + $0x390] sm:$0xff]
    %v3116 = vld [vmem:[#allocation9 + $0x398] sm:$0xff]
    %v3117 = vld [vmem:[#allocation9 + $0x3a0] sm:$0xff]
    %v3118 = vld [vmem:[#allocation9 + $0x3a8] sm:$0xff]
    %v3119 = vld [vmem:[#allocation9 + $0x3b0] sm:$0xff]
    %v3120 = vld [vmem:[#allocation9 + $0x3b8] sm:$0xff]
    %v3121 = vld [vmem:[#allocation9 + $0x3c0] sm:$0xff]
    %v3122 = vld [vmem:[#allocation9 + $0x3c8] sm:$0xff]
    %v3123 = vld [vmem:[#allocation9 + $0x3d0] sm:$0xff]
    %v3124 = vld [vmem:[#allocation9 + $0x3d8] sm:$0xff]
    %v3125 = vld [vmem:[#allocation9 + $0x3e0] sm:$0xff]
    %v3126 = vld [vmem:[#allocation9 + $0x3e8] sm:$0xff]
    %v3127 = vld [vmem:[#allocation9 + $0x3f0] sm:$0xff]
    %v3128 = vld [vmem:[#allocation9 + $0x3f8] sm:$0xff]
    %v3129 = vld [vmem:[#allocation9 + $0x400] sm:$0xff]
    %v3130 = vld [vmem:[#allocation9 + $0x408] sm:$0xff]
    %v3131 = vld [vmem:[#allocation9 + $0x410] sm:$0xff]
    %v3132 = vld [vmem:[#allocation9 + $0x418] sm:$0xff]
    %v3133 = vld [vmem:[#allocation9 + $0x420] sm:$0xff]
    %v3134 = vld [vmem:[#allocation9 + $0x428] sm:$0xff]
    %v3135 = vld [vmem:[#allocation9 + $0x430] sm:$0xff]
    %v3136 = vld [vmem:[#allocation9 + $0x438] sm:$0xff]
    %v3137 = vld [vmem:[#allocation9 + $0x440] sm:$0xff]
    %v3138 = vld [vmem:[#allocation9 + $0x448] sm:$0xff]
    %v3139 = vld [vmem:[#allocation9 + $0x450] sm:$0xff]
    %v3140 = vld [vmem:[#allocation9 + $0x458] sm:$0xff]
    %v3141 = vld [vmem:[#allocation9 + $0x460] sm:$0xff]
    %v3142 = vld [vmem:[#allocation9 + $0x468] sm:$0xff]
    %v3143 = vld [vmem:[#allocation9 + $0x470] sm:$0xff]
    %v3144 = vld [vmem:[#allocation9 + $0x478] sm:$0xff]
    %v3145 = vld [vmem:[#allocation9 + $0x480] sm:$0xff]
    %v3146 = vld [vmem:[#allocation9 + $0x488] sm:$0xff]
    %v3147 = vld [vmem:[#allocation9 + $0x490] sm:$0xff]
    %v3148 = vld [vmem:[#allocation9 + $0x498] sm:$0xff]
    %v3149 = vld [vmem:[#allocation9 + $0x4a0] sm:$0xff]
    %v3150 = vld [vmem:[#allocation9 + $0x4a8] sm:$0xff]
    %v3151 = vld [vmem:[#allocation9 + $0x4b0] sm:$0xff]
    %v3152 = vld [vmem:[#allocation9 + $0x4b8] sm:$0xff]
    %v3153 = vld [vmem:[#allocation9 + $0x4c0] sm:$0xff]
    %v3154 = vld [vmem:[#allocation9 + $0x4c8] sm:$0xff]
    %v3155 = vld [vmem:[#allocation9 + $0x4d0] sm:$0xff]
    %v3156 = vld [vmem:[#allocation9 + $0x4d8] sm:$0xff]
    %v3157 = vld [vmem:[#allocation9 + $0x4e0] sm:$0xff]
    %v3158 = vld [vmem:[#allocation9 + $0x4e8] sm:$0xff]
    %v3159 = vld [vmem:[#allocation9 + $0x4f0] sm:$0xff]
    %v3160 = vld [vmem:[#allocation9 + $0x4f8] sm:$0xff]
    %v3161 = vld [vmem:[#allocation9 + $0x500] sm:$0xff]
    %v3162 = vld [vmem:[#allocation9 + $0x508] sm:$0xff]
    %v3163 = vld [vmem:[#allocation9 + $0x510] sm:$0xff]
    %v3164 = vld [vmem:[#allocation9 + $0x518] sm:$0xff]
    %v3165 = vld [vmem:[#allocation9 + $0x520] sm:$0xff]
    %v3166 = vld [vmem:[#allocation9 + $0x528] sm:$0xff]
    %v3167 = vld [vmem:[#allocation9 + $0x530] sm:$0xff]
    %v3168 = vld [vmem:[#allocation9 + $0x538] sm:$0xff]
    %v3169 = vld [vmem:[#allocation9 + $0x540] sm:$0xff]
    %v3170 = vld [vmem:[#allocation9 + $0x548] sm:$0xff]
    %v3171 = vld [vmem:[#allocation9 + $0x550] sm:$0xff]
    %v3172 = vld [vmem:[#allocation9 + $0x558] sm:$0xff]
    %v3173 = vld [vmem:[#allocation9 + $0x560] sm:$0xff]
    %v3174 = vld [vmem:[#allocation9 + $0x568] sm:$0xff]
    %v3175 = vld [vmem:[#allocation9 + $0x570] sm:$0xff]
    %v3176 = vld [vmem:[#allocation9 + $0x578] sm:$0xff]
    %v3177 = vld [vmem:[#allocation9 + $0x580] sm:$0xff]
    %v3178 = vld [vmem:[#allocation9 + $0x588] sm:$0xff]
    %v3179 = vld [vmem:[#allocation9 + $0x590] sm:$0xff]
    %v3180 = vld [vmem:[#allocation9 + $0x598] sm:$0xff]
    %v3181 = vld [vmem:[#allocation9 + $0x5a0] sm:$0xff]
    %v3182 = vld [vmem:[#allocation9 + $0x5a8] sm:$0xff]
    %v3183 = vld [vmem:[#allocation9 + $0x5b0] sm:$0xff]
    %v3184 = vld [vmem:[#allocation9 + $0x5b8] sm:$0xff]
    %v3185 = vld [vmem:[#allocation9 + $0x5c0] sm:$0xff]
    %v3186 = vld [vmem:[#allocation9 + $0x5c8] sm:$0xff]
    %v3187 = vld [vmem:[#allocation9 + $0x5d0] sm:$0xff]
    %v3188 = vld [vmem:[#allocation9 + $0x5d8] sm:$0xff]
    %v3189 = vld [vmem:[#allocation9 + $0x5e0] sm:$0xff]
    %v3190 = vld [vmem:[#allocation9 + $0x5e8] sm:$0xff]
    %v3191 = vld [vmem:[#allocation9 + $0x5f0] sm:$0xff]
    %v3192 = vld [vmem:[#allocation9 + $0x5f8] sm:$0xff]
    %v3193 = vld [vmem:[#allocation9 + $0x600] sm:$0xff]
    %v3194 = vld [vmem:[#allocation9 + $0x608] sm:$0xff]
    %v3195 = vld [vmem:[#allocation9 + $0x610] sm:$0xff]
    %v3196 = vld [vmem:[#allocation9 + $0x618] sm:$0xff]
    %v3197 = vld [vmem:[#allocation9 + $0x620] sm:$0xff]
    %v3198 = vld [vmem:[#allocation9 + $0x628] sm:$0xff]
    %v3199 = vld [vmem:[#allocation9 + $0x630] sm:$0xff]
    %v3200 = vld [vmem:[#allocation9 + $0x638] sm:$0xff]
    %v3201 = vld [vmem:[#allocation9 + $0x640] sm:$0xff]
    %v3202 = vld [vmem:[#allocation9 + $0x648] sm:$0xff]
    %v3203 = vld [vmem:[#allocation9 + $0x650] sm:$0xff]
    %v3204 = vld [vmem:[#allocation9 + $0x658] sm:$0xff]
    %v3205 = vld [vmem:[#allocation9 + $0x660] sm:$0xff]
    %v3206 = vld [vmem:[#allocation9 + $0x668] sm:$0xff]
    %v3207 = vld [vmem:[#allocation9 + $0x670] sm:$0xff]
    %v3208 = vld [vmem:[#allocation9 + $0x678] sm:$0xff]
    %v3209 = vld [vmem:[#allocation9 + $0x680] sm:$0xff]
    %v3210 = vld [vmem:[#allocation9 + $0x688] sm:$0xff]
    %v3211 = vld [vmem:[#allocation9 + $0x690] sm:$0xff]
    %v3212 = vld [vmem:[#allocation9 + $0x698] sm:$0xff]
    %v3213 = vld [vmem:[#allocation9 + $0x6a0] sm:$0xff]
    %v3214 = vld [vmem:[#allocation9 + $0x6a8] sm:$0xff]
    %v3215 = vld [vmem:[#allocation9 + $0x6b0] sm:$0xff]
    %v3216 = vld [vmem:[#allocation9 + $0x6b8] sm:$0xff]
    %v3217 = vld [vmem:[#allocation9 + $0x6c0] sm:$0xff]
    %v3218 = vld [vmem:[#allocation9 + $0x6c8] sm:$0xff]
    %v3219 = vld [vmem:[#allocation9 + $0x6d0] sm:$0xff]
    %v3220 = vld [vmem:[#allocation9 + $0x6d8] sm:$0xff]
    %v3221 = vld [vmem:[#allocation9 + $0x6e0] sm:$0xff]
    %v3222 = vld [vmem:[#allocation9 + $0x6e8] sm:$0xff]
    %v3223 = vld [vmem:[#allocation9 + $0x6f0] sm:$0xff]
    %v3224 = vld [vmem:[#allocation9 + $0x6f8] sm:$0xff]
    %v3225 = vld [vmem:[#allocation9 + $0x700] sm:$0xff]
    %v3226 = vld [vmem:[#allocation9 + $0x708] sm:$0xff]
    %v3227 = vld [vmem:[#allocation9 + $0x710] sm:$0xff]
    %v3228 = vld [vmem:[#allocation9 + $0x718] sm:$0xff]
    %v3229 = vld [vmem:[#allocation9 + $0x720] sm:$0xff]
    %v3230 = vld [vmem:[#allocation9 + $0x728] sm:$0xff]
    %v3231 = vld [vmem:[#allocation9 + $0x730] sm:$0xff]
    %v3232 = vld [vmem:[#allocation9 + $0x738] sm:$0xff]
    %v3233 = vld [vmem:[#allocation9 + $0x740] sm:$0xff]
    %v3234 = vld [vmem:[#allocation9 + $0x748] sm:$0xff]
    %v3235 = vld [vmem:[#allocation9 + $0x750] sm:$0xff]
    %v3236 = vld [vmem:[#allocation9 + $0x758] sm:$0xff]
    %v3237 = vld [vmem:[#allocation9 + $0x760] sm:$0xff]
    %v3238 = vld [vmem:[#allocation9 + $0x768] sm:$0xff]
    %v3239 = vld [vmem:[#allocation9 + $0x770] sm:$0xff]
    %v3240 = vld [vmem:[#allocation9 + $0x778] sm:$0xff]
    %v3241 = vld [vmem:[#allocation9 + $0x780] sm:$0xff]
    %v3242 = vld [vmem:[#allocation9 + $0x788] sm:$0xff]
    %v3243 = vld [vmem:[#allocation9 + $0x790] sm:$0xff]
    %v3244 = vld [vmem:[#allocation9 + $0x798] sm:$0xff]
    %v3245 = vld [vmem:[#allocation9 + $0x7a0] sm:$0xff]
    %v3246 = vld [vmem:[#allocation9 + $0x7a8] sm:$0xff]
    %v3247 = vld [vmem:[#allocation9 + $0x7b0] sm:$0xff]
    %v3248 = vld [vmem:[#allocation9 + $0x7b8] sm:$0xff]
    %v3249 = vld [vmem:[#allocation9 + $0x7c0] sm:$0xff]
    %v3250 = vld [vmem:[#allocation9 + $0x7c8] sm:$0xff]
    %v3251 = vld [vmem:[#allocation9 + $0x7d0] sm:$0xff]
    %v3252 = vld [vmem:[#allocation9 + $0x7d8] sm:$0xff]
    %v3253 = vld [vmem:[#allocation9 + $0x7e0] sm:$0xff]
    %v3254 = vld [vmem:[#allocation9 + $0x7e8] sm:$0xff]
    %v3255 = vld [vmem:[#allocation9 + $0x7f0] sm:$0xff]
    %v3256 = vld [vmem:[#allocation9 + $0x7f8] sm:$0xff]
    %v3257 = vld [vmem:[#allocation11] sm:$0xf]
    %v3259 = vlaneseq
    %v3260 = vshrl.u32 %v3259, 7
    %v3261 = vsub.s32 0, %v3260
    %v3262 = vrot.slane %v3257, %v3261
    %v3263 = vlaneseq
    %v3264 = vshrl.u32 %v3263, 7
    %v3265 = vsub.s32 1, %v3264
    %v3266 = vrot.slane %v3257, %v3265
    %v3267 = vlaneseq
    %v3268 = vshrl.u32 %v3267, 7
    %v3269 = vsub.s32 2, %v3268
    %v3270 = vrot.slane %v3257, %v3269
    %v3271 = vlaneseq
    %v3272 = vshrl.u32 %v3271, 7
    %v3273 = vsub.s32 3, %v3272
    %v3274 = vrot.slane %v3257, %v3273
    %v3535 = vunpack.c.l.b16 %v3001
    %v3536 = vunpack.c.h.b16 %v3001
    %v3537 = vunpack.c.l.b16 %v3002
    %v3538 = vunpack.c.h.b16 %v3002
    %v3539 = vunpack.c.l.b16 %v3003
    %v3540 = vunpack.c.h.b16 %v3003
    %v3541 = vunpack.c.l.b16 %v3004
    %v3542 = vunpack.c.h.b16 %v3004
    %v3543 = vunpack.c.l.b16 %v3005
    %v3544 = vunpack.c.h.b16 %v3005
    %v3545 = vunpack.c.l.b16 %v3006
    %v3546 = vunpack.c.h.b16 %v3006
    %v3547 = vunpack.c.l.b16 %v3007
    %v3548 = vunpack.c.h.b16 %v3007
    %v3549 = vunpack.c.l.b16 %v3008
    %v3550 = vunpack.c.h.b16 %v3008
    %v3551 = vunpack.c.l.b16 %v3009
    %v3552 = vunpack.c.h.b16 %v3009
    %v3553 = vunpack.c.l.b16 %v3010
    %v3554 = vunpack.c.h.b16 %v3010
    %v3555 = vunpack.c.l.b16 %v3011
    %v3556 = vunpack.c.h.b16 %v3011
    %v3557 = vunpack.c.l.b16 %v3012
    %v3558 = vunpack.c.h.b16 %v3012
    %v3559 = vunpack.c.l.b16 %v3013
    %v3560 = vunpack.c.h.b16 %v3013
    %v3561 = vunpack.c.l.b16 %v3014
    %v3562 = vunpack.c.h.b16 %v3014
    %v3563 = vunpack.c.l.b16 %v3015
    %v3564 = vunpack.c.h.b16 %v3015
    %v3565 = vunpack.c.l.b16 %v3016
    %v3566 = vunpack.c.h.b16 %v3016
    %v3567 = vunpack.c.l.b16 %v3017
    %v3568 = vunpack.c.h.b16 %v3017
    %v3569 = vunpack.c.l.b16 %v3018
    %v3570 = vunpack.c.h.b16 %v3018
    %v3571 = vunpack.c.l.b16 %v3019
    %v3572 = vunpack.c.h.b16 %v3019
    %v3573 = vunpack.c.l.b16 %v3020
    %v3574 = vunpack.c.h.b16 %v3020
    %v3575 = vunpack.c.l.b16 %v3021
    %v3576 = vunpack.c.h.b16 %v3021
    %v3577 = vunpack.c.l.b16 %v3022
    %v3578 = vunpack.c.h.b16 %v3022
    %v3579 = vunpack.c.l.b16 %v3023
    %v3580 = vunpack.c.h.b16 %v3023
    %v3581 = vunpack.c.l.b16 %v3024
    %v3582 = vunpack.c.h.b16 %v3024
    %v3583 = vunpack.c.l.b16 %v3025
    %v3584 = vunpack.c.h.b16 %v3025
    %v3585 = vunpack.c.l.b16 %v3026
    %v3586 = vunpack.c.h.b16 %v3026
    %v3587 = vunpack.c.l.b16 %v3027
    %v3588 = vunpack.c.h.b16 %v3027
    %v3589 = vunpack.c.l.b16 %v3028
    %v3590 = vunpack.c.h.b16 %v3028
    %v3591 = vunpack.c.l.b16 %v3029
    %v3592 = vunpack.c.h.b16 %v3029
    %v3593 = vunpack.c.l.b16 %v3030
    %v3594 = vunpack.c.h.b16 %v3030
    %v3595 = vunpack.c.l.b16 %v3031
    %v3596 = vunpack.c.h.b16 %v3031
    %v3597 = vunpack.c.l.b16 %v3032
    %v3598 = vunpack.c.h.b16 %v3032
    %v3599 = vunpack.c.l.b16 %v3033
    %v3600 = vunpack.c.h.b16 %v3033
    %v3601 = vunpack.c.l.b16 %v3034
    %v3602 = vunpack.c.h.b16 %v3034
    %v3603 = vunpack.c.l.b16 %v3035
    %v3604 = vunpack.c.h.b16 %v3035
    %v3605 = vunpack.c.l.b16 %v3036
    %v3606 = vunpack.c.h.b16 %v3036
    %v3607 = vunpack.c.l.b16 %v3037
    %v3608 = vunpack.c.h.b16 %v3037
    %v3609 = vunpack.c.l.b16 %v3038
    %v3610 = vunpack.c.h.b16 %v3038
    %v3611 = vunpack.c.l.b16 %v3039
    %v3612 = vunpack.c.h.b16 %v3039
    %v3613 = vunpack.c.l.b16 %v3040
    %v3614 = vunpack.c.h.b16 %v3040
    %v3615 = vunpack.c.l.b16 %v3041
    %v3616 = vunpack.c.h.b16 %v3041
    %v3617 = vunpack.c.l.b16 %v3042
    %v3618 = vunpack.c.h.b16 %v3042
    %v3619 = vunpack.c.l.b16 %v3043
    %v3620 = vunpack.c.h.b16 %v3043
    %v3621 = vunpack.c.l.b16 %v3044
    %v3622 = vunpack.c.h.b16 %v3044
    %v3623 = vunpack.c.l.b16 %v3045
    %v3624 = vunpack.c.h.b16 %v3045
    %v3625 = vunpack.c.l.b16 %v3046
    %v3626 = vunpack.c.h.b16 %v3046
    %v3627 = vunpack.c.l.b16 %v3047
    %v3628 = vunpack.c.h.b16 %v3047
    %v3629 = vunpack.c.l.b16 %v3048
    %v3630 = vunpack.c.h.b16 %v3048
    %v3631 = vunpack.c.l.b16 %v3049
    %v3632 = vunpack.c.h.b16 %v3049
    %v3633 = vunpack.c.l.b16 %v3050
    %v3634 = vunpack.c.h.b16 %v3050
    %v3635 = vunpack.c.l.b16 %v3051
    %v3636 = vunpack.c.h.b16 %v3051
    %v3637 = vunpack.c.l.b16 %v3052
    %v3638 = vunpack.c.h.b16 %v3052
    %v3639 = vunpack.c.l.b16 %v3053
    %v3640 = vunpack.c.h.b16 %v3053
    %v3641 = vunpack.c.l.b16 %v3054
    %v3642 = vunpack.c.h.b16 %v3054
    %v3643 = vunpack.c.l.b16 %v3055
    %v3644 = vunpack.c.h.b16 %v3055
    %v3645 = vunpack.c.l.b16 %v3056
    %v3646 = vunpack.c.h.b16 %v3056
    %v3647 = vunpack.c.l.b16 %v3057
    %v3648 = vunpack.c.h.b16 %v3057
    %v3649 = vunpack.c.l.b16 %v3058
    %v3650 = vunpack.c.h.b16 %v3058
    %v3651 = vunpack.c.l.b16 %v3059
    %v3652 = vunpack.c.h.b16 %v3059
    %v3653 = vunpack.c.l.b16 %v3060
    %v3654 = vunpack.c.h.b16 %v3060
    %v3655 = vunpack.c.l.b16 %v3061
    %v3656 = vunpack.c.h.b16 %v3061
    %v3657 = vunpack.c.l.b16 %v3062
    %v3658 = vunpack.c.h.b16 %v3062
    %v3659 = vunpack.c.l.b16 %v3063
    %v3660 = vunpack.c.h.b16 %v3063
    %v3661 = vunpack.c.l.b16 %v3064
    %v3662 = vunpack.c.h.b16 %v3064
    %v3663 = vunpack.c.l.b16 %v3065
    %v3664 = vunpack.c.h.b16 %v3065
    %v3665 = vunpack.c.l.b16 %v3066
    %v3666 = vunpack.c.h.b16 %v3066
    %v3667 = vunpack.c.l.b16 %v3067
    %v3668 = vunpack.c.h.b16 %v3067
    %v3669 = vunpack.c.l.b16 %v3068
    %v3670 = vunpack.c.h.b16 %v3068
    %v3671 = vunpack.c.l.b16 %v3069
    %v3672 = vunpack.c.h.b16 %v3069
    %v3673 = vunpack.c.l.b16 %v3070
    %v3674 = vunpack.c.h.b16 %v3070
    %v3675 = vunpack.c.l.b16 %v3071
    %v3676 = vunpack.c.h.b16 %v3071
    %v3677 = vunpack.c.l.b16 %v3072
    %v3678 = vunpack.c.h.b16 %v3072
    %v3679 = vunpack.c.l.b16 %v3073
    %v3680 = vunpack.c.h.b16 %v3073
    %v3681 = vunpack.c.l.b16 %v3074
    %v3682 = vunpack.c.h.b16 %v3074
    %v3683 = vunpack.c.l.b16 %v3075
    %v3684 = vunpack.c.h.b16 %v3075
    %v3685 = vunpack.c.l.b16 %v3076
    %v3686 = vunpack.c.h.b16 %v3076
    %v3687 = vunpack.c.l.b16 %v3077
    %v3688 = vunpack.c.h.b16 %v3077
    %v3689 = vunpack.c.l.b16 %v3078
    %v3690 = vunpack.c.h.b16 %v3078
    %v3691 = vunpack.c.l.b16 %v3079
    %v3692 = vunpack.c.h.b16 %v3079
    %v3693 = vunpack.c.l.b16 %v3080
    %v3694 = vunpack.c.h.b16 %v3080
    %v3695 = vunpack.c.l.b16 %v3081
    %v3696 = vunpack.c.h.b16 %v3081
    %v3697 = vunpack.c.l.b16 %v3082
    %v3698 = vunpack.c.h.b16 %v3082
    %v3699 = vunpack.c.l.b16 %v3083
    %v3700 = vunpack.c.h.b16 %v3083
    %v3701 = vunpack.c.l.b16 %v3084
    %v3702 = vunpack.c.h.b16 %v3084
    %v3703 = vunpack.c.l.b16 %v3085
    %v3704 = vunpack.c.h.b16 %v3085
    %v3705 = vunpack.c.l.b16 %v3086
    %v3706 = vunpack.c.h.b16 %v3086
    %v3707 = vunpack.c.l.b16 %v3087
    %v3708 = vunpack.c.h.b16 %v3087
    %v3709 = vunpack.c.l.b16 %v3088
    %v3710 = vunpack.c.h.b16 %v3088
    %v3711 = vunpack.c.l.b16 %v3089
    %v3712 = vunpack.c.h.b16 %v3089
    %v3713 = vunpack.c.l.b16 %v3090
    %v3714 = vunpack.c.h.b16 %v3090
    %v3715 = vunpack.c.l.b16 %v3091
    %v3716 = vunpack.c.h.b16 %v3091
    %v3717 = vunpack.c.l.b16 %v3092
    %v3718 = vunpack.c.h.b16 %v3092
    %v3719 = vunpack.c.l.b16 %v3093
    %v3720 = vunpack.c.h.b16 %v3093
    %v3721 = vunpack.c.l.b16 %v3094
    %v3722 = vunpack.c.h.b16 %v3094
    %v3723 = vunpack.c.l.b16 %v3095
    %v3724 = vunpack.c.h.b16 %v3095
    %v3725 = vunpack.c.l.b16 %v3096
    %v3726 = vunpack.c.h.b16 %v3096
    %v3727 = vunpack.c.l.b16 %v3097
    %v3728 = vunpack.c.h.b16 %v3097
    %v3729 = vunpack.c.l.b16 %v3098
    %v3730 = vunpack.c.h.b16 %v3098
    %v3731 = vunpack.c.l.b16 %v3099
    %v3732 = vunpack.c.h.b16 %v3099
    %v3733 = vunpack.c.l.b16 %v3100
    %v3734 = vunpack.c.h.b16 %v3100
    %v3735 = vunpack.c.l.b16 %v3101
    %v3736 = vunpack.c.h.b16 %v3101
    %v3737 = vunpack.c.l.b16 %v3102
    %v3738 = vunpack.c.h.b16 %v3102
    %v3739 = vunpack.c.l.b16 %v3103
    %v3740 = vunpack.c.h.b16 %v3103
    %v3741 = vunpack.c.l.b16 %v3104
    %v3742 = vunpack.c.h.b16 %v3104
    %v3743 = vunpack.c.l.b16 %v3105
    %v3744 = vunpack.c.h.b16 %v3105
    %v3745 = vunpack.c.l.b16 %v3106
    %v3746 = vunpack.c.h.b16 %v3106
    %v3747 = vunpack.c.l.b16 %v3107
    %v3748 = vunpack.c.h.b16 %v3107
    %v3749 = vunpack.c.l.b16 %v3108
    %v3750 = vunpack.c.h.b16 %v3108
    %v3751 = vunpack.c.l.b16 %v3109
    %v3752 = vunpack.c.h.b16 %v3109
    %v3753 = vunpack.c.l.b16 %v3110
    %v3754 = vunpack.c.h.b16 %v3110
    %v3755 = vunpack.c.l.b16 %v3111
    %v3756 = vunpack.c.h.b16 %v3111
    %v3757 = vunpack.c.l.b16 %v3112
    %v3758 = vunpack.c.h.b16 %v3112
    %v3759 = vunpack.c.l.b16 %v3113
    %v3760 = vunpack.c.h.b16 %v3113
    %v3761 = vunpack.c.l.b16 %v3114
    %v3762 = vunpack.c.h.b16 %v3114
    %v3763 = vunpack.c.l.b16 %v3115
    %v3764 = vunpack.c.h.b16 %v3115
    %v3765 = vunpack.c.l.b16 %v3116
    %v3766 = vunpack.c.h.b16 %v3116
    %v3767 = vunpack.c.l.b16 %v3117
    %v3768 = vunpack.c.h.b16 %v3117
    %v3769 = vunpack.c.l.b16 %v3118
    %v3770 = vunpack.c.h.b16 %v3118
    %v3771 = vunpack.c.l.b16 %v3119
    %v3772 = vunpack.c.h.b16 %v3119
    %v3773 = vunpack.c.l.b16 %v3120
    %v3774 = vunpack.c.h.b16 %v3120
    %v3775 = vunpack.c.l.b16 %v3121
    %v3776 = vunpack.c.h.b16 %v3121
    %v3777 = vunpack.c.l.b16 %v3122
    %v3778 = vunpack.c.h.b16 %v3122
    %v3779 = vunpack.c.l.b16 %v3123
    %v3780 = vunpack.c.h.b16 %v3123
    %v3781 = vunpack.c.l.b16 %v3124
    %v3782 = vunpack.c.h.b16 %v3124
    %v3783 = vunpack.c.l.b16 %v3125
    %v3784 = vunpack.c.h.b16 %v3125
    %v3785 = vunpack.c.l.b16 %v3126
    %v3786 = vunpack.c.h.b16 %v3126
    %v3787 = vunpack.c.l.b16 %v3127
    %v3788 = vunpack.c.h.b16 %v3127
    %v3789 = vunpack.c.l.b16 %v3128
    %v3790 = vunpack.c.h.b16 %v3128
    %v3791 = vunpack.c.l.b16 %v3129
    %v3792 = vunpack.c.h.b16 %v3129
    %v3793 = vunpack.c.l.b16 %v3130
    %v3794 = vunpack.c.h.b16 %v3130
    %v3795 = vunpack.c.l.b16 %v3131
    %v3796 = vunpack.c.h.b16 %v3131
    %v3797 = vunpack.c.l.b16 %v3132
    %v3798 = vunpack.c.h.b16 %v3132
    %v3799 = vunpack.c.l.b16 %v3133
    %v3800 = vunpack.c.h.b16 %v3133
    %v3801 = vunpack.c.l.b16 %v3134
    %v3802 = vunpack.c.h.b16 %v3134
    %v3803 = vunpack.c.l.b16 %v3135
    %v3804 = vunpack.c.h.b16 %v3135
    %v3805 = vunpack.c.l.b16 %v3136
    %v3806 = vunpack.c.h.b16 %v3136
    %v3807 = vunpack.c.l.b16 %v3137
    %v3808 = vunpack.c.h.b16 %v3137
    %v3809 = vunpack.c.l.b16 %v3138
    %v3810 = vunpack.c.h.b16 %v3138
    %v3811 = vunpack.c.l.b16 %v3139
    %v3812 = vunpack.c.h.b16 %v3139
    %v3813 = vunpack.c.l.b16 %v3140
    %v3814 = vunpack.c.h.b16 %v3140
    %v3815 = vunpack.c.l.b16 %v3141
    %v3816 = vunpack.c.h.b16 %v3141
    %v3817 = vunpack.c.l.b16 %v3142
    %v3818 = vunpack.c.h.b16 %v3142
    %v3819 = vunpack.c.l.b16 %v3143
    %v3820 = vunpack.c.h.b16 %v3143
    %v3821 = vunpack.c.l.b16 %v3144
    %v3822 = vunpack.c.h.b16 %v3144
    %v3823 = vunpack.c.l.b16 %v3145
    %v3824 = vunpack.c.h.b16 %v3145
    %v3825 = vunpack.c.l.b16 %v3146
    %v3826 = vunpack.c.h.b16 %v3146
    %v3827 = vunpack.c.l.b16 %v3147
    %v3828 = vunpack.c.h.b16 %v3147
    %v3829 = vunpack.c.l.b16 %v3148
    %v3830 = vunpack.c.h.b16 %v3148
    %v3831 = vunpack.c.l.b16 %v3149
    %v3832 = vunpack.c.h.b16 %v3149
    %v3833 = vunpack.c.l.b16 %v3150
    %v3834 = vunpack.c.h.b16 %v3150
    %v3835 = vunpack.c.l.b16 %v3151
    %v3836 = vunpack.c.h.b16 %v3151
    %v3837 = vunpack.c.l.b16 %v3152
    %v3838 = vunpack.c.h.b16 %v3152
    %v3839 = vunpack.c.l.b16 %v3153
    %v3840 = vunpack.c.h.b16 %v3153
    %v3841 = vunpack.c.l.b16 %v3154
    %v3842 = vunpack.c.h.b16 %v3154
    %v3843 = vunpack.c.l.b16 %v3155
    %v3844 = vunpack.c.h.b16 %v3155
    %v3845 = vunpack.c.l.b16 %v3156
    %v3846 = vunpack.c.h.b16 %v3156
    %v3847 = vunpack.c.l.b16 %v3157
    %v3848 = vunpack.c.h.b16 %v3157
    %v3849 = vunpack.c.l.b16 %v3158
    %v3850 = vunpack.c.h.b16 %v3158
    %v3851 = vunpack.c.l.b16 %v3159
    %v3852 = vunpack.c.h.b16 %v3159
    %v3853 = vunpack.c.l.b16 %v3160
    %v3854 = vunpack.c.h.b16 %v3160
    %v3855 = vunpack.c.l.b16 %v3161
    %v3856 = vunpack.c.h.b16 %v3161
    %v3857 = vunpack.c.l.b16 %v3162
    %v3858 = vunpack.c.h.b16 %v3162
    %v3859 = vunpack.c.l.b16 %v3163
    %v3860 = vunpack.c.h.b16 %v3163
    %v3861 = vunpack.c.l.b16 %v3164
    %v3862 = vunpack.c.h.b16 %v3164
    %v3863 = vunpack.c.l.b16 %v3165
    %v3864 = vunpack.c.h.b16 %v3165
    %v3865 = vunpack.c.l.b16 %v3166
    %v3866 = vunpack.c.h.b16 %v3166
    %v3867 = vunpack.c.l.b16 %v3167
    %v3868 = vunpack.c.h.b16 %v3167
    %v3869 = vunpack.c.l.b16 %v3168
    %v3870 = vunpack.c.h.b16 %v3168
    %v3871 = vunpack.c.l.b16 %v3169
    %v3872 = vunpack.c.h.b16 %v3169
    %v3873 = vunpack.c.l.b16 %v3170
    %v3874 = vunpack.c.h.b16 %v3170
    %v3875 = vunpack.c.l.b16 %v3171
    %v3876 = vunpack.c.h.b16 %v3171
    %v3877 = vunpack.c.l.b16 %v3172
    %v3878 = vunpack.c.h.b16 %v3172
    %v3879 = vunpack.c.l.b16 %v3173
    %v3880 = vunpack.c.h.b16 %v3173
    %v3881 = vunpack.c.l.b16 %v3174
    %v3882 = vunpack.c.h.b16 %v3174
    %v3883 = vunpack.c.l.b16 %v3175
    %v3884 = vunpack.c.h.b16 %v3175
    %v3885 = vunpack.c.l.b16 %v3176
    %v3886 = vunpack.c.h.b16 %v3176
    %v3887 = vunpack.c.l.b16 %v3177
    %v3888 = vunpack.c.h.b16 %v3177
    %v3889 = vunpack.c.l.b16 %v3178
    %v3890 = vunpack.c.h.b16 %v3178
    %v3891 = vunpack.c.l.b16 %v3179
    %v3892 = vunpack.c.h.b16 %v3179
    %v3893 = vunpack.c.l.b16 %v3180
    %v3894 = vunpack.c.h.b16 %v3180
    %v3895 = vunpack.c.l.b16 %v3181
    %v3896 = vunpack.c.h.b16 %v3181
    %v3897 = vunpack.c.l.b16 %v3182
    %v3898 = vunpack.c.h.b16 %v3182
    %v3899 = vunpack.c.l.b16 %v3183
    %v3900 = vunpack.c.h.b16 %v3183
    %v3901 = vunpack.c.l.b16 %v3184
    %v3902 = vunpack.c.h.b16 %v3184
    %v3903 = vunpack.c.l.b16 %v3185
    %v3904 = vunpack.c.h.b16 %v3185
    %v3905 = vunpack.c.l.b16 %v3186
    %v3906 = vunpack.c.h.b16 %v3186
    %v3907 = vunpack.c.l.b16 %v3187
    %v3908 = vunpack.c.h.b16 %v3187
    %v3909 = vunpack.c.l.b16 %v3188
    %v3910 = vunpack.c.h.b16 %v3188
    %v3911 = vunpack.c.l.b16 %v3189
    %v3912 = vunpack.c.h.b16 %v3189
    %v3913 = vunpack.c.l.b16 %v3190
    %v3914 = vunpack.c.h.b16 %v3190
    %v3915 = vunpack.c.l.b16 %v3191
    %v3916 = vunpack.c.h.b16 %v3191
    %v3917 = vunpack.c.l.b16 %v3192
    %v3918 = vunpack.c.h.b16 %v3192
    %v3919 = vunpack.c.l.b16 %v3193
    %v3920 = vunpack.c.h.b16 %v3193
    %v3921 = vunpack.c.l.b16 %v3194
    %v3922 = vunpack.c.h.b16 %v3194
    %v3923 = vunpack.c.l.b16 %v3195
    %v3924 = vunpack.c.h.b16 %v3195
    %v3925 = vunpack.c.l.b16 %v3196
    %v3926 = vunpack.c.h.b16 %v3196
    %v3927 = vunpack.c.l.b16 %v3197
    %v3928 = vunpack.c.h.b16 %v3197
    %v3929 = vunpack.c.l.b16 %v3198
    %v3930 = vunpack.c.h.b16 %v3198
    %v3931 = vunpack.c.l.b16 %v3199
    %v3932 = vunpack.c.h.b16 %v3199
    %v3933 = vunpack.c.l.b16 %v3200
    %v3934 = vunpack.c.h.b16 %v3200
    %v3935 = vunpack.c.l.b16 %v3201
    %v3936 = vunpack.c.h.b16 %v3201
    %v3937 = vunpack.c.l.b16 %v3202
    %v3938 = vunpack.c.h.b16 %v3202
    %v3939 = vunpack.c.l.b16 %v3203
    %v3940 = vunpack.c.h.b16 %v3203
    %v3941 = vunpack.c.l.b16 %v3204
    %v3942 = vunpack.c.h.b16 %v3204
    %v3943 = vunpack.c.l.b16 %v3205
    %v3944 = vunpack.c.h.b16 %v3205
    %v3945 = vunpack.c.l.b16 %v3206
    %v3946 = vunpack.c.h.b16 %v3206
    %v3947 = vunpack.c.l.b16 %v3207
    %v3948 = vunpack.c.h.b16 %v3207
    %v3949 = vunpack.c.l.b16 %v3208
    %v3950 = vunpack.c.h.b16 %v3208
    %v3951 = vunpack.c.l.b16 %v3209
    %v3952 = vunpack.c.h.b16 %v3209
    %v3953 = vunpack.c.l.b16 %v3210
    %v3954 = vunpack.c.h.b16 %v3210
    %v3955 = vunpack.c.l.b16 %v3211
    %v3956 = vunpack.c.h.b16 %v3211
    %v3957 = vunpack.c.l.b16 %v3212
    %v3958 = vunpack.c.h.b16 %v3212
    %v3959 = vunpack.c.l.b16 %v3213
    %v3960 = vunpack.c.h.b16 %v3213
    %v3961 = vunpack.c.l.b16 %v3214
    %v3962 = vunpack.c.h.b16 %v3214
    %v3963 = vunpack.c.l.b16 %v3215
    %v3964 = vunpack.c.h.b16 %v3215
    %v3965 = vunpack.c.l.b16 %v3216
    %v3966 = vunpack.c.h.b16 %v3216
    %v3967 = vunpack.c.l.b16 %v3217
    %v3968 = vunpack.c.h.b16 %v3217
    %v3969 = vunpack.c.l.b16 %v3218
    %v3970 = vunpack.c.h.b16 %v3218
    %v3971 = vunpack.c.l.b16 %v3219
    %v3972 = vunpack.c.h.b16 %v3219
    %v3973 = vunpack.c.l.b16 %v3220
    %v3974 = vunpack.c.h.b16 %v3220
    %v3975 = vunpack.c.l.b16 %v3221
    %v3976 = vunpack.c.h.b16 %v3221
    %v3977 = vunpack.c.l.b16 %v3222
    %v3978 = vunpack.c.h.b16 %v3222
    %v3979 = vunpack.c.l.b16 %v3223
    %v3980 = vunpack.c.h.b16 %v3223
    %v3981 = vunpack.c.l.b16 %v3224
    %v3982 = vunpack.c.h.b16 %v3224
    %v3983 = vunpack.c.l.b16 %v3225
    %v3984 = vunpack.c.h.b16 %v3225
    %v3985 = vunpack.c.l.b16 %v3226
    %v3986 = vunpack.c.h.b16 %v3226
    %v3987 = vunpack.c.l.b16 %v3227
    %v3988 = vunpack.c.h.b16 %v3227
    %v3989 = vunpack.c.l.b16 %v3228
    %v3990 = vunpack.c.h.b16 %v3228
    %v3991 = vunpack.c.l.b16 %v3229
    %v3992 = vunpack.c.h.b16 %v3229
    %v3993 = vunpack.c.l.b16 %v3230
    %v3994 = vunpack.c.h.b16 %v3230
    %v3995 = vunpack.c.l.b16 %v3231
    %v3996 = vunpack.c.h.b16 %v3231
    %v3997 = vunpack.c.l.b16 %v3232
    %v3998 = vunpack.c.h.b16 %v3232
    %v3999 = vunpack.c.l.b16 %v3233
    %v4000 = vunpack.c.h.b16 %v3233
    %v4001 = vunpack.c.l.b16 %v3234
    %v4002 = vunpack.c.h.b16 %v3234
    %v4003 = vunpack.c.l.b16 %v3235
    %v4004 = vunpack.c.h.b16 %v3235
    %v4005 = vunpack.c.l.b16 %v3236
    %v4006 = vunpack.c.h.b16 %v3236
    %v4007 = vunpack.c.l.b16 %v3237
    %v4008 = vunpack.c.h.b16 %v3237
    %v4009 = vunpack.c.l.b16 %v3238
    %v4010 = vunpack.c.h.b16 %v3238
    %v4011 = vunpack.c.l.b16 %v3239
    %v4012 = vunpack.c.h.b16 %v3239
    %v4013 = vunpack.c.l.b16 %v3240
    %v4014 = vunpack.c.h.b16 %v3240
    %v4015 = vunpack.c.l.b16 %v3241
    %v4016 = vunpack.c.h.b16 %v3241
    %v4017 = vunpack.c.l.b16 %v3242
    %v4018 = vunpack.c.h.b16 %v3242
    %v4019 = vunpack.c.l.b16 %v3243
    %v4020 = vunpack.c.h.b16 %v3243
    %v4021 = vunpack.c.l.b16 %v3244
    %v4022 = vunpack.c.h.b16 %v3244
    %v4023 = vunpack.c.l.b16 %v3245
    %v4024 = vunpack.c.h.b16 %v3245
    %v4025 = vunpack.c.l.b16 %v3246
    %v4026 = vunpack.c.h.b16 %v3246
    %v4027 = vunpack.c.l.b16 %v3247
    %v4028 = vunpack.c.h.b16 %v3247
    %v4029 = vunpack.c.l.b16 %v3248
    %v4030 = vunpack.c.h.b16 %v3248
    %v4031 = vunpack.c.l.b16 %v3249
    %v4032 = vunpack.c.h.b16 %v3249
    %v4033 = vunpack.c.l.b16 %v3250
    %v4034 = vunpack.c.h.b16 %v3250
    %v4035 = vunpack.c.l.b16 %v3251
    %v4036 = vunpack.c.h.b16 %v3251
    %v4037 = vunpack.c.l.b16 %v3252
    %v4038 = vunpack.c.h.b16 %v3252
    %v4039 = vunpack.c.l.b16 %v3253
    %v4040 = vunpack.c.h.b16 %v3253
    %v4041 = vunpack.c.l.b16 %v3254
    %v4042 = vunpack.c.h.b16 %v3254
    %v4043 = vunpack.c.l.b16 %v3255
    %v4044 = vunpack.c.h.b16 %v3255
    %v4045 = vunpack.c.l.b16 %v3256
    %v4046 = vunpack.c.h.b16 %v3256
    %v4047 = vpack.c.b16 %v3539, %v3535
    %v4048 = vpack.c.b16 %v3540, %v3536
    %v4049 = vpack.c.b16 %v3541, %v3537
    %v4050 = vpack.c.b16 %v3542, %v3538
    %v4051 = vpack.c.b16 %v3547, %v3543
    %v4052 = vpack.c.b16 %v3548, %v3544
    %v4053 = vpack.c.b16 %v3549, %v3545
    %v4054 = vpack.c.b16 %v3550, %v3546
    %v4055 = vpack.c.b16 %v3555, %v3551
    %v4056 = vpack.c.b16 %v3556, %v3552
    %v4057 = vpack.c.b16 %v3557, %v3553
    %v4058 = vpack.c.b16 %v3558, %v3554
    %v4059 = vpack.c.b16 %v3563, %v3559
    %v4060 = vpack.c.b16 %v3564, %v3560
    %v4061 = vpack.c.b16 %v3565, %v3561
    %v4062 = vpack.c.b16 %v3566, %v3562
    %v4063 = vpack.c.b16 %v3571, %v3567
    %v4064 = vpack.c.b16 %v3572, %v3568
    %v4065 = vpack.c.b16 %v3573, %v3569
    %v4066 = vpack.c.b16 %v3574, %v3570
    %v4067 = vpack.c.b16 %v3579, %v3575
    %v4068 = vpack.c.b16 %v3580, %v3576
    %v4069 = vpack.c.b16 %v3581, %v3577
    %v4070 = vpack.c.b16 %v3582, %v3578
    %v4071 = vpack.c.b16 %v3587, %v3583
    %v4072 = vpack.c.b16 %v3588, %v3584
    %v4073 = vpack.c.b16 %v3589, %v3585
    %v4074 = vpack.c.b16 %v3590, %v3586
    %v4075 = vpack.c.b16 %v3595, %v3591
    %v4076 = vpack.c.b16 %v3596, %v3592
    %v4077 = vpack.c.b16 %v3597, %v3593
    %v4078 = vpack.c.b16 %v3598, %v3594
    %v4079 = vpack.c.b16 %v3603, %v3599
    %v4080 = vpack.c.b16 %v3604, %v3600
    %v4081 = vpack.c.b16 %v3605, %v3601
    %v4082 = vpack.c.b16 %v3606, %v3602
    %v4083 = vpack.c.b16 %v3611, %v3607
    %v4084 = vpack.c.b16 %v3612, %v3608
    %v4085 = vpack.c.b16 %v3613, %v3609
    %v4086 = vpack.c.b16 %v3614, %v3610
    %v4087 = vpack.c.b16 %v3619, %v3615
    %v4088 = vpack.c.b16 %v3620, %v3616
    %v4089 = vpack.c.b16 %v3621, %v3617
    %v4090 = vpack.c.b16 %v3622, %v3618
    %v4091 = vpack.c.b16 %v3627, %v3623
    %v4092 = vpack.c.b16 %v3628, %v3624
    %v4093 = vpack.c.b16 %v3629, %v3625
    %v4094 = vpack.c.b16 %v3630, %v3626
    %v4095 = vpack.c.b16 %v3635, %v3631
    %v4096 = vpack.c.b16 %v3636, %v3632
    %v4097 = vpack.c.b16 %v3637, %v3633
    %v4098 = vpack.c.b16 %v3638, %v3634
    %v4099 = vpack.c.b16 %v3643, %v3639
    %v4100 = vpack.c.b16 %v3644, %v3640
    %v4101 = vpack.c.b16 %v3645, %v3641
    %v4102 = vpack.c.b16 %v3646, %v3642
    %v4103 = vpack.c.b16 %v3651, %v3647
    %v4104 = vpack.c.b16 %v3652, %v3648
    %v4105 = vpack.c.b16 %v3653, %v3649
    %v4106 = vpack.c.b16 %v3654, %v3650
    %v4107 = vpack.c.b16 %v3659, %v3655
    %v4108 = vpack.c.b16 %v3660, %v3656
    %v4109 = vpack.c.b16 %v3661, %v3657
    %v4110 = vpack.c.b16 %v3662, %v3658
    %v4111 = vpack.c.b16 %v3667, %v3663
    %v4112 = vpack.c.b16 %v3668, %v3664
    %v4113 = vpack.c.b16 %v3669, %v3665
    %v4114 = vpack.c.b16 %v3670, %v3666
    %v4115 = vpack.c.b16 %v3675, %v3671
    %v4116 = vpack.c.b16 %v3676, %v3672
    %v4117 = vpack.c.b16 %v3677, %v3673
    %v4118 = vpack.c.b16 %v3678, %v3674
    %v4119 = vpack.c.b16 %v3683, %v3679
    %v4120 = vpack.c.b16 %v3684, %v3680
    %v4121 = vpack.c.b16 %v3685, %v3681
    %v4122 = vpack.c.b16 %v3686, %v3682
    %v4123 = vpack.c.b16 %v3691, %v3687
    %v4124 = vpack.c.b16 %v3692, %v3688
    %v4125 = vpack.c.b16 %v3693, %v3689
    %v4126 = vpack.c.b16 %v3694, %v3690
    %v4127 = vpack.c.b16 %v3699, %v3695
    %v4128 = vpack.c.b16 %v3700, %v3696
    %v4129 = vpack.c.b16 %v3701, %v3697
    %v4130 = vpack.c.b16 %v3702, %v3698
    %v4131 = vpack.c.b16 %v3707, %v3703
    %v4132 = vpack.c.b16 %v3708, %v3704
    %v4133 = vpack.c.b16 %v3709, %v3705
    %v4134 = vpack.c.b16 %v3710, %v3706
    %v4135 = vpack.c.b16 %v3715, %v3711
    %v4136 = vpack.c.b16 %v3716, %v3712
    %v4137 = vpack.c.b16 %v3717, %v3713
    %v4138 = vpack.c.b16 %v3718, %v3714
    %v4139 = vpack.c.b16 %v3723, %v3719
    %v4140 = vpack.c.b16 %v3724, %v3720
    %v4141 = vpack.c.b16 %v3725, %v3721
    %v4142 = vpack.c.b16 %v3726, %v3722
    %v4143 = vpack.c.b16 %v3731, %v3727
    %v4144 = vpack.c.b16 %v3732, %v3728
    %v4145 = vpack.c.b16 %v3733, %v3729
    %v4146 = vpack.c.b16 %v3734, %v3730
    %v4147 = vpack.c.b16 %v3739, %v3735
    %v4148 = vpack.c.b16 %v3740, %v3736
    %v4149 = vpack.c.b16 %v3741, %v3737
    %v4150 = vpack.c.b16 %v3742, %v3738
    %v4151 = vpack.c.b16 %v3747, %v3743
    %v4152 = vpack.c.b16 %v3748, %v3744
    %v4153 = vpack.c.b16 %v3749, %v3745
    %v4154 = vpack.c.b16 %v3750, %v3746
    %v4155 = vpack.c.b16 %v3755, %v3751
    %v4156 = vpack.c.b16 %v3756, %v3752
    %v4157 = vpack.c.b16 %v3757, %v3753
    %v4158 = vpack.c.b16 %v3758, %v3754
    %v4159 = vpack.c.b16 %v3763, %v3759
    %v4160 = vpack.c.b16 %v3764, %v3760
    %v4161 = vpack.c.b16 %v3765, %v3761
    %v4162 = vpack.c.b16 %v3766, %v3762
    %v4163 = vpack.c.b16 %v3771, %v3767
    %v4164 = vpack.c.b16 %v3772, %v3768
    %v4165 = vpack.c.b16 %v3773, %v3769
    %v4166 = vpack.c.b16 %v3774, %v3770
    %v4167 = vpack.c.b16 %v3779, %v3775
    %v4168 = vpack.c.b16 %v3780, %v3776
    %v4169 = vpack.c.b16 %v3781, %v3777
    %v4170 = vpack.c.b16 %v3782, %v3778
    %v4171 = vpack.c.b16 %v3787, %v3783
    %v4172 = vpack.c.b16 %v3788, %v3784
    %v4173 = vpack.c.b16 %v3789, %v3785
    %v4174 = vpack.c.b16 %v3790, %v3786
    %v4175 = vpack.c.b16 %v3795, %v3791
    %v4176 = vpack.c.b16 %v3796, %v3792
    %v4177 = vpack.c.b16 %v3797, %v3793
    %v4178 = vpack.c.b16 %v3798, %v3794
    %v4179 = vpack.c.b16 %v3803, %v3799
    %v4180 = vpack.c.b16 %v3804, %v3800
    %v4181 = vpack.c.b16 %v3805, %v3801
    %v4182 = vpack.c.b16 %v3806, %v3802
    %v4183 = vpack.c.b16 %v3811, %v3807
    %v4184 = vpack.c.b16 %v3812, %v3808
    %v4185 = vpack.c.b16 %v3813, %v3809
    %v4186 = vpack.c.b16 %v3814, %v3810
    %v4187 = vpack.c.b16 %v3819, %v3815
    %v4188 = vpack.c.b16 %v3820, %v3816
    %v4189 = vpack.c.b16 %v3821, %v3817
    %v4190 = vpack.c.b16 %v3822, %v3818
    %v4191 = vpack.c.b16 %v3827, %v3823
    %v4192 = vpack.c.b16 %v3828, %v3824
    %v4193 = vpack.c.b16 %v3829, %v3825
    %v4194 = vpack.c.b16 %v3830, %v3826
    %v4195 = vpack.c.b16 %v3835, %v3831
    %v4196 = vpack.c.b16 %v3836, %v3832
    %v4197 = vpack.c.b16 %v3837, %v3833
    %v4198 = vpack.c.b16 %v3838, %v3834
    %v4199 = vpack.c.b16 %v3843, %v3839
    %v4200 = vpack.c.b16 %v3844, %v3840
    %v4201 = vpack.c.b16 %v3845, %v3841
    %v4202 = vpack.c.b16 %v3846, %v3842
    %v4203 = vpack.c.b16 %v3851, %v3847
    %v4204 = vpack.c.b16 %v3852, %v3848
    %v4205 = vpack.c.b16 %v3853, %v3849
    %v4206 = vpack.c.b16 %v3854, %v3850
    %v4207 = vpack.c.b16 %v3859, %v3855
    %v4208 = vpack.c.b16 %v3860, %v3856
    %v4209 = vpack.c.b16 %v3861, %v3857
    %v4210 = vpack.c.b16 %v3862, %v3858
    %v4211 = vpack.c.b16 %v3867, %v3863
    %v4212 = vpack.c.b16 %v3868, %v3864
    %v4213 = vpack.c.b16 %v3869, %v3865
    %v4214 = vpack.c.b16 %v3870, %v3866
    %v4215 = vpack.c.b16 %v3875, %v3871
    %v4216 = vpack.c.b16 %v3876, %v3872
    %v4217 = vpack.c.b16 %v3877, %v3873
    %v4218 = vpack.c.b16 %v3878, %v3874
    %v4219 = vpack.c.b16 %v3883, %v3879
    %v4220 = vpack.c.b16 %v3884, %v3880
    %v4221 = vpack.c.b16 %v3885, %v3881
    %v4222 = vpack.c.b16 %v3886, %v3882
    %v4223 = vpack.c.b16 %v3891, %v3887
    %v4224 = vpack.c.b16 %v3892, %v3888
    %v4225 = vpack.c.b16 %v3893, %v3889
    %v4226 = vpack.c.b16 %v3894, %v3890
    %v4227 = vpack.c.b16 %v3899, %v3895
    %v4228 = vpack.c.b16 %v3900, %v3896
    %v4229 = vpack.c.b16 %v3901, %v3897
    %v4230 = vpack.c.b16 %v3902, %v3898
    %v4231 = vpack.c.b16 %v3907, %v3903
    %v4232 = vpack.c.b16 %v3908, %v3904
    %v4233 = vpack.c.b16 %v3909, %v3905
    %v4234 = vpack.c.b16 %v3910, %v3906
    %v4235 = vpack.c.b16 %v3915, %v3911
    %v4236 = vpack.c.b16 %v3916, %v3912
    %v4237 = vpack.c.b16 %v3917, %v3913
    %v4238 = vpack.c.b16 %v3918, %v3914
    %v4239 = vpack.c.b16 %v3923, %v3919
    %v4240 = vpack.c.b16 %v3924, %v3920
    %v4241 = vpack.c.b16 %v3925, %v3921
    %v4242 = vpack.c.b16 %v3926, %v3922
    %v4243 = vpack.c.b16 %v3931, %v3927
    %v4244 = vpack.c.b16 %v3932, %v3928
    %v4245 = vpack.c.b16 %v3933, %v3929
    %v4246 = vpack.c.b16 %v3934, %v3930
    %v4247 = vpack.c.b16 %v3939, %v3935
    %v4248 = vpack.c.b16 %v3940, %v3936
    %v4249 = vpack.c.b16 %v3941, %v3937
    %v4250 = vpack.c.b16 %v3942, %v3938
    %v4251 = vpack.c.b16 %v3947, %v3943
    %v4252 = vpack.c.b16 %v3948, %v3944
    %v4253 = vpack.c.b16 %v3949, %v3945
    %v4254 = vpack.c.b16 %v3950, %v3946
    %v4255 = vpack.c.b16 %v3955, %v3951
    %v4256 = vpack.c.b16 %v3956, %v3952
    %v4257 = vpack.c.b16 %v3957, %v3953
    %v4258 = vpack.c.b16 %v3958, %v3954
    %v4259 = vpack.c.b16 %v3963, %v3959
    %v4260 = vpack.c.b16 %v3964, %v3960
    %v4261 = vpack.c.b16 %v3965, %v3961
    %v4262 = vpack.c.b16 %v3966, %v3962
    %v4263 = vpack.c.b16 %v3971, %v3967
    %v4264 = vpack.c.b16 %v3972, %v3968
    %v4265 = vpack.c.b16 %v3973, %v3969
    %v4266 = vpack.c.b16 %v3974, %v3970
    %v4267 = vpack.c.b16 %v3979, %v3975
    %v4268 = vpack.c.b16 %v3980, %v3976
    %v4269 = vpack.c.b16 %v3981, %v3977
    %v4270 = vpack.c.b16 %v3982, %v3978
    %v4271 = vpack.c.b16 %v3987, %v3983
    %v4272 = vpack.c.b16 %v3988, %v3984
    %v4273 = vpack.c.b16 %v3989, %v3985
    %v4274 = vpack.c.b16 %v3990, %v3986
    %v4275 = vpack.c.b16 %v3995, %v3991
    %v4276 = vpack.c.b16 %v3996, %v3992
    %v4277 = vpack.c.b16 %v3997, %v3993
    %v4278 = vpack.c.b16 %v3998, %v3994
    %v4279 = vpack.c.b16 %v4003, %v3999
    %v4280 = vpack.c.b16 %v4004, %v4000
    %v4281 = vpack.c.b16 %v4005, %v4001
    %v4282 = vpack.c.b16 %v4006, %v4002
    %v4283 = vpack.c.b16 %v4011, %v4007
    %v4284 = vpack.c.b16 %v4012, %v4008
    %v4285 = vpack.c.b16 %v4013, %v4009
    %v4286 = vpack.c.b16 %v4014, %v4010
    %v4287 = vpack.c.b16 %v4019, %v4015
    %v4288 = vpack.c.b16 %v4020, %v4016
    %v4289 = vpack.c.b16 %v4021, %v4017
    %v4290 = vpack.c.b16 %v4022, %v4018
    %v4291 = vpack.c.b16 %v4027, %v4023
    %v4292 = vpack.c.b16 %v4028, %v4024
    %v4293 = vpack.c.b16 %v4029, %v4025
    %v4294 = vpack.c.b16 %v4030, %v4026
    %v4295 = vpack.c.b16 %v4035, %v4031
    %v4296 = vpack.c.b16 %v4036, %v4032
    %v4297 = vpack.c.b16 %v4037, %v4033
    %v4298 = vpack.c.b16 %v4038, %v4034
    %v4299 = vpack.c.b16 %v4043, %v4039
    %v4300 = vpack.c.b16 %v4044, %v4040
    %v4301 = vpack.c.b16 %v4045, %v4041
    %v4302 = vpack.c.b16 %v4046, %v4042
    %4559 = vmatprep.subr.bf16.mxu0 %v4048
    %4560 = vmatpush1.bf16.msra.mxu0 %v4047
    %4561 = vmatprep.subr.bf16.mxu0 %v4052
    %4562 = vmatpush1.bf16.msra.mxu0 %v4051
    %4563 = vmatprep.subr.bf16.mxu0 %v4056
    %4564 = vmatpush1.bf16.msra.mxu0 %v4055
    %4565 = vmatprep.subr.bf16.mxu0 %v4060
    %4566 = vmatpush1.bf16.msra.mxu0 %v4059
    %4567 = vmatprep.subr.bf16.mxu0 %v4064
    %4568 = vmatpush1.bf16.msra.mxu0 %v4063
    %4569 = vmatprep.subr.bf16.mxu0 %v4068
    %4570 = vmatpush1.bf16.msra.mxu0 %v4067
    %4571 = vmatprep.subr.bf16.mxu0 %v4072
    %4572 = vmatpush1.bf16.msra.mxu0 %v4071
    %4573 = vmatprep.subr.bf16.mxu0 %v4076
    %4574 = vmatpush1.bf16.msra.mxu0 %v4075
    %4575 = vmatprep.subr.bf16.mxu0 %v4080
    %4576 = vmatpush1.bf16.msra.mxu0 %v4079
    %4577 = vmatprep.subr.bf16.mxu0 %v4084
    %4578 = vmatpush1.bf16.msra.mxu0 %v4083
    %4579 = vmatprep.subr.bf16.mxu0 %v4088
    %4580 = vmatpush1.bf16.msra.mxu0 %v4087
    %4581 = vmatprep.subr.bf16.mxu0 %v4092
    %4582 = vmatpush1.bf16.msra.mxu0 %v4091
    %4583 = vmatprep.subr.bf16.mxu0 %v4096
    %4584 = vmatpush1.bf16.msra.mxu0 %v4095
    %4585 = vmatprep.subr.bf16.mxu0 %v4100
    %4586 = vmatpush1.bf16.msra.mxu0 %v4099
    %4587 = vmatprep.subr.bf16.mxu0 %v4104
    %4588 = vmatpush1.bf16.msra.mxu0 %v4103
    %4589 = vmatprep.subr.bf16.mxu0 %v4108
    %4590 = vmatpush1.bf16.msra.mxu0 %v4107
    %4591 = vmatprep.mubr.bf16.mxu0 %v2994
    %4592 = vmatmul.mubr.bf16.gmra.mrb[0].mxu0 %v2993
    %v4593 = vpop.f32.mrb[0].mxu0
    %v4594 = vadd.f32 %v3262, %v4593
    %v4595 = vpop.f32.mrb[0].mxu0
    %v4596 = vadd.f32 %v3266, %v4595
    %v4597 = vpop.f32.mrb[0].mxu0
    %v4598 = vpop.f32.mrb[0].mxu0
    %4599 = vdwg.mxu0
    %4600 = vmatprep.subr.bf16.mxu0 %v4112
    %4601 = vmatpush1.bf16.msra.mxu0 %v4111
    %4602 = vmatprep.subr.bf16.mxu0 %v4116
    %4603 = vmatpush1.bf16.msra.mxu0 %v4115
    %4604 = vmatprep.subr.bf16.mxu0 %v4120
    %4605 = vmatpush1.bf16.msra.mxu0 %v4119
    %4606 = vmatprep.subr.bf16.mxu0 %v4124
    %4607 = vmatpush1.bf16.msra.mxu0 %v4123
    %4608 = vmatprep.subr.bf16.mxu0 %v4128
    %4609 = vmatpush1.bf16.msra.mxu0 %v4127
    %4610 = vmatprep.subr.bf16.mxu0 %v4132
    %4611 = vmatpush1.bf16.msra.mxu0 %v4131
    %4612 = vmatprep.subr.bf16.mxu0 %v4136
    %4613 = vmatpush1.bf16.msra.mxu0 %v4135
    %4614 = vmatprep.subr.bf16.mxu0 %v4140
    %4615 = vmatpush1.bf16.msra.mxu0 %v4139
    %4616 = vmatprep.subr.bf16.mxu0 %v4144
    %4617 = vmatpush1.bf16.msra.mxu0 %v4143
    %4618 = vmatprep.subr.bf16.mxu0 %v4148
    %4619 = vmatpush1.bf16.msra.mxu0 %v4147
    %4620 = vmatprep.subr.bf16.mxu0 %v4152
    %4621 = vmatpush1.bf16.msra.mxu0 %v4151
    %4622 = vmatprep.subr.bf16.mxu0 %v4156
    %4623 = vmatpush1.bf16.msra.mxu0 %v4155
    %4624 = vmatprep.subr.bf16.mxu0 %v4160
    %4625 = vmatpush1.bf16.msra.mxu0 %v4159
    %4626 = vmatprep.subr.bf16.mxu0 %v4164
    %4627 = vmatpush1.bf16.msra.mxu0 %v4163
    %4628 = vmatprep.subr.bf16.mxu0 %v4168
    %4629 = vmatpush1.bf16.msra.mxu0 %v4167
    %4630 = vmatprep.subr.bf16.mxu0 %v4172
    %4631 = vmatpush1.bf16.msra.mxu0 %v4171
    %4632 = vmatprep.mubr.bf16.mxu0 %v2996
    %4633 = vmatmul.mubr.bf16.gmra.mrb[0].mxu0 %v2995
    %v4634 = vpop.f32.mrb[0].mxu0
    %v4635 = vadd.f32 %v4594, %v4634
    %v4636 = vpop.f32.mrb[0].mxu0
    %v4637 = vadd.f32 %v4596, %v4636
    %v4638 = vpop.f32.mrb[0].mxu0
    %v4639 = vpop.f32.mrb[0].mxu0
    %4640 = vdwg.mxu0
    %4641 = vmatprep.subr.bf16.mxu0 %v4176
    %4642 = vmatpush1.bf16.msra.mxu0 %v4175
    %4643 = vmatprep.subr.bf16.mxu0 %v4180
    %4644 = vmatpush1.bf16.msra.mxu0 %v4179
    %4645 = vmatprep.subr.bf16.mxu0 %v4184
    %4646 = vmatpush1.bf16.msra.mxu0 %v4183
    %4647 = vmatprep.subr.bf16.mxu0 %v4188
    %4648 = vmatpush1.bf16.msra.mxu0 %v4187
    %4649 = vmatprep.subr.bf16.mxu0 %v4192
    %4650 = vmatpush1.bf16.msra.mxu0 %v4191
    %4651 = vmatprep.subr.bf16.mxu0 %v4196
    %4652 = vmatpush1.bf16.msra.mxu0 %v4195
    %4653 = vmatprep.subr.bf16.mxu0 %v4200
    %4654 = vmatpush1.bf16.msra.mxu0 %v4199
    %4655 = vmatprep.subr.bf16.mxu0 %v4204
    %4656 = vmatpush1.bf16.msra.mxu0 %v4203
    %4657 = vmatprep.subr.bf16.mxu0 %v4208
    %4658 = vmatpush1.bf16.msra.mxu0 %v4207
    %4659 = vmatprep.subr.bf16.mxu0 %v4212
    %4660 = vmatpush1.bf16.msra.mxu0 %v4211
    %4661 = vmatprep.subr.bf16.mxu0 %v4216
    %4662 = vmatpush1.bf16.msra.mxu0 %v4215
    %4663 = vmatprep.subr.bf16.mxu0 %v4220
    %4664 = vmatpush1.bf16.msra.mxu0 %v4219
    %4665 = vmatprep.subr.bf16.mxu0 %v4224
    %4666 = vmatpush1.bf16.msra.mxu0 %v4223
    %4667 = vmatprep.subr.bf16.mxu0 %v4228
    %4668 = vmatpush1.bf16.msra.mxu0 %v4227
    %4669 = vmatprep.subr.bf16.mxu0 %v4232
    %4670 = vmatpush1.bf16.msra.mxu0 %v4231
    %4671 = vmatprep.subr.bf16.mxu0 %v4236
    %4672 = vmatpush1.bf16.msra.mxu0 %v4235
    %4673 = vmatprep.mubr.bf16.mxu0 %v2998
    %4674 = vmatmul.mubr.bf16.gmra.mrb[0].mxu0 %v2997
    %v4675 = vpop.f32.mrb[0].mxu0
    %v4676 = vadd.f32 %v4635, %v4675
    %v4677 = vpop.f32.mrb[0].mxu0
    %v4678 = vadd.f32 %v4637, %v4677
    %v4679 = vpop.f32.mrb[0].mxu0
    %v4680 = vpop.f32.mrb[0].mxu0
    %4681 = vdwg.mxu0
    %4682 = vmatprep.subr.bf16.mxu0 %v4240
    %4683 = vmatpush1.bf16.msra.mxu0 %v4239
    %4684 = vmatprep.subr.bf16.mxu0 %v4244
    %4685 = vmatpush1.bf16.msra.mxu0 %v4243
    %4686 = vmatprep.subr.bf16.mxu0 %v4248
    %4687 = vmatpush1.bf16.msra.mxu0 %v4247
    %4688 = vmatprep.subr.bf16.mxu0 %v4252
    %4689 = vmatpush1.bf16.msra.mxu0 %v4251
    %4690 = vmatprep.subr.bf16.mxu0 %v4256
    %4691 = vmatpush1.bf16.msra.mxu0 %v4255
    %4692 = vmatprep.subr.bf16.mxu0 %v4260
    %4693 = vmatpush1.bf16.msra.mxu0 %v4259
    %4694 = vmatprep.subr.bf16.mxu0 %v4264
    %4695 = vmatpush1.bf16.msra.mxu0 %v4263
    %4696 = vmatprep.subr.bf16.mxu0 %v4268
    %4697 = vmatpush1.bf16.msra.mxu0 %v4267
    %4698 = vmatprep.subr.bf16.mxu0 %v4272
    %4699 = vmatpush1.bf16.msra.mxu0 %v4271
    %4700 = vmatprep.subr.bf16.mxu0 %v4276
    %4701 = vmatpush1.bf16.msra.mxu0 %v4275
    %4702 = vmatprep.subr.bf16.mxu0 %v4280
    %4703 = vmatpush1.bf16.msra.mxu0 %v4279
    %4704 = vmatprep.subr.bf16.mxu0 %v4284
    %4705 = vmatpush1.bf16.msra.mxu0 %v4283
    %4706 = vmatprep.subr.bf16.mxu0 %v4288
    %4707 = vmatpush1.bf16.msra.mxu0 %v4287
    %4708 = vmatprep.subr.bf16.mxu0 %v4292
    %4709 = vmatpush1.bf16.msra.mxu0 %v4291
    %4710 = vmatprep.subr.bf16.mxu0 %v4296
    %4711 = vmatpush1.bf16.msra.mxu0 %v4295
    %4712 = vmatprep.subr.bf16.mxu0 %v4300
    %4713 = vmatpush1.bf16.msra.mxu0 %v4299
    %4714 = vmatprep.mubr.bf16.mxu0 %v3000
    %4715 = vmatmul.mubr.bf16.gmra.mrb[0].mxu0 %v2999
    %v4716 = vpop.f32.mrb[0].mxu0
    %v4717 = vadd.f32 %v4676, %v4716
    %v4718 = vpop.f32.mrb[0].mxu0
    %v4719 = vadd.f32 %v4678, %v4718
    %v4720 = vpop.f32.mrb[0].mxu0
    %v4721 = vpop.f32.mrb[0].mxu0
    %4722 = vdwg.mxu0
    %4723 = vmatprep.subr.bf16.mxu0 %v4050
    %4724 = vmatpush1.bf16.msra.mxu0 %v4049
    %4725 = vmatprep.subr.bf16.mxu0 %v4054
    %4726 = vmatpush1.bf16.msra.mxu0 %v4053
    %4727 = vmatprep.subr.bf16.mxu0 %v4058
    %4728 = vmatpush1.bf16.msra.mxu0 %v4057
    %4729 = vmatprep.subr.bf16.mxu0 %v4062
    %4730 = vmatpush1.bf16.msra.mxu0 %v4061
    %4731 = vmatprep.subr.bf16.mxu0 %v4066
    %4732 = vmatpush1.bf16.msra.mxu0 %v4065
    %4733 = vmatprep.subr.bf16.mxu0 %v4070
    %4734 = vmatpush1.bf16.msra.mxu0 %v4069
    %4735 = vmatprep.subr.bf16.mxu0 %v4074
    %4736 = vmatpush1.bf16.msra.mxu0 %v4073
    %4737 = vmatprep.subr.bf16.mxu0 %v4078
    %4738 = vmatpush1.bf16.msra.mxu0 %v4077
    %4739 = vmatprep.subr.bf16.mxu0 %v4082
    %4740 = vmatpush1.bf16.msra.mxu0 %v4081
    %4741 = vmatprep.subr.bf16.mxu0 %v4086
    %4742 = vmatpush1.bf16.msra.mxu0 %v4085
    %4743 = vmatprep.subr.bf16.mxu0 %v4090
    %4744 = vmatpush1.bf16.msra.mxu0 %v4089
    %4745 = vmatprep.subr.bf16.mxu0 %v4094
    %4746 = vmatpush1.bf16.msra.mxu0 %v4093
    %4747 = vmatprep.subr.bf16.mxu0 %v4098
    %4748 = vmatpush1.bf16.msra.mxu0 %v4097
    %4749 = vmatprep.subr.bf16.mxu0 %v4102
    %4750 = vmatpush1.bf16.msra.mxu0 %v4101
    %4751 = vmatprep.subr.bf16.mxu0 %v4106
    %4752 = vmatpush1.bf16.msra.mxu0 %v4105
    %4753 = vmatprep.subr.bf16.mxu0 %v4110
    %4754 = vmatpush1.bf16.msra.mxu0 %v4109
    %4755 = vmatprep.mubr.bf16.mxu0 %v2994
    %4756 = vmatmul.mubr.bf16.gmra.mrb[0].mxu0 %v2993
    %v4757 = vpop.f32.mrb[0].mxu0
    %v4758 = vadd.f32 %v3270, %v4757
    %v4759 = vpop.f32.mrb[0].mxu0
    %v4760 = vadd.f32 %v3274, %v4759
    %v4761 = vpop.f32.mrb[0].mxu0
    %v4762 = vpop.f32.mrb[0].mxu0
    %4763 = vdwg.mxu0
    %4764 = vmatprep.subr.bf16.mxu0 %v4114
    %4765 = vmatpush1.bf16.msra.mxu0 %v4113
    %4766 = vmatprep.subr.bf16.mxu0 %v4118
    %4767 = vmatpush1.bf16.msra.mxu0 %v4117
    %4768 = vmatprep.subr.bf16.mxu0 %v4122
    %4769 = vmatpush1.bf16.msra.mxu0 %v4121
    %4770 = vmatprep.subr.bf16.mxu0 %v4126
    %4771 = vmatpush1.bf16.msra.mxu0 %v4125
    %4772 = vmatprep.subr.bf16.mxu0 %v4130
    %4773 = vmatpush1.bf16.msra.mxu0 %v4129
    %4774 = vmatprep.subr.bf16.mxu0 %v4134
    %4775 = vmatpush1.bf16.msra.mxu0 %v4133
    %4776 = vmatprep.subr.bf16.mxu0 %v4138
    %4777 = vmatpush1.bf16.msra.mxu0 %v4137
    %4778 = vmatprep.subr.bf16.mxu0 %v4142
    %4779 = vmatpush1.bf16.msra.mxu0 %v4141
    %4780 = vmatprep.subr.bf16.mxu0 %v4146
    %4781 = vmatpush1.bf16.msra.mxu0 %v4145
    %4782 = vmatprep.subr.bf16.mxu0 %v4150
    %4783 = vmatpush1.bf16.msra.mxu0 %v4149
    %4784 = vmatprep.subr.bf16.mxu0 %v4154
    %4785 = vmatpush1.bf16.msra.mxu0 %v4153
    %4786 = vmatprep.subr.bf16.mxu0 %v4158
    %4787 = vmatpush1.bf16.msra.mxu0 %v4157
    %4788 = vmatprep.subr.bf16.mxu0 %v4162
    %4789 = vmatpush1.bf16.msra.mxu0 %v4161
    %4790 = vmatprep.subr.bf16.mxu0 %v4166
    %4791 = vmatpush1.bf16.msra.mxu0 %v4165
    %4792 = vmatprep.subr.bf16.mxu0 %v4170
    %4793 = vmatpush1.bf16.msra.mxu0 %v4169
    %4794 = vmatprep.subr.bf16.mxu0 %v4174
    %4795 = vmatpush1.bf16.msra.mxu0 %v4173
    %4796 = vmatprep.mubr.bf16.mxu0 %v2996
    %4797 = vmatmul.mubr.bf16.gmra.mrb[0].mxu0 %v2995
    %v4798 = vpop.f32.mrb[0].mxu0
    %v4799 = vadd.f32 %v4758, %v4798
    %v4800 = vpop.f32.mrb[0].mxu0
    %v4801 = vadd.f32 %v4760, %v4800
    %v4802 = vpop.f32.mrb[0].mxu0
    %v4803 = vpop.f32.mrb[0].mxu0
    %4804 = vdwg.mxu0
    %4805 = vmatprep.subr.bf16.mxu0 %v4178
    %4806 = vmatpush1.bf16.msra.mxu0 %v4177
    %4807 = vmatprep.subr.bf16.mxu0 %v4182
    %4808 = vmatpush1.bf16.msra.mxu0 %v4181
    %4809 = vmatprep.subr.bf16.mxu0 %v4186
    %4810 = vmatpush1.bf16.msra.mxu0 %v4185
    %4811 = vmatprep.subr.bf16.mxu0 %v4190
    %4812 = vmatpush1.bf16.msra.mxu0 %v4189
    %4813 = vmatprep.subr.bf16.mxu0 %v4194
    %4814 = vmatpush1.bf16.msra.mxu0 %v4193
    %4815 = vmatprep.subr.bf16.mxu0 %v4198
    %4816 = vmatpush1.bf16.msra.mxu0 %v4197
    %4817 = vmatprep.subr.bf16.mxu0 %v4202
    %4818 = vmatpush1.bf16.msra.mxu0 %v4201
    %4819 = vmatprep.subr.bf16.mxu0 %v4206
    %4820 = vmatpush1.bf16.msra.mxu0 %v4205
    %4821 = vmatprep.subr.bf16.mxu0 %v4210
    %4822 = vmatpush1.bf16.msra.mxu0 %v4209
    %4823 = vmatprep.subr.bf16.mxu0 %v4214
    %4824 = vmatpush1.bf16.msra.mxu0 %v4213
    %4825 = vmatprep.subr.bf16.mxu0 %v4218
    %4826 = vmatpush1.bf16.msra.mxu0 %v4217
    %4827 = vmatprep.subr.bf16.mxu0 %v4222
    %4828 = vmatpush1.bf16.msra.mxu0 %v4221
    %4829 = vmatprep.subr.bf16.mxu0 %v4226
    %4830 = vmatpush1.bf16.msra.mxu0 %v4225
    %4831 = vmatprep.subr.bf16.mxu0 %v4230
    %4832 = vmatpush1.bf16.msra.mxu0 %v4229
    %4833 = vmatprep.subr.bf16.mxu0 %v4234
    %4834 = vmatpush1.bf16.msra.mxu0 %v4233
    %4835 = vmatprep.subr.bf16.mxu0 %v4238
    %4836 = vmatpush1.bf16.msra.mxu0 %v4237
    %4837 = vmatprep.mubr.bf16.mxu0 %v2998
    %4838 = vmatmul.mubr.bf16.gmra.mrb[0].mxu0 %v2997
    %v4839 = vpop.f32.mrb[0].mxu0
    %v4840 = vadd.f32 %v4799, %v4839
    %v4841 = vpop.f32.mrb[0].mxu0
    %v4842 = vadd.f32 %v4801, %v4841
    %v4843 = vpop.f32.mrb[0].mxu0
    %v4844 = vpop.f32.mrb[0].mxu0
    %4845 = vdwg.mxu0
    %4846 = vmatprep.subr.bf16.mxu0 %v4242
    %4847 = vmatpush1.bf16.msra.mxu0 %v4241
    %4848 = vmatprep.subr.bf16.mxu0 %v4246
    %4849 = vmatpush1.bf16.msra.mxu0 %v4245
    %4850 = vmatprep.subr.bf16.mxu0 %v4250
    %4851 = vmatpush1.bf16.msra.mxu0 %v4249
    %4852 = vmatprep.subr.bf16.mxu0 %v4254
    %4853 = vmatpush1.bf16.msra.mxu0 %v4253
    %4854 = vmatprep.subr.bf16.mxu0 %v4258
    %4855 = vmatpush1.bf16.msra.mxu0 %v4257
    %4856 = vmatprep.subr.bf16.mxu0 %v4262
    %4857 = vmatpush1.bf16.msra.mxu0 %v4261
    %4858 = vmatprep.subr.bf16.mxu0 %v4266
    %4859 = vmatpush1.bf16.msra.mxu0 %v4265
    %4860 = vmatprep.subr.bf16.mxu0 %v4270
    %4861 = vmatpush1.bf16.msra.mxu0 %v4269
    %4862 = vmatprep.subr.bf16.mxu0 %v4274
    %4863 = vmatpush1.bf16.msra.mxu0 %v4273
    %4864 = vmatprep.subr.bf16.mxu0 %v4278
    %4865 = vmatpush1.bf16.msra.mxu0 %v4277
    %4866 = vmatprep.subr.bf16.mxu0 %v4282
    %4867 = vmatpush1.bf16.msra.mxu0 %v4281
    %4868 = vmatprep.subr.bf16.mxu0 %v4286
    %4869 = vmatpush1.bf16.msra.mxu0 %v4285
    %4870 = vmatprep.subr.bf16.mxu0 %v4290
    %4871 = vmatpush1.bf16.msra.mxu0 %v4289
    %4872 = vmatprep.subr.bf16.mxu0 %v4294
    %4873 = vmatpush1.bf16.msra.mxu0 %v4293
    %4874 = vmatprep.subr.bf16.mxu0 %v4298
    %4875 = vmatpush1.bf16.msra.mxu0 %v4297
    %4876 = vmatprep.subr.bf16.mxu0 %v4302
    %4877 = vmatpush1.bf16.msra.mxu0 %v4301
    %4878 = vmatprep.mubr.bf16.mxu0 %v3000
    %4879 = vmatmul.mubr.bf16.gmra.mrb[0].mxu0 %v2999
    %v4880 = vpop.f32.mrb[0].mxu0
    %v4881 = vadd.f32 %v4840, %v4880
    %v4882 = vpop.f32.mrb[0].mxu0
    %v4883 = vadd.f32 %v4842, %v4882
    %v4884 = vpop.f32.mrb[0].mxu0
    %v4885 = vpop.f32.mrb[0].mxu0
    %4886 = vdwg.mxu0
    %v4887 = vmax.f32 %v4717, 0.0
    %v4888 = vmax.f32 %v4719, 0.0
    %v4889 = vmax.f32 %v4881, 0.0
    %v4890 = vmax.f32 %v4883, 0.0
    %v4891 = vpack.c.bf16 %v4887, %v4887
    %v4892 = vpack.c.bf16 %v4888, %v4888
    %v4893 = vpack.c.bf16 %v4889, %v4889
    %v4894 = vpack.c.bf16 %v4890, %v4890
    %v4895 = vld [vmem:[#allocation12] sm:$0xf]
    %v4896 = vld [vmem:[#allocation12 + $0x4] sm:$0xf]
    %v4897 = vld [vmem:[#allocation12 + $0x8] sm:$0xf]
    %v4898 = vld [vmem:[#allocation12 + $0xc] sm:$0xf]
    %v4899 = vld [vmem:[#allocation12 + $0x10] sm:$0xf]
    %v4900 = vld [vmem:[#allocation12 + $0x14] sm:$0xf]
    %v4901 = vld [vmem:[#allocation12 + $0x18] sm:$0xf]
    %v4902 = vld [vmem:[#allocation12 + $0x1c] sm:$0xf]
    %v4903 = vld [vmem:[#allocation12 + $0x20] sm:$0xf]
    %v4904 = vld [vmem:[#allocation12 + $0x24] sm:$0xf]
    %v4905 = vld [vmem:[#allocation12 + $0x28] sm:$0xf]
    %v4906 = vld [vmem:[#allocation12 + $0x2c] sm:$0xf]
    %v4907 = vld [vmem:[#allocation12 + $0x30] sm:$0xf]
    %v4908 = vld [vmem:[#allocation12 + $0x34] sm:$0xf]
    %v4909 = vld [vmem:[#allocation12 + $0x38] sm:$0xf]
    %v4910 = vld [vmem:[#allocation12 + $0x3c] sm:$0xf]
    %v4911 = vld [vmem:[#allocation12 + $0x40] sm:$0xf]
    %v4912 = vld [vmem:[#allocation12 + $0x44] sm:$0xf]
    %v4913 = vld [vmem:[#allocation12 + $0x48] sm:$0xf]
    %v4914 = vld [vmem:[#allocation12 + $0x4c] sm:$0xf]
    %v4915 = vld [vmem:[#allocation12 + $0x50] sm:$0xf]
    %v4916 = vld [vmem:[#allocation12 + $0x54] sm:$0xf]
    %v4917 = vld [vmem:[#allocation12 + $0x58] sm:$0xf]
    %v4918 = vld [vmem:[#allocation12 + $0x5c] sm:$0xf]
    %v4919 = vld [vmem:[#allocation12 + $0x60] sm:$0xf]
    %v4920 = vld [vmem:[#allocation12 + $0x64] sm:$0xf]
    %v4921 = vld [vmem:[#allocation12 + $0x68] sm:$0xf]
    %v4922 = vld [vmem:[#allocation12 + $0x6c] sm:$0xf]
    %v4923 = vld [vmem:[#allocation12 + $0x70] sm:$0xf]
    %v4924 = vld [vmem:[#allocation12 + $0x74] sm:$0xf]
    %v4925 = vld [vmem:[#allocation12 + $0x78] sm:$0xf]
    %v4926 = vld [vmem:[#allocation12 + $0x7c] sm:$0xf]
    %v4927 = vld [vmem:[#allocation12 + $0x80] sm:$0xf]
    %v4928 = vld [vmem:[#allocation12 + $0x84] sm:$0xf]
    %v4929 = vld [vmem:[#allocation12 + $0x88] sm:$0xf]
    %v4930 = vld [vmem:[#allocation12 + $0x8c] sm:$0xf]
    %v4931 = vld [vmem:[#allocation12 + $0x90] sm:$0xf]
    %v4932 = vld [vmem:[#allocation12 + $0x94] sm:$0xf]
    %v4933 = vld [vmem:[#allocation12 + $0x98] sm:$0xf]
    %v4934 = vld [vmem:[#allocation12 + $0x9c] sm:$0xf]
    %v4935 = vld [vmem:[#allocation12 + $0xa0] sm:$0xf]
    %v4936 = vld [vmem:[#allocation12 + $0xa4] sm:$0xf]
    %v4937 = vld [vmem:[#allocation12 + $0xa8] sm:$0xf]
    %v4938 = vld [vmem:[#allocation12 + $0xac] sm:$0xf]
    %v4939 = vld [vmem:[#allocation12 + $0xb0] sm:$0xf]
    %v4940 = vld [vmem:[#allocation12 + $0xb4] sm:$0xf]
    %v4941 = vld [vmem:[#allocation12 + $0xb8] sm:$0xf]
    %v4942 = vld [vmem:[#allocation12 + $0xbc] sm:$0xf]
    %v4943 = vld [vmem:[#allocation12 + $0xc0] sm:$0xf]
    %v4944 = vld [vmem:[#allocation12 + $0xc4] sm:$0xf]
    %v4945 = vld [vmem:[#allocation12 + $0xc8] sm:$0xf]
    %v4946 = vld [vmem:[#allocation12 + $0xcc] sm:$0xf]
    %v4947 = vld [vmem:[#allocation12 + $0xd0] sm:$0xf]
    %v4948 = vld [vmem:[#allocation12 + $0xd4] sm:$0xf]
    %v4949 = vld [vmem:[#allocation12 + $0xd8] sm:$0xf]
    %v4950 = vld [vmem:[#allocation12 + $0xdc] sm:$0xf]
    %v4951 = vld [vmem:[#allocation12 + $0xe0] sm:$0xf]
    %v4952 = vld [vmem:[#allocation12 + $0xe4] sm:$0xf]
    %v4953 = vld [vmem:[#allocation12 + $0xe8] sm:$0xf]
    %v4954 = vld [vmem:[#allocation12 + $0xec] sm:$0xf]
    %v4955 = vld [vmem:[#allocation12 + $0xf0] sm:$0xf]
    %v4956 = vld [vmem:[#allocation12 + $0xf4] sm:$0xf]
    %v4957 = vld [vmem:[#allocation12 + $0xf8] sm:$0xf]
    %v4958 = vld [vmem:[#allocation12 + $0xfc] sm:$0xf]
    %v4959 = vld [vmem:[#allocation14] sm:$0x1]
    %v4961 = vlaneseq
    %v4962 = vshrl.u32 %v4961, 7
    %v4963 = vsub.s32 0, %v4962
    %v4964 = vrot.slane %v4959, %v4963
    %v5030 = vunpack.c.l.b16 %v4895
    %v5031 = vunpack.c.l.b16 %v4896
    %v5032 = vunpack.c.l.b16 %v4897
    %v5033 = vunpack.c.l.b16 %v4898
    %v5034 = vunpack.c.l.b16 %v4899
    %v5035 = vunpack.c.l.b16 %v4900
    %v5036 = vunpack.c.l.b16 %v4901
    %v5037 = vunpack.c.l.b16 %v4902
    %v5038 = vunpack.c.l.b16 %v4903
    %v5039 = vunpack.c.l.b16 %v4904
    %v5040 = vunpack.c.l.b16 %v4905
    %v5041 = vunpack.c.l.b16 %v4906
    %v5042 = vunpack.c.l.b16 %v4907
    %v5043 = vunpack.c.l.b16 %v4908
    %v5044 = vunpack.c.l.b16 %v4909
    %v5045 = vunpack.c.l.b16 %v4910
    %v5046 = vunpack.c.l.b16 %v4911
    %v5047 = vunpack.c.l.b16 %v4912
    %v5048 = vunpack.c.l.b16 %v4913
    %v5049 = vunpack.c.l.b16 %v4914
    %v5050 = vunpack.c.l.b16 %v4915
    %v5051 = vunpack.c.l.b16 %v4916
    %v5052 = vunpack.c.l.b16 %v4917
    %v5053 = vunpack.c.l.b16 %v4918
    %v5054 = vunpack.c.l.b16 %v4919
    %v5055 = vunpack.c.l.b16 %v4920
    %v5056 = vunpack.c.l.b16 %v4921
    %v5057 = vunpack.c.l.b16 %v4922
    %v5058 = vunpack.c.l.b16 %v4923
    %v5059 = vunpack.c.l.b16 %v4924
    %v5060 = vunpack.c.l.b16 %v4925
    %v5061 = vunpack.c.l.b16 %v4926
    %v5062 = vunpack.c.l.b16 %v4927
    %v5063 = vunpack.c.l.b16 %v4928
    %v5064 = vunpack.c.l.b16 %v4929
    %v5065 = vunpack.c.l.b16 %v4930
    %v5066 = vunpack.c.l.b16 %v4931
    %v5067 = vunpack.c.l.b16 %v4932
    %v5068 = vunpack.c.l.b16 %v4933
    %v5069 = vunpack.c.l.b16 %v4934
    %v5070 = vunpack.c.l.b16 %v4935
    %v5071 = vunpack.c.l.b16 %v4936
    %v5072 = vunpack.c.l.b16 %v4937
    %v5073 = vunpack.c.l.b16 %v4938
    %v5074 = vunpack.c.l.b16 %v4939
    %v5075 = vunpack.c.l.b16 %v4940
    %v5076 = vunpack.c.l.b16 %v4941
    %v5077 = vunpack.c.l.b16 %v4942
    %v5078 = vunpack.c.l.b16 %v4943
    %v5079 = vunpack.c.l.b16 %v4944
    %v5080 = vunpack.c.l.b16 %v4945
    %v5081 = vunpack.c.l.b16 %v4946
    %v5082 = vunpack.c.l.b16 %v4947
    %v5083 = vunpack.c.l.b16 %v4948
    %v5084 = vunpack.c.l.b16 %v4949
    %v5085 = vunpack.c.l.b16 %v4950
    %v5086 = vunpack.c.l.b16 %v4951
    %v5087 = vunpack.c.l.b16 %v4952
    %v5088 = vunpack.c.l.b16 %v4953
    %v5089 = vunpack.c.l.b16 %v4954
    %v5090 = vunpack.c.l.b16 %v4955
    %v5091 = vunpack.c.l.b16 %v4956
    %v5092 = vunpack.c.l.b16 %v4957
    %v5093 = vunpack.c.l.b16 %v4958
    %v5094 = vpack.c.b16 %v5031, %v5030
    %v5095 = vpack.c.b16 %v5033, %v5032
    %v5096 = vpack.c.b16 %v5035, %v5034
    %v5097 = vpack.c.b16 %v5037, %v5036
    %v5098 = vpack.c.b16 %v5039, %v5038
    %v5099 = vpack.c.b16 %v5041, %v5040
    %v5100 = vpack.c.b16 %v5043, %v5042
    %v5101 = vpack.c.b16 %v5045, %v5044
    %v5102 = vpack.c.b16 %v5047, %v5046
    %v5103 = vpack.c.b16 %v5049, %v5048
    %v5104 = vpack.c.b16 %v5051, %v5050
    %v5105 = vpack.c.b16 %v5053, %v5052
    %v5106 = vpack.c.b16 %v5055, %v5054
    %v5107 = vpack.c.b16 %v5057, %v5056
    %v5108 = vpack.c.b16 %v5059, %v5058
    %v5109 = vpack.c.b16 %v5061, %v5060
    %v5110 = vpack.c.b16 %v5063, %v5062
    %v5111 = vpack.c.b16 %v5065, %v5064
    %v5112 = vpack.c.b16 %v5067, %v5066
    %v5113 = vpack.c.b16 %v5069, %v5068
    %v5114 = vpack.c.b16 %v5071, %v5070
    %v5115 = vpack.c.b16 %v5073, %v5072
    %v5116 = vpack.c.b16 %v5075, %v5074
    %v5117 = vpack.c.b16 %v5077, %v5076
    %v5118 = vpack.c.b16 %v5079, %v5078
    %v5119 = vpack.c.b16 %v5081, %v5080
    %v5120 = vpack.c.b16 %v5083, %v5082
    %v5121 = vpack.c.b16 %v5085, %v5084
    %v5122 = vpack.c.b16 %v5087, %v5086
    %v5123 = vpack.c.b16 %v5089, %v5088
    %v5124 = vpack.c.b16 %v5091, %v5090
    %v5125 = vpack.c.b16 %v5093, %v5092
    %5158 = vmatprep.subr.bf16.mxu0 0
    %5159 = vmatpush1.bf16.msra.mxu0 %v5094
    %5160 = vmatprep.subr.bf16.mxu0 0
    %5161 = vmatpush1.bf16.msra.mxu0 %v5095
    %5162 = vmatprep.subr.bf16.mxu0 0
    %5163 = vmatpush1.bf16.msra.mxu0 %v5096
    %5164 = vmatprep.subr.bf16.mxu0 0
    %5165 = vmatpush1.bf16.msra.mxu0 %v5097
    %5166 = vmatprep.subr.bf16.mxu0 0
    %5167 = vmatpush1.bf16.msra.mxu0 %v5098
    %5168 = vmatprep.subr.bf16.mxu0 0
    %5169 = vmatpush1.bf16.msra.mxu0 %v5099
    %5170 = vmatprep.subr.bf16.mxu0 0
    %5171 = vmatpush1.bf16.msra.mxu0 %v5100
    %5172 = vmatprep.subr.bf16.mxu0 0
    %5173 = vmatpush1.bf16.msra.mxu0 %v5101
    %5174 = vmatprep.subr.bf16.mxu0 0
    %5175 = vmatpush1.bf16.msra.mxu0 %v5102
    %5176 = vmatprep.subr.bf16.mxu0 0
    %5177 = vmatpush1.bf16.msra.mxu0 %v5103
    %5178 = vmatprep.subr.bf16.mxu0 0
    %5179 = vmatpush1.bf16.msra.mxu0 %v5104
    %5180 = vmatprep.subr.bf16.mxu0 0
    %5181 = vmatpush1.bf16.msra.mxu0 %v5105
    %5182 = vmatprep.subr.bf16.mxu0 0
    %5183 = vmatpush1.bf16.msra.mxu0 %v5106
    %5184 = vmatprep.subr.bf16.mxu0 0
    %5185 = vmatpush1.bf16.msra.mxu0 %v5107
    %5186 = vmatprep.subr.bf16.mxu0 0
    %5187 = vmatpush1.bf16.msra.mxu0 %v5108
    %5188 = vmatprep.subr.bf16.mxu0 0
    %5189 = vmatpush1.bf16.msra.mxu0 %v5109
    %5190 = vmatprep.mubr.bf16.mxu0 %v4892
    %5191 = vmatmul.mubr.bf16.gmra.mrb[0].mxu0 %v4891
    %v5192 = vpop.f32.mrb[0].mxu0
    %v5193 = vadd.f32 %v4964, %v5192
    %v5194 = vpop.f32.mrb[0].mxu0
    %v5195 = vpop.f32.mrb[0].mxu0
    %v5196 = vpop.f32.mrb[0].mxu0
    %5197 = vdwg.mxu0
    %5198 = vmatprep.subr.bf16.mxu0 0
    %5199 = vmatpush1.bf16.msra.mxu0 %v5110
    %5200 = vmatprep.subr.bf16.mxu0 0
    %5201 = vmatpush1.bf16.msra.mxu0 %v5111
    %5202 = vmatprep.subr.bf16.mxu0 0
    %5203 = vmatpush1.bf16.msra.mxu0 %v5112
    %5204 = vmatprep.subr.bf16.mxu0 0
    %5205 = vmatpush1.bf16.msra.mxu0 %v5113
    %5206 = vmatprep.subr.bf16.mxu0 0
    %5207 = vmatpush1.bf16.msra.mxu0 %v5114
    %5208 = vmatprep.subr.bf16.mxu0 0
    %5209 = vmatpush1.bf16.msra.mxu0 %v5115
    %5210 = vmatprep.subr.bf16.mxu0 0
    %5211 = vmatpush1.bf16.msra.mxu0 %v5116
    %5212 = vmatprep.subr.bf16.mxu0 0
    %5213 = vmatpush1.bf16.msra.mxu0 %v5117
    %5214 = vmatprep.subr.bf16.mxu0 0
    %5215 = vmatpush1.bf16.msra.mxu0 %v5118
    %5216 = vmatprep.subr.bf16.mxu0 0
    %5217 = vmatpush1.bf16.msra.mxu0 %v5119
    %5218 = vmatprep.subr.bf16.mxu0 0
    %5219 = vmatpush1.bf16.msra.mxu0 %v5120
    %5220 = vmatprep.subr.bf16.mxu0 0
    %5221 = vmatpush1.bf16.msra.mxu0 %v5121
    %5222 = vmatprep.subr.bf16.mxu0 0
    %5223 = vmatpush1.bf16.msra.mxu0 %v5122
    %5224 = vmatprep.subr.bf16.mxu0 0
    %5225 = vmatpush1.bf16.msra.mxu0 %v5123
    %5226 = vmatprep.subr.bf16.mxu0 0
    %5227 = vmatpush1.bf16.msra.mxu0 %v5124
    %5228 = vmatprep.subr.bf16.mxu0 0
    %5229 = vmatpush1.bf16.msra.mxu0 %v5125
    %5230 = vmatprep.mubr.bf16.mxu0 %v4894
    %5231 = vmatmul.mubr.bf16.gmra.mrb[0].mxu0 %v4893
    %v5232 = vpop.f32.mrb[0].mxu0
    %v5233 = vadd.f32 %v5193, %v5232
    %v5234 = vpop.f32.mrb[0].mxu0
    %v5235 = vpop.f32.mrb[0].mxu0
    %v5236 = vpop.f32.mrb[0].mxu0
    %5237 = vdwg.mxu0
    %v5238 = vmax.f32 %v5233, 0.0
    %v5239 = vld [vmem:[#allocation15] sm:$0x1]
    %v5240 = vld [vmem:[#allocation2] sm:$0x1]
    %5242 = vset.pattern.permute.xlu0 0
    %5243 = vperm.xlu0 %5242, %v5240
    %v5244 = vpop.permute.xlu0 %5243
    %v5246 = vlaneseq
    %v5247 = vshrl.u32 %v5246, 7
    %v5248 = vsub.s32 0, %v5247
    %v5249 = vrot.slane %v5244, %v5248
    %5250 = vmatprep.subr.mxu0 0.0
    %5251 = vmatpush1.xpose.msra.mxu0 %v5238
    %5252 = vmatprep.subr.mxu0 0.0
    %5253 = vmatpush1.xpose.msra.mxu0 0.0
    %5254 = vmatprep.subr.mxu0 0.0
    %5255 = vmatpush1.xpose.msra.mxu0 0.0
    %5256 = vmatprep.subr.mxu0 0.0
    %5257 = vmatpush1.xpose.msra.mxu0 0.0
    %5258 = vmatprep.subr.mxu0 0.0
    %5259 = vmatpush1.xpose.msra.mxu0 0.0
    %5260 = vmatprep.subr.mxu0 0.0
    %5261 = vmatpush1.xpose.msra.mxu0 0.0
    %5262 = vmatprep.subr.mxu0 0.0
    %5263 = vmatpush1.xpose.msra.mxu0 0.0
    %5264 = vmatprep.subr.mxu0 0.0
    %5265 = vmatpush1.xpose.msra.mxu0 0.0
    %5266 = vmatprep.subr.mxu0 0.0
    %5267 = vmatpush1.xpose.msra.mxu0 0.0
    %5268 = vmatprep.subr.mxu0 0.0
    %5269 = vmatpush1.xpose.msra.mxu0 0.0
    %5270 = vmatprep.subr.mxu0 0.0
    %5271 = vmatpush1.xpose.msra.mxu0 0.0
    %5272 = vmatprep.subr.mxu0 0.0
    %5273 = vmatpush1.xpose.msra.mxu0 0.0
    %5274 = vmatprep.subr.mxu0 0.0
    %5275 = vmatpush1.xpose.msra.mxu0 0.0
    %5276 = vmatprep.subr.mxu0 0.0
    %5277 = vmatpush1.xpose.msra.mxu0 0.0
    %5278 = vmatprep.subr.mxu0 0.0
    %5279 = vmatpush1.xpose.msra.mxu0 0.0
    %5280 = vmatprep.subr.mxu0 0.0
    %5281 = vmatpush1.xpose.msra.mxu0 0.0
    %5282 = vmatprep.subr.mxu0 0.0
    %5283 = vmatpush1.xpose.msra.mxu0 0.0
    %5284 = vmatprep.subr.mxu0 0.0
    %5285 = vmatpush1.xpose.msra.mxu0 0.0
    %5286 = vmatprep.subr.mxu0 0.0
    %5287 = vmatpush1.xpose.msra.mxu0 0.0
    %5288 = vmatprep.subr.mxu0 0.0
    %5289 = vmatpush1.xpose.msra.mxu0 0.0
    %5290 = vmatprep.subr.mxu0 0.0
    %5291 = vmatpush1.xpose.msra.mxu0 0.0
    %5292 = vmatprep.subr.mxu0 0.0
    %5293 = vmatpush1.xpose.msra.mxu0 0.0
    %5294 = vmatprep.subr.mxu0 0.0
    %5295 = vmatpush1.xpose.msra.mxu0 0.0
    %5296 = vmatprep.subr.mxu0 0.0
    %5297 = vmatpush1.xpose.msra.mxu0 0.0
    %5298 = vmatprep.subr.mxu0 0.0
    %5299 = vmatpush1.xpose.msra.mxu0 0.0
    %5300 = vmatprep.subr.mxu0 0.0
    %5301 = vmatpush1.xpose.msra.mxu0 0.0
    %5302 = vmatprep.subr.mxu0 0.0
    %5303 = vmatpush1.xpose.msra.mxu0 0.0
    %5304 = vmatprep.subr.mxu0 0.0
    %5305 = vmatpush1.xpose.msra.mxu0 0.0
    %5306 = vmatprep.subr.mxu0 0.0
    %5307 = vmatpush1.xpose.msra.mxu0 0.0
    %5308 = vmatprep.subr.mxu0 0.0
    %5309 = vmatpush1.xpose.msra.mxu0 0.0
    %5310 = vmatprep.subr.mxu0 0.0
    %5311 = vmatpush1.xpose.msra.mxu0 0.0
    %5312 = vmatprep.subr.mxu0 0.0
    %5313 = vmatpush1.xpose.msra.mxu0 0.0
    %5314 = vmatprep.mubr.f32.mxu0 0.0
    %5315 = vmatmul.mubr.f32.gmra.mrb[0].mxu0 %v5239
    %v5316 = vpop.f32.mrb[0].mxu0
    %v5317 = vadd.f32 %v5249, %v5316
    %v5318 = vpop.f32.mrb[0].mxu0
    %5319 = vdwg.mxu0
    %v5320 = vsub.f32 0.0, %v5317
    %v5321 = vmul.f32 %v5320, 1.442695
    %v5322 = vpow.pop %v5321
    %v5323 = vadd.f32 %v5322, 1.0
    %v5324 = vrcp.pop %v5323
    %v5325 = vmul.f32 1.0, %v5324
    %vm5326 = vcmask 57344
    %5327 = vst.msk [vmem:[#allocation17] sm:$0x1] %vm5326, %v5325
    // Predicated region
    $region70: #{tpu_custom_call.1} parent=1 // pred_check
      _
    $region71: #{tpu_custom_call.1} parent=1 // pred_check_branch
      %5329 = sbr.rel (0) target = $region73
    $region72: #{tpu_custom_call.1} parent=1 // pred_region
      %s5331 = ssub.s32 16, 16
      %5332 = vsyncadd [#allocation5], %s5331
      %s5334 = sshll.u32 [#allocation17], 4
      %s5335 = int_to_ptr.vmem [resolvable:$true] %s5334
      %5337 = dma.vmem_to_hbm [thread:$0]  %s5335, 16, %s9, [#allocation5]
    $region73: #{tpu_custom_call.1} parent=1 // pred_fallthru
      _
    // Predicated region
    $region74: #{tpu_custom_call.1} parent=1 // pred_check
      _
    $region75: #{tpu_custom_call.1} parent=1 // pred_check_branch
      %5339 = sbr.rel (0) target = $region77
    $region76: #{tpu_custom_call.1} parent=1 // pred_region
      %5340 = dma.done [#allocation5], 16
    $region77: #{tpu_custom_call.1} parent=1 // pred_fallthru
      _
    %5341 = vsyncpa [#allocation4], 1
    %5342 = vsyncpa [#allocation7], 1
    %5343 = vsyncpa [#allocation10], 1
    %5344 = vsyncpa [#allocation13], 1
    %5345 = vsyncpa [#allocation16], 1
    %5346 = vsyncpa [#allocation5], 1

</llo_original>
